<compile_context>
chip_gen: v7x
topology: tpu7x:2x2x1
jax: 0.10.0
libtpu: 0.0.40
codegen_flags: <defaults>
</compile_context>

<pallas_src>
import functools

import jax
import jax.numpy as jnp
import numpy as np
from jax import lax
from jax.experimental import pallas as pl
from jax.experimental.pallas import tpu as pltpu

KS = 5          # conv kernel size (5x5, SAME)
PAD = KS // 2
CIN = 3         # conv1 input channels
C1 = 32         # conv1 output channels
C2 = 64         # conv2 output channels
LANES = 128     # lane width / padded feature dim


# ----------------------------------------------------------------------------
# Fused whole-network kernel (one grid step == one image)
# ----------------------------------------------------------------------------
def _convnet_kernel(patches_ref, w1_ref, b1_ref, w2_ref, b2_ref,
                    wh_ref, bh_ref, out_ref, c2in_ref, *, HP, WP):
    Q = HP * WP                                   # pooled spatial size

    # ---- conv1 (5x5 SAME) as ONE im2col matmul + bias + ReLU --------------
    # patches rows ordered (pool-quadrant q, pooled-col wp, pooled-row h').
    a1 = jnp.dot(patches_ref[0], w1_ref[...],
                 preferred_element_type=jnp.float32)        # (4Q, 128) f32
    a1 = jnp.maximum(a1 + b1_ref[...], 0.0)

    # ---- MaxPool2d(2,2): max of the four aligned quadrant blocks ----------
    pooled = jnp.maximum(jnp.maximum(a1[0:Q], a1[Q:2 * Q]),
                         jnp.maximum(a1[2 * Q:3 * Q], a1[3 * Q:4 * Q]))
    # pooled: (Q, 128), row = wp*HP + h', lanes = conv1 channel (32 real)

    # ---- conv2 (5x5 SAME) as ONE matmul vs. a block-Toeplitz weight -------
    # Scratch rows = zero-padded pooled rows, lanes = (wp, c) packed (WP*32).
    zhalo = jnp.zeros((PAD, WP * C1), jnp.float32)
    c2in_ref[0:PAD, :] = zhalo                    # zero ONLY the halo rows
    c2in_ref[PAD + HP:PAD + HP + PAD, :] = zhalo
    for wp in range(WP):                          # interior fully overwritten
        c2in_ref[PAD:PAD + HP, wp * C1:(wp + 1) * C1] = (
            pooled[wp * HP:(wp + 1) * HP, :C1])

    # lhs rows = conv2 output row y, lanes = (ky, wp, c); K = 5*WP*32.
    lhs2 = jnp.concatenate(
        [c2in_ref[ky:ky + HP, :] for ky in range(KS)], axis=1)
    a2 = jnp.dot(lhs2.astype(jnp.bfloat16), w2_ref[...],
                 preferred_element_type=jnp.float32) + b2_ref[...]
    h2 = jnp.maximum(a2, 0.0)                     # (HP, WP*64) f32

    # ---- AdaptiveAvgPool2d(1) + Dropout + fc1 + fc2, folded ---------------
    # TODO(synk): nn.Dropout uses inference (identity) semantics; PyTorch
    # training-mode random masking is not reproduced here.
    z = jnp.dot(h2.astype(jnp.bfloat16), wh_ref[...],
                preferred_element_type=jnp.float32)          # (HP, 128)
    logits = jnp.sum(z, axis=0, keepdims=True) + bh_ref[...]
    out_ref[...] = logits.reshape(1, 1, LANES)


# ----------------------------------------------------------------------------
# One-time host-side weight packing (bf16 operands, f32 biases)
# ----------------------------------------------------------------------------
def pack_params(params, H, W):
    HP, WP = H // 2, W // 2
    K1 = KS * KS * CIN                                     # 75

    w1 = np.asarray(params["conv1_w"], np.float32)         # (32, 3, 5, 5)
    W1 = np.zeros((LANES, LANES), np.float32)
    W1[:K1, :C1] = w1.transpose(2, 3, 1, 0).reshape(K1, C1)
    b1 = np.zeros((1, LANES), np.float32)
    b1[0, :C1] = np.asarray(params["conv1_b"], np.float32)

    # conv2 block-Toeplitz matrix: K index = (ky, wp_in, c), N index = (x, o).
    w2 = np.asarray(params["conv2_w"], np.float32)          # (64, 32, 5, 5)
    K2, N2 = KS * WP * C1, WP * C2
    W2 = np.zeros((K2, N2), np.float32)
    for ky in range(KS):
        for kx in range(KS):
            blk = w2[:, :, ky, kx].T                        # (c_in, c_out)
            for xo in range(WP):
                wi = xo + kx - PAD                          # input pooled col
                if 0 <= wi < WP:
                    r0 = ky * WP * C1 + wi * C1
                    W2[r0:r0 + C1, xo * C2:(xo + 1) * C2] = blk
    b2 = np.tile(np.asarray(params["conv2_b"], np.float32), WP).reshape(1, N2)

    # avg-pool + fc1 + fc2 fold (dropout = identity at inference; no
    # nonlinearity between fc1 and fc2 in the PyTorch module).
    fc1_w = np.asarray(params["fc1_w"], np.float32)         # (64, 100)
    fc2_w = np.asarray(params["fc2_w"], np.float32)         # (100, 10)
    wfold = fc1_w @ fc2_w                                   # (64, 10)
    bfold = (np.asarray(params["fc1_b"], np.float32) @ fc2_w
             + np.asarray(params["fc2_b"], np.float32))
    WH = np.zeros((N2, LANES), np.float32)
    WH[:, :wfold.shape[1]] = np.tile(wfold, (WP, 1)) / float(HP * WP)
    bh = np.zeros((1, LANES), np.float32)
    bh[0, :bfold.shape[0]] = bfold

    return {"w1": jnp.asarray(W1, jnp.bfloat16), "b1": jnp.asarray(b1),
            "w2": jnp.asarray(W2, jnp.bfloat16), "b2": jnp.asarray(b2),
            "wh": jnp.asarray(WH, jnp.bfloat16), "bh": jnp.asarray(bh)}


# ----------------------------------------------------------------------------
# Full ConvNet forward
# ----------------------------------------------------------------------------
@jax.jit
def convnet_forward(x_nchw, packed):
    N, cin, H, W = x_nchw.shape
    assert cin == CIN and H % 2 == 0 and W % 4 == 0
    HP, WP = H // 2, W // 2
    Q = HP * WP
    K1 = KS * KS * cin
    K2, N2 = KS * WP * C1, WP * C2

    # Host-side im2col on the NARROW 3-channel input (no channel padding).
    # Rows ordered (pool-quadrant, pooled-col, pooled-row) so the in-kernel
    # maxpool is a max of four aligned row blocks.
    xh = jnp.transpose(x_nchw, (0, 2, 3, 1)).astype(jnp.float32)
    xp = jnp.pad(xh, ((0, 0), (PAD, PAD), (PAD, PAD), (0, 0)))
    taps = [xp[:, ky:ky + H, kx:kx + W, :]
            for ky in range(KS) for kx in range(KS)]
    pat = jnp.concatenate(taps, axis=-1)                     # (N, H, W, 75)
    pat = pat.reshape(N, HP, 2, WP, 2, K1)
    pat = pat.transpose(0, 2, 4, 3, 1, 5).reshape(N, 4 * Q, K1)
    patches = jnp.pad(pat, ((0, 0), (0, 0), (0, LANES - K1)))
    patches = patches.astype(jnp.bfloat16)

    kernel = functools.partial(_convnet_kernel, HP=HP, WP=WP)
    out = pl.pallas_call(
        kernel,
        out_shape=jax.ShapeDtypeStruct((N, 1, LANES), jnp.float32),
        grid=(N,),
        in_specs=[
            pl.BlockSpec((1, 4 * Q, LANES), lambda i: (i, 0, 0)),  # patches
            pl.BlockSpec((LANES, LANES), lambda i: (0, 0)),        # W1
            pl.BlockSpec((1, LANES), lambda i: (0, 0)),            # b1
            pl.BlockSpec((K2, N2), lambda i: (0, 0)),              # W2
            pl.BlockSpec((1, N2), lambda i: (0, 0)),               # b2
            pl.BlockSpec((N2, LANES), lambda i: (0, 0)),           # Whead
            pl.BlockSpec((1, LANES), lambda i: (0, 0)),            # bhead
        ],
        out_specs=pl.BlockSpec((1, 1, LANES), lambda i: (i, 0, 0)),
        scratch_shapes=[pltpu.VMEM((HP + 2 * PAD, WP * C1), jnp.float32)],
        compiler_params=pltpu.CompilerParams(
            dimension_semantics=("parallel",)),        # dual-TC on v7x
    )(patches, packed["w1"], packed["b1"], packed["w2"], packed["b2"],
      packed["wh"], packed["bh"])
    return out[:, 0, :10]


def init_params(key):
    def uniform(k, shape, fan_in):
        bound = 1.0 / np.sqrt(fan_in)
        return jax.random.uniform(k, shape, jnp.float32, -bound, bound)

    ks = jax.random.split(key, 8)
    return {
        "conv1_w": uniform(ks[0], (32, 3, 5, 5), 3 * 5 * 5),
        "conv1_b": uniform(ks[1], (32,), 3 * 5 * 5),
        "conv2_w": uniform(ks[2], (64, 32, 5, 5), 32 * 5 * 5),
        "conv2_b": uniform(ks[3], (64,), 32 * 5 * 5),
        "fc1_w": uniform(ks[4], (64, 100), 64),    # stored as [in, out]
        "fc1_b": uniform(ks[5], (100,), 64),
        "fc2_w": uniform(ks[6], (100, 10), 100),
        "fc2_b": uniform(ks[7], (10,), 100),
    }


# ----------------------------------------------------------------------------
# Pure-JAX reference (for correctness check)
# ----------------------------------------------------------------------------
def reference_forward(x_nchw, params):
    x = jnp.transpose(x_nchw, (0, 2, 3, 1)).astype(jnp.float32)
    w1 = jnp.transpose(params["conv1_w"], (2, 3, 1, 0))  # HWIO
    h = lax.conv_general_dilated(
        x, w1, (1, 1), "SAME", dimension_numbers=("NHWC", "HWIO", "NHWC"))
    h = jax.nn.relu(h + params["conv1_b"])
    h = lax.reduce_window(h, -jnp.inf, lax.max,
                          (1, 2, 2, 1), (1, 2, 2, 1), "VALID")
    w2 = jnp.transpose(params["conv2_w"], (2, 3, 1, 0))
    h = lax.conv_general_dilated(
        h, w2, (1, 1), "SAME", dimension_numbers=("NHWC", "HWIO", "NHWC"))
    h = jax.nn.relu(h + params["conv2_b"])
    h = jnp.mean(h, axis=(1, 2))
    h = h @ params["fc1_w"] + params["fc1_b"]
    h = h @ params["fc2_w"] + params["fc2_b"]
    return h


if __name__ == "__main__":
    key = jax.random.PRNGKey(0)
    k_x, k_p = jax.random.split(key)
    x = jax.random.normal(k_x, (2, 3, 16, 16), jnp.float32)  # NCHW like torch
    params = init_params(k_p)
    packed = pack_params(params, 16, 16)

    out = jax.block_until_ready(convnet_forward(x, packed))
    assert out.shape == (2, 10), out.shape
    assert bool(jnp.all(jnp.isfinite(out)))

    ref = jax.block_until_ready(reference_forward(x, params))
    np.testing.assert_allclose(np.asarray(out), np.asarray(ref),
                               rtol=2e-2, atol=2e-2)
    print("KERNEL_OK")
</pallas_src>

<mosaic_0001>
module attributes {stable_mosaic.version = 11 : i64} {
  func.func @_convnet_kernel(%arg0: i32, %arg1: memref<1x256x128xbf16, #tpu.memory_space<vmem>>, %arg2: memref<128x128xbf16, #tpu.memory_space<vmem>>, %arg3: memref<1x128xf32, #tpu.memory_space<vmem>>, %arg4: memref<1280x512xbf16, #tpu.memory_space<vmem>>, %arg5: memref<1x512xf32, #tpu.memory_space<vmem>>, %arg6: memref<512x128xbf16, #tpu.memory_space<vmem>>, %arg7: memref<1x128xf32, #tpu.memory_space<vmem>>, %arg8: memref<1x1x128xf32, #tpu.memory_space<vmem>>, %arg9: memref<12x256xf32, #tpu.memory_space<vmem>>) attributes {dimension_semantics = [#tpu.dimension_semantics<parallel>], iteration_bounds = array<i64: 2>, scalar_prefetch = 0 : i64, scratch_operands = 1 : i64, tpu.core_type = #tpu.core_type<tc>, window_params = [{transform_indices = @transform_0, window_bounds = array<i64: 1, 256, 128>}, {pipeline_mode = #tpu.pipeline_mode<synchronous>, transform_indices = @transform_1, window_bounds = array<i64: 128, 128>}, {pipeline_mode = #tpu.pipeline_mode<synchronous>, transform_indices = @transform_2, window_bounds = array<i64: 1, 128>}, {pipeline_mode = #tpu.pipeline_mode<synchronous>, transform_indices = @transform_3, window_bounds = array<i64: 1280, 512>}, {pipeline_mode = #tpu.pipeline_mode<synchronous>, transform_indices = @transform_4, window_bounds = array<i64: 1, 512>}, {pipeline_mode = #tpu.pipeline_mode<synchronous>, transform_indices = @transform_5, window_bounds = array<i64: 512, 128>}, {pipeline_mode = #tpu.pipeline_mode<synchronous>, transform_indices = @transform_6, window_bounds = array<i64: 1, 128>}, {transform_indices = @transform_7, window_bounds = array<i64: 1, 1, 128>}]} {
    %c0 = arith.constant 0 : index
    %c0_0 = arith.constant 0 : index
    %c0_1 = arith.constant 0 : index
    %0 = vector.load %arg1[%c0, %c0_0, %c0_1] : memref<1x256x128xbf16, #tpu.memory_space<vmem>>, vector<1x256x128xbf16>
    %1 = vector.shape_cast %0 : vector<1x256x128xbf16> to vector<256x128xbf16>
    %c0_2 = arith.constant 0 : index
    %c0_3 = arith.constant 0 : index
    %2 = vector.load %arg2[%c0_2, %c0_3] : memref<128x128xbf16, #tpu.memory_space<vmem>>, vector<128x128xbf16>
    %cst = arith.constant dense<0.000000e+00> : vector<256x128xf32>
    %3 = tpu.matmul %1, %2, %cst {dimension_numbers = #tpu.dot_dimension_numbers<[1], [0], [0], [1], [0, 0, 1, 1], [], []>} : vector<256x128xbf16>, vector<128x128xbf16>, vector<256x128xf32> -> vector<256x128xf32>
    %c0_4 = arith.constant 0 : index
    %c0_5 = arith.constant 0 : index
    %4 = vector.load %arg3[%c0_4, %c0_5] : memref<1x128xf32, #tpu.memory_space<vmem>>, vector<1x128xf32>
    %5 = vector.broadcast %4 : vector<1x128xf32> to vector<256x128xf32>
    %6 = arith.addf %3, %5 : vector<256x128xf32>
    %cst_6 = arith.constant 0.000000e+00 : f32
    %7 = vector.broadcast %cst_6 : f32 to vector<256x128xf32>
    %8 = arith.maximumf %6, %7 : vector<256x128xf32>
    %9 = vector.extract_strided_slice %8 {offsets = [0, 0], sizes = [64, 128], strides = [1, 1]} : vector<256x128xf32> to vector<64x128xf32>
    %10 = vector.extract_strided_slice %8 {offsets = [64, 0], sizes = [64, 128], strides = [1, 1]} : vector<256x128xf32> to vector<64x128xf32>
    %11 = arith.maximumf %9, %10 : vector<64x128xf32>
    %12 = vector.extract_strided_slice %8 {offsets = [128, 0], sizes = [64, 128], strides = [1, 1]} : vector<256x128xf32> to vector<64x128xf32>
    %13 = vector.extract_strided_slice %8 {offsets = [192, 0], sizes = [64, 128], strides = [1, 1]} : vector<256x128xf32> to vector<64x128xf32>
    %14 = arith.maximumf %12, %13 : vector<64x128xf32>
    %15 = arith.maximumf %11, %14 : vector<64x128xf32>
    %cst_7 = arith.constant 0.000000e+00 : f32
    %16 = vector.broadcast %cst_7 : f32 to vector<2x256xf32>
    %c0_8 = arith.constant 0 : index
    %c0_9 = arith.constant 0 : index
    %17 = vector.load %arg9[%c0_8, %c0_9] : memref<12x256xf32, #tpu.memory_space<vmem>>, vector<2x256xf32>
    tpu.vector_store %arg9[%c0_8, %c0_9], %16 {strides = array<i32>} : memref<12x256xf32, #tpu.memory_space<vmem>>, vector<2x256xf32>,
    %c10 = arith.constant 10 : index
    %c0_10 = arith.constant 0 : index
    %18 = vector.load %arg9[%c10, %c0_10] : memref<12x256xf32, #tpu.memory_space<vmem>>, vector<2x256xf32>
    tpu.vector_store %arg9[%c10, %c0_10], %16 {strides = array<i32>} : memref<12x256xf32, #tpu.memory_space<vmem>>, vector<2x256xf32>,
    %19 = vector.extract_strided_slice %15 {offsets = [0, 0], sizes = [8, 32], strides = [1, 1]} : vector<64x128xf32> to vector<8x32xf32>
    %c2 = arith.constant 2 : index
    %c0_11 = arith.constant 0 : index
    %20 = vector.load %arg9[%c2, %c0_11] : memref<12x256xf32, #tpu.memory_space<vmem>>, vector<8x32xf32>
    tpu.vector_store %arg9[%c2, %c0_11], %19 {strides = array<i32>} : memref<12x256xf32, #tpu.memory_space<vmem>>, vector<8x32xf32>,
    %21 = vector.extract_strided_slice %15 {offsets = [8, 0], sizes = [8, 32], strides = [1, 1]} : vector<64x128xf32> to vector<8x32xf32>
    %c2_12 = arith.constant 2 : index
    %c32 = arith.constant 32 : index
    %22 = vector.load %arg9[%c2_12, %c32] : memref<12x256xf32, #tpu.memory_space<vmem>>, vector<8x32xf32>
    tpu.vector_store %arg9[%c2_12, %c32], %21 {strides = array<i32>} : memref<12x256xf32, #tpu.memory_space<vmem>>, vector<8x32xf32>,
    %23 = vector.extract_strided_slice %15 {offsets = [16, 0], sizes = [8, 32], strides = [1, 1]} : vector<64x128xf32> to vector<8x32xf32>
    %c2_13 = arith.constant 2 : index
    %c64 = arith.constant 64 : index
    %24 = vector.load %arg9[%c2_13, %c64] : memref<12x256xf32, #tpu.memory_space<vmem>>, vector<8x32xf32>
    tpu.vector_store %arg9[%c2_13, %c64], %23 {strides = array<i32>} : memref<12x256xf32, #tpu.memory_space<vmem>>, vector<8x32xf32>,
    %25 = vector.extract_strided_slice %15 {offsets = [24, 0], sizes = [8, 32], strides = [1, 1]} : vector<64x128xf32> to vector<8x32xf32>
    %c2_14 = arith.constant 2 : index
    %c96 = arith.constant 96 : index
    %26 = vector.load %arg9[%c2_14, %c96] : memref<12x256xf32, #tpu.memory_space<vmem>>, vector<8x32xf32>
    tpu.vector_store %arg9[%c2_14, %c96], %25 {strides = array<i32>} : memref<12x256xf32, #tpu.memory_space<vmem>>, vector<8x32xf32>,
    %27 = vector.extract_strided_slice %15 {offsets = [32, 0], sizes = [8, 32], strides = [1, 1]} : vector<64x128xf32> to vector<8x32xf32>
    %c2_15 = arith.constant 2 : index
    %c128 = arith.constant 128 : index
    %28 = vector.load %arg9[%c2_15, %c128] : memref<12x256xf32, #tpu.memory_space<vmem>>, vector<8x32xf32>
    tpu.vector_store %arg9[%c2_15, %c128], %27 {strides = array<i32>} : memref<12x256xf32, #tpu.memory_space<vmem>>, vector<8x32xf32>,
    %29 = vector.extract_strided_slice %15 {offsets = [40, 0], sizes = [8, 32], strides = [1, 1]} : vector<64x128xf32> to vector<8x32xf32>
    %c2_16 = arith.constant 2 : index
    %c160 = arith.constant 160 : index
    %30 = vector.load %arg9[%c2_16, %c160] : memref<12x256xf32, #tpu.memory_space<vmem>>, vector<8x32xf32>
    tpu.vector_store %arg9[%c2_16, %c160], %29 {strides = array<i32>} : memref<12x256xf32, #tpu.memory_space<vmem>>, vector<8x32xf32>,
    %31 = vector.extract_strided_slice %15 {offsets = [48, 0], sizes = [8, 32], strides = [1, 1]} : vector<64x128xf32> to vector<8x32xf32>
    %c2_17 = arith.constant 2 : index
    %c192 = arith.constant 192 : index
    %32 = vector.load %arg9[%c2_17, %c192] : memref<12x256xf32, #tpu.memory_space<vmem>>, vector<8x32xf32>
    tpu.vector_store %arg9[%c2_17, %c192], %31 {strides = array<i32>} : memref<12x256xf32, #tpu.memory_space<vmem>>, vector<8x32xf32>,
    %33 = vector.extract_strided_slice %15 {offsets = [56, 0], sizes = [8, 32], strides = [1, 1]} : vector<64x128xf32> to vector<8x32xf32>
    %c2_18 = arith.constant 2 : index
    %c224 = arith.constant 224 : index
    %34 = vector.load %arg9[%c2_18, %c224] : memref<12x256xf32, #tpu.memory_space<vmem>>, vector<8x32xf32>
    tpu.vector_store %arg9[%c2_18, %c224], %33 {strides = array<i32>} : memref<12x256xf32, #tpu.memory_space<vmem>>, vector<8x32xf32>,
    %c0_19 = arith.constant 0 : index
    %c0_20 = arith.constant 0 : index
    %35 = vector.load %arg9[%c0_19, %c0_20] : memref<12x256xf32, #tpu.memory_space<vmem>>, vector<8x256xf32>
    %c1 = arith.constant 1 : index
    %c0_21 = arith.constant 0 : index
    %36 = vector.load %arg9[%c1, %c0_21] : memref<12x256xf32, #tpu.memory_space<vmem>>, vector<8x256xf32>
    %c2_22 = arith.constant 2 : index
    %c0_23 = arith.constant 0 : index
    %37 = vector.load %arg9[%c2_22, %c0_23] : memref<12x256xf32, #tpu.memory_space<vmem>>, vector<8x256xf32>
    %c3 = arith.constant 3 : index
    %c0_24 = arith.constant 0 : index
    %38 = vector.load %arg9[%c3, %c0_24] : memref<12x256xf32, #tpu.memory_space<vmem>>, vector<8x256xf32>
    %c4 = arith.constant 4 : index
    %c0_25 = arith.constant 0 : index
    %39 = vector.load %arg9[%c4, %c0_25] : memref<12x256xf32, #tpu.memory_space<vmem>>, vector<8x256xf32>
    %40 = tpu.concatenate %35, %36, %37, %38, %39 in 1 : vector<8x256xf32>, vector<8x256xf32>, vector<8x256xf32>, vector<8x256xf32>, vector<8x256xf32> -> vector<8x1280xf32>
    %41 = arith.truncf %40 : vector<8x1280xf32> to vector<8x1280xbf16>
    %c0_26 = arith.constant 0 : index
    %c0_27 = arith.constant 0 : index
    %42 = vector.load %arg4[%c0_26, %c0_27] : memref<1280x512xbf16, #tpu.memory_space<vmem>>, vector<1280x512xbf16>
    %cst_28 = arith.constant dense<0.000000e+00> : vector<8x512xf32>
    %43 = tpu.matmul %41, %42, %cst_28 {dimension_numbers = #tpu.dot_dimension_numbers<[1], [0], [0], [1], [0, 0, 1, 1], [], []>} : vector<8x1280xbf16>, vector<1280x512xbf16>, vector<8x512xf32> -> vector<8x512xf32>
    %c0_29 = arith.constant 0 : index
    %c0_30 = arith.constant 0 : index
    %44 = vector.load %arg5[%c0_29, %c0_30] : memref<1x512xf32, #tpu.memory_space<vmem>>, vector<1x512xf32>
    %45 = vector.broadcast %44 : vector<1x512xf32> to vector<8x512xf32>
    %46 = arith.addf %43, %45 : vector<8x512xf32>
    %cst_31 = arith.constant 0.000000e+00 : f32
    %47 = vector.broadcast %cst_31 : f32 to vector<8x512xf32>
    %48 = arith.maximumf %46, %47 : vector<8x512xf32>
    %49 = arith.truncf %48 : vector<8x512xf32> to vector<8x512xbf16>
    %c0_32 = arith.constant 0 : index
    %c0_33 = arith.constant 0 : index
    %50 = vector.load %arg6[%c0_32, %c0_33] : memref<512x128xbf16, #tpu.memory_space<vmem>>, vector<512x128xbf16>
    %cst_34 = arith.constant dense<0.000000e+00> : vector<8x128xf32>
    %51 = tpu.matmul %49, %50, %cst_34 {dimension_numbers = #tpu.dot_dimension_numbers<[1], [0], [0], [1], [0, 0, 1, 1], [], []>} : vector<8x512xbf16>, vector<512x128xbf16>, vector<8x128xf32> -> vector<8x128xf32>
    %cst_35 = arith.constant dense<0.000000e+00> : vector<128xf32>
    %52 = vector.multi_reduction <add>, %51, %cst_35 [0] : vector<8x128xf32> to vector<128xf32>
    %53 = vector.shape_cast %52 : vector<128xf32> to vector<1x128xf32>
    %c0_36 = arith.constant 0 : index
    %c0_37 = arith.constant 0 : index
    %54 = vector.load %arg7[%c0_36, %c0_37] : memref<1x128xf32, #tpu.memory_space<vmem>>, vector<1x128xf32>
    %55 = arith.addf %53, %54 : vector<1x128xf32>
    %56 = vector.shape_cast %55 : vector<1x128xf32> to vector<1x1x128xf32>
    %c0_38 = arith.constant 0 : index
    %c0_39 = arith.constant 0 : index
    %c0_40 = arith.constant 0 : index
    %57 = vector.load %arg8[%c0_38, %c0_39, %c0_40] : memref<1x1x128xf32, #tpu.memory_space<vmem>>, vector<1x1x128xf32>
    tpu.vector_store %arg8[%c0_38, %c0_39, %c0_40], %56 {strides = array<i32>} : memref<1x1x128xf32, #tpu.memory_space<vmem>>, vector<1x1x128xf32>,
    return
  }
  func.func @transform_0(%arg0: i32) -> (i32, i32, i32) {
    %c0_i32 = arith.constant 0 : i32
    %c0_i32_0 = arith.constant 0 : i32
    %c0_i32_1 = arith.constant 0 : i32
    return %arg0, %c0_i32, %c0_i32_0 : i32, i32, i32
  }
  func.func @transform_1(%arg0: i32) -> (i32, i32) {
    %c0_i32 = arith.constant 0 : i32
    %c0_i32_0 = arith.constant 0 : i32
    %c0_i32_1 = arith.constant 0 : i32
    return %c0_i32, %c0_i32_0 : i32, i32
  }
  func.func @transform_2(%arg0: i32) -> (i32, i32) {
    %c0_i32 = arith.constant 0 : i32
    %c0_i32_0 = arith.constant 0 : i32
    %c0_i32_1 = arith.constant 0 : i32
    return %c0_i32, %c0_i32_0 : i32, i32
  }
  func.func @transform_3(%arg0: i32) -> (i32, i32) {
    %c0_i32 = arith.constant 0 : i32
    %c0_i32_0 = arith.constant 0 : i32
    %c0_i32_1 = arith.constant 0 : i32
    return %c0_i32, %c0_i32_0 : i32, i32
  }
  func.func @transform_4(%arg0: i32) -> (i32, i32) {
    %c0_i32 = arith.constant 0 : i32
    %c0_i32_0 = arith.constant 0 : i32
    %c0_i32_1 = arith.constant 0 : i32
    return %c0_i32, %c0_i32_0 : i32, i32
  }
  func.func @transform_5(%arg0: i32) -> (i32, i32) {
    %c0_i32 = arith.constant 0 : i32
    %c0_i32_0 = arith.constant 0 : i32
    %c0_i32_1 = arith.constant 0 : i32
    return %c0_i32, %c0_i32_0 : i32, i32
  }
  func.func @transform_6(%arg0: i32) -> (i32, i32) {
    %c0_i32 = arith.constant 0 : i32
    %c0_i32_0 = arith.constant 0 : i32
    %c0_i32_1 = arith.constant 0 : i32
    return %c0_i32, %c0_i32_0 : i32, i32
  }
  func.func @transform_7(%arg0: i32) -> (i32, i32, i32) {
    %c0_i32 = arith.constant 0 : i32
    %c0_i32_0 = arith.constant 0 : i32
    %c0_i32_1 = arith.constant 0 : i32
    return %arg0, %c0_i32, %c0_i32_0 : i32, i32, i32
  }
}

</mosaic_0001>

<llo_original>
// kernel: convnet_forward.1
$region0: #{convnet_forward.1}
  #allocation0 [shape = 'u32[]', space=smem, size = 0x4, offset = 0x4, fixed_abs, tag = 'smem constant byte address 0x4 - core index']
  #allocation1 [shape = 'u32[144,128]{1,0:T(1,128)}', space=vmem, size = 0x12000, scoped, tag = 'internal scratch']
  #allocation2 [shape = 'f32[12,256]{1,0:T(8,128)}', space=vmem, size = 0x4000, scoped, tag = 'scratch operand']
  %s0 = inlined_call_operand.vmem [shape: bf16[2,256,128], index: 0, kind: input, shape index: {}]
  %s1 = inlined_call_operand.vmem [shape: bf16[128,128], index: 1, kind: input, shape index: {}]
  %s2 = inlined_call_operand.vmem [shape: f32[1,128], index: 2, kind: input, shape index: {}]
  %s3 = inlined_call_operand.vmem [shape: bf16[1280,512], index: 3, kind: input, shape index: {}]
  %s4 = inlined_call_operand.vmem [shape: f32[1,512], index: 4, kind: input, shape index: {}]
  %s5 = inlined_call_operand.vmem [shape: bf16[512,128], index: 5, kind: input, shape index: {}]
  %s6 = inlined_call_operand.vmem [shape: f32[1,128], index: 6, kind: input, shape index: {}]
  %s7 = inlined_call_operand.hbm [shape: f32[2,1,128], index: 7, kind: output, shape index: {}]
  %s8 = sld [smem:[#allocation0]]
  $region61: #{convnet_forward.1} parent=0
    _
  %s10 = ssub.s32 1, %s8
  %s11 = scalar_select 0, %s10, %s8
  $region1: #{convnet_forward.1} parent=0
    #allocation3 [shape = 'u8[1024]{0}', space=vmem, size = 0x400, scoped, tag = 'output window, operand 0']
    #allocation4 [shape = 's32[2]{0}', space=sflag, size = 0x8, scoped, tag = 'scoped memory for convnet_forward.1']
    %12 = vsyncpa [#allocation4], 0
    %s13 = scalar_lea.sflag [#allocation4], 1
    %14 = vsyncpa %s13, 0
    loop: start=0, step=1, limit=4
    $region2: #{convnet_forward.1} parent=1 // loop_pre_header
      _
    $region3: #{convnet_forward.1} parent=1 // loop_header
      %s16 = sphi 0, %s20
      %p17 = scmp.ge.s32.totalorder %s16, 4
      %s26 = sphi 0, %s28
      %s29 = sphi 0, %s26
      %s30 = sphi 0, %s29
      %s46 = sphi 0, %s30
      %s50 = sphi 0, %s50
      %s52 = sphi 0, %s50
      %s53 = sphi 0, %s52
      %s67 = sphi 0, %s53
      %s71 = sphi 0, %s71
      %s73 = sphi 0, %s71
      %s74 = sphi 0, %s73
      %s88 = sphi 0, %s74
      %s92 = sphi 0, %s92
      %s94 = sphi 0, %s92
      %s95 = sphi 0, %s94
      %s109 = sphi 0, %s95
      %s113 = sphi 0, %s113
      %s115 = sphi 0, %s113
      %s116 = sphi 0, %s115
      %s130 = sphi 0, %s116
      %s134 = sphi 0, %s134
      %s136 = sphi 0, %s134
      %s137 = sphi 0, %s136
      %s151 = sphi 0, %s137
      %s155 = sphi 0, %s155
      %s157 = sphi 0, %s155
      %s158 = sphi 0, %s157
      %s172 = sphi 0, %s158
      %s178 = sphi 0, %s180
      %s181 = sphi 0, %s178
      %s182 = sphi 0, %s181
      %s198 = sphi 0, %s182
    $region4: #{convnet_forward.1} parent=1 // loop_header_branch
      %19 = sbr.rel (%p17) target = $region8
    $region5: #{convnet_forward.1} parent=1 // loop_body
      %s21 = ssub.s32 %s16, 1
      %s22 = ssub.s32 %s16, 2
      %s23 = sadd.s32 %s16, 1
      %s24 = ssub.s32 %s16, %s23
      %p25 = scmp.eq.s32.totalorder %s24, 0
      %s27 = sadd.s32 %s26, 1
      %s28 = scalar_select %p25, %s26, %s27
      %p31 = pneg %p25
      %p32 = scmp.eq.s32.totalorder %s16, 1
      %p33 = por %p31, %p32
      %p34 = scmp.ne.s32.totalorder %s26, %s29
      %p35 = scmp.eq.s32.totalorder %s16, 0
      %p36 = por %p34, %p35
      %p37 = scmp.ne.s32.totalorder %s26, %s29
      %p38 = scmp.eq.s32.totalorder %s21, 1
      %p39 = por %p37, %p38
      %p40 = scmp.ne.s32.totalorder %s29, %s30
      %p41 = scmp.eq.s32.totalorder %s21, 0
      %p42 = por %p40, %p41
      %p43 = scmp.ne.s32.totalorder %s29, %s30
      %p44 = scmp.eq.s32.totalorder %s22, 1
      %p45 = por %p43, %p44
      %p47 = scmp.ne.s32.totalorder %s30, %s46
      %p48 = scmp.eq.s32.totalorder %s22, 0
      %p49 = por %p47, %p48
      %s51 = sadd.s32 %s50, 1
      %p54 = scmp.eq.s32.totalorder %s16, 1
      %p55 = scmp.ne.s32.totalorder %s50, %s52
      %p56 = scmp.eq.s32.totalorder %s16, 0
      %p57 = por %p55, %p56
      %p58 = scmp.ne.s32.totalorder %s50, %s52
      %p59 = scmp.eq.s32.totalorder %s21, 1
      %p60 = por %p58, %p59
      %p61 = scmp.ne.s32.totalorder %s52, %s53
      %p62 = scmp.eq.s32.totalorder %s21, 0
      %p63 = por %p61, %p62
      %p64 = scmp.ne.s32.totalorder %s52, %s53
      %p65 = scmp.eq.s32.totalorder %s22, 1
      %p66 = por %p64, %p65
      %p68 = scmp.ne.s32.totalorder %s53, %s67
      %p69 = scmp.eq.s32.totalorder %s22, 0
      %p70 = por %p68, %p69
      %s72 = sadd.s32 %s71, 1
      %p75 = scmp.eq.s32.totalorder %s16, 1
      %p76 = scmp.ne.s32.totalorder %s71, %s73
      %p77 = scmp.eq.s32.totalorder %s16, 0
      %p78 = por %p76, %p77
      %p79 = scmp.ne.s32.totalorder %s71, %s73
      %p80 = scmp.eq.s32.totalorder %s21, 1
      %p81 = por %p79, %p80
      %p82 = scmp.ne.s32.totalorder %s73, %s74
      %p83 = scmp.eq.s32.totalorder %s21, 0
      %p84 = por %p82, %p83
      %p85 = scmp.ne.s32.totalorder %s73, %s74
      %p86 = scmp.eq.s32.totalorder %s22, 1
      %p87 = por %p85, %p86
      %p89 = scmp.ne.s32.totalorder %s74, %s88
      %p90 = scmp.eq.s32.totalorder %s22, 0
      %p91 = por %p89, %p90
      %s93 = sadd.s32 %s92, 1
      %p96 = scmp.eq.s32.totalorder %s16, 1
      %p97 = scmp.ne.s32.totalorder %s92, %s94
      %p98 = scmp.eq.s32.totalorder %s16, 0
      %p99 = por %p97, %p98
      %p100 = scmp.ne.s32.totalorder %s92, %s94
      %p101 = scmp.eq.s32.totalorder %s21, 1
      %p102 = por %p100, %p101
      %p103 = scmp.ne.s32.totalorder %s94, %s95
      %p104 = scmp.eq.s32.totalorder %s21, 0
      %p105 = por %p103, %p104
      %p106 = scmp.ne.s32.totalorder %s94, %s95
      %p107 = scmp.eq.s32.totalorder %s22, 1
      %p108 = por %p106, %p107
      %p110 = scmp.ne.s32.totalorder %s95, %s109
      %p111 = scmp.eq.s32.totalorder %s22, 0
      %p112 = por %p110, %p111
      %s114 = sadd.s32 %s113, 1
      %p117 = scmp.eq.s32.totalorder %s16, 1
      %p118 = scmp.ne.s32.totalorder %s113, %s115
      %p119 = scmp.eq.s32.totalorder %s16, 0
      %p120 = por %p118, %p119
      %p121 = scmp.ne.s32.totalorder %s113, %s115
      %p122 = scmp.eq.s32.totalorder %s21, 1
      %p123 = por %p121, %p122
      %p124 = scmp.ne.s32.totalorder %s115, %s116
      %p125 = scmp.eq.s32.totalorder %s21, 0
      %p126 = por %p124, %p125
      %p127 = scmp.ne.s32.totalorder %s115, %s116
      %p128 = scmp.eq.s32.totalorder %s22, 1
      %p129 = por %p127, %p128
      %p131 = scmp.ne.s32.totalorder %s116, %s130
      %p132 = scmp.eq.s32.totalorder %s22, 0
      %p133 = por %p131, %p132
      %s135 = sadd.s32 %s134, 1
      %p138 = scmp.eq.s32.totalorder %s16, 1
      %p139 = scmp.ne.s32.totalorder %s134, %s136
      %p140 = scmp.eq.s32.totalorder %s16, 0
      %p141 = por %p139, %p140
      %p142 = scmp.ne.s32.totalorder %s134, %s136
      %p143 = scmp.eq.s32.totalorder %s21, 1
      %p144 = por %p142, %p143
      %p145 = scmp.ne.s32.totalorder %s136, %s137
      %p146 = scmp.eq.s32.totalorder %s21, 0
      %p147 = por %p145, %p146
      %p148 = scmp.ne.s32.totalorder %s136, %s137
      %p149 = scmp.eq.s32.totalorder %s22, 1
      %p150 = por %p148, %p149
      %p152 = scmp.ne.s32.totalorder %s137, %s151
      %p153 = scmp.eq.s32.totalorder %s22, 0
      %p154 = por %p152, %p153
      %s156 = sadd.s32 %s155, 1
      %p159 = scmp.eq.s32.totalorder %s16, 1
      %p160 = scmp.ne.s32.totalorder %s155, %s157
      %p161 = scmp.eq.s32.totalorder %s16, 0
      %p162 = por %p160, %p161
      %p163 = scmp.ne.s32.totalorder %s155, %s157
      %p164 = scmp.eq.s32.totalorder %s21, 1
      %p165 = por %p163, %p164
      %p166 = scmp.ne.s32.totalorder %s157, %s158
      %p167 = scmp.eq.s32.totalorder %s21, 0
      %p168 = por %p166, %p167
      %p169 = scmp.ne.s32.totalorder %s157, %s158
      %p170 = scmp.eq.s32.totalorder %s22, 1
      %p171 = por %p169, %p170
      %p173 = scmp.ne.s32.totalorder %s158, %s172
      %p174 = scmp.eq.s32.totalorder %s22, 0
      %p175 = por %p173, %p174
      %s176 = ssub.s32 %s16, %s23
      %p177 = scmp.eq.s32.totalorder %s176, 0
      %s179 = sadd.s32 %s178, 1
      %s180 = scalar_select %p177, %s178, %s179
      %p183 = pneg %p177
      %p184 = scmp.eq.s32.totalorder %s16, 1
      %p185 = por %p183, %p184
      %p186 = scmp.ne.s32.totalorder %s178, %s181
      %p187 = scmp.eq.s32.totalorder %s16, 0
      %p188 = por %p186, %p187
      %p189 = scmp.ne.s32.totalorder %s178, %s181
      %p190 = scmp.eq.s32.totalorder %s21, 1
      %p191 = por %p189, %p190
      %p192 = scmp.ne.s32.totalorder %s181, %s182
      %p193 = scmp.eq.s32.totalorder %s21, 0
      %p194 = por %p192, %p193
      %p195 = scmp.ne.s32.totalorder %s181, %s182
      %p196 = scmp.eq.s32.totalorder %s22, 1
      %p197 = por %p195, %p196
      %p199 = scmp.ne.s32.totalorder %s182, %s198
      %p200 = scmp.eq.s32.totalorder %s22, 0
      %p201 = por %p199, %p200
      %p202 = scmp.le.s32.totalorder 1, %s16
      %p203 = scmp.lt.s32.totalorder %s16, 3
      %p204 = pnand %p202, %p203
      %p205 = pneg %p204
      // Predicated region
      $region9: #{convnet_forward.1} parent=5 // pred_check
        _
      $region10: #{convnet_forward.1} parent=5 // pred_check_branch
        %207 = sbr.rel (%p204) target = $region12
      $region11: #{convnet_forward.1} parent=5 // pred_region
        %s208 = ssub.s32 %s16, 1
        // Predicated region
        $region13: #{convnet_forward.1} parent=11 // pred_check
          %p209 = pneg %p63
        $region14: #{convnet_forward.1} parent=11 // pred_check_branch
          %211 = sbr.rel (%p209) target = $region16
        $region15: #{convnet_forward.1} parent=11 // pred_region
          _
        $region16: #{convnet_forward.1} parent=11 // pred_fallthru
          _
        // Predicated region
        $region17: #{convnet_forward.1} parent=11 // pred_check
          %p212 = pneg %p84
        $region18: #{convnet_forward.1} parent=11 // pred_check_branch
          %214 = sbr.rel (%p212) target = $region20
        $region19: #{convnet_forward.1} parent=11 // pred_region
          _
        $region20: #{convnet_forward.1} parent=11 // pred_fallthru
          _
        // Predicated region
        $region21: #{convnet_forward.1} parent=11 // pred_check
          %p215 = pneg %p105
        $region22: #{convnet_forward.1} parent=11 // pred_check_branch
          %217 = sbr.rel (%p215) target = $region24
        $region23: #{convnet_forward.1} parent=11 // pred_region
          _
        $region24: #{convnet_forward.1} parent=11 // pred_fallthru
          _
        // Predicated region
        $region25: #{convnet_forward.1} parent=11 // pred_check
          %p218 = pneg %p126
        $region26: #{convnet_forward.1} parent=11 // pred_check_branch
          %220 = sbr.rel (%p218) target = $region28
        $region27: #{convnet_forward.1} parent=11 // pred_region
          _
        $region28: #{convnet_forward.1} parent=11 // pred_fallthru
          _
        // Predicated region
        $region29: #{convnet_forward.1} parent=11 // pred_check
          %p221 = pneg %p147
        $region30: #{convnet_forward.1} parent=11 // pred_check_branch
          %223 = sbr.rel (%p221) target = $region32
        $region31: #{convnet_forward.1} parent=11 // pred_region
          _
        $region32: #{convnet_forward.1} parent=11 // pred_fallthru
          _
        // Predicated region
        $region33: #{convnet_forward.1} parent=11 // pred_check
          %p224 = pneg %p168
        $region34: #{convnet_forward.1} parent=11 // pred_check_branch
          %226 = sbr.rel (%p224) target = $region36
        $region35: #{convnet_forward.1} parent=11 // pred_region
          _
        $region36: #{convnet_forward.1} parent=11 // pred_fallthru
          _
      $region12: #{convnet_forward.1} parent=5 // pred_fallthru
        _
      %p227 = scmp.lt.s32.totalorder %s16, 2
      // Predicated region
      $region37: #{convnet_forward.1} parent=5 // pred_check
        %p228 = pneg %p227
      $region38: #{convnet_forward.1} parent=5 // pred_check_branch
        %230 = sbr.rel (%p228) target = $region40
      $region39: #{convnet_forward.1} parent=5 // pred_region
        // Predicated region
        $region41: #{convnet_forward.1} parent=39 // pred_check
          %p231 = pneg %p36
        $region42: #{convnet_forward.1} parent=39 // pred_check_branch
          %233 = sbr.rel (%p231) target = $region44
        $region43: #{convnet_forward.1} parent=39 // pred_region
          %p234 = scmp.lt.s32.totalorder %s16, 1
          %s235 = scalar_select %p234, %s16, 1
          %s236 = smul.addr %s235, 32
          %s237 = smul.addr %s236, 4
          %s238 = scalar_lea.vmem %s0, %s237
        $region44: #{convnet_forward.1} parent=39 // pred_fallthru
          _
      $region40: #{convnet_forward.1} parent=5 // pred_fallthru
        _
      %p239 = scmp.le.s32.totalorder 1, %s16
      %p240 = scmp.lt.s32.totalorder %s16, 3
      %p241 = pnand %p239, %p240
      %p242 = pneg %p241
      // Predicated region
      $region45: #{convnet_forward.1} parent=5 // pred_check
        _
      $region46: #{convnet_forward.1} parent=5 // pred_check_branch
        %244 = sbr.rel (%p241) target = $region48
      $region47: #{convnet_forward.1} parent=5 // pred_region
        %s245 = ssub.s32 %s16, 1
        %p246 = scmp.lt.s32.totalorder %s21, 1
        %s247 = scalar_select %p246, %s21, 1
        %s248 = smul.addr %s247, 32
        %s249 = smul.addr %s248, 4
        %s250 = scalar_lea.vmem %s0, %s249
        %p251 = pneg %p42
        %p252 = pneg %p39
        %p253 = pneg %p63
        %p254 = pneg %p60
        %p255 = pneg %p84
        %p256 = pneg %p81
        %p257 = pneg %p105
        %p258 = pneg %p102
        %p259 = pneg %p126
        %p260 = pneg %p123
        %p261 = pneg %p147
        %p262 = pneg %p144
        %p263 = pneg %p168
        %p264 = pneg %p165
        %p265 = pneg %p194
        %p266 = pneg %p191
        %s267 = sand.u32 %s181, 1
        %s268 = scalar_lea.sflag [#allocation4], %s267
        %s269 = sand.u32 %s181, 1
        %s270 = scalar_lea.vmem [#allocation3], %s269
        %p271 = scmp.lt.s32.totalorder %s21, 1
        %s272 = scalar_select %p271, %s21, 1
        %s273 = smul.addr %s272, 32
        %s274 = smul.addr %s273, 4
        %s275 = scalar_lea.vmem %s0, %s274
        %v277 = vld [vmem:[%s275] sm:$0xf]
        %v278 = vld [vmem:[%s275 + $0x4] sm:$0xf]
        %v279 = vld [vmem:[%s275 + $0x8] sm:$0xf]
        %v280 = vld [vmem:[%s275 + $0xc] sm:$0xf]
        %v281 = vld [vmem:[%s275 + $0x10] sm:$0xf]
        %v282 = vld [vmem:[%s275 + $0x14] sm:$0xf]
        %v283 = vld [vmem:[%s275 + $0x18] sm:$0xf]
        %v284 = vld [vmem:[%s275 + $0x1c] sm:$0xf]
        %v285 = vld [vmem:[%s275 + $0x20] sm:$0xf]
        %v286 = vld [vmem:[%s275 + $0x24] sm:$0xf]
        %v287 = vld [vmem:[%s275 + $0x28] sm:$0xf]
        %v288 = vld [vmem:[%s275 + $0x2c] sm:$0xf]
        %v289 = vld [vmem:[%s275 + $0x30] sm:$0xf]
        %v290 = vld [vmem:[%s275 + $0x34] sm:$0xf]
        %v291 = vld [vmem:[%s275 + $0x38] sm:$0xf]
        %v292 = vld [vmem:[%s275 + $0x3c] sm:$0xf]
        %v293 = vld [vmem:[%s275 + $0x40] sm:$0xf]
        %v294 = vld [vmem:[%s275 + $0x44] sm:$0xf]
        %v295 = vld [vmem:[%s275 + $0x48] sm:$0xf]
        %v296 = vld [vmem:[%s275 + $0x4c] sm:$0xf]
        %v297 = vld [vmem:[%s275 + $0x50] sm:$0xf]
        %v298 = vld [vmem:[%s275 + $0x54] sm:$0xf]
        %v299 = vld [vmem:[%s275 + $0x58] sm:$0xf]
        %v300 = vld [vmem:[%s275 + $0x5c] sm:$0xf]
        %v301 = vld [vmem:[%s275 + $0x60] sm:$0xf]
        %v302 = vld [vmem:[%s275 + $0x64] sm:$0xf]
        %v303 = vld [vmem:[%s275 + $0x68] sm:$0xf]
        %v304 = vld [vmem:[%s275 + $0x6c] sm:$0xf]
        %v305 = vld [vmem:[%s275 + $0x70] sm:$0xf]
        %v306 = vld [vmem:[%s275 + $0x74] sm:$0xf]
        %v307 = vld [vmem:[%s275 + $0x78] sm:$0xf]
        %v308 = vld [vmem:[%s275 + $0x7c] sm:$0xf]
        %v309 = vld [vmem:[%s1] sm:$0xf]
        %v310 = vld [vmem:[%s1 + $0x4] sm:$0xf]
        %v311 = vld [vmem:[%s1 + $0x8] sm:$0xf]
        %v312 = vld [vmem:[%s1 + $0xc] sm:$0xf]
        %v313 = vld [vmem:[%s1 + $0x10] sm:$0xf]
        %v314 = vld [vmem:[%s1 + $0x14] sm:$0xf]
        %v315 = vld [vmem:[%s1 + $0x18] sm:$0xf]
        %v316 = vld [vmem:[%s1 + $0x1c] sm:$0xf]
        %v317 = vld [vmem:[%s1 + $0x20] sm:$0xf]
        %v318 = vld [vmem:[%s1 + $0x24] sm:$0xf]
        %v319 = vld [vmem:[%s1 + $0x28] sm:$0xf]
        %v320 = vld [vmem:[%s1 + $0x2c] sm:$0xf]
        %v321 = vld [vmem:[%s1 + $0x30] sm:$0xf]
        %v322 = vld [vmem:[%s1 + $0x34] sm:$0xf]
        %v323 = vld [vmem:[%s1 + $0x38] sm:$0xf]
        %v324 = vld [vmem:[%s1 + $0x3c] sm:$0xf]
        %v325 = vld [vmem:[%s2] sm:$0x1]
        %v327 = vlaneseq
        %v328 = vshrl.u32 %v327, 7
        %v329 = vsub.s32 0, %v328
        %v330 = vrot.slane %v325, %v329
        %v364 = vunpack.c.l.b16 %v277
        %v365 = vunpack.c.l.b16 %v278
        %v366 = vunpack.c.l.b16 %v279
        %v367 = vunpack.c.l.b16 %v280
        %v368 = vunpack.c.l.b16 %v281
        %v369 = vunpack.c.l.b16 %v282
        %v370 = vunpack.c.l.b16 %v283
        %v371 = vunpack.c.l.b16 %v284
        %v372 = vunpack.c.l.b16 %v285
        %v373 = vunpack.c.l.b16 %v286
        %v374 = vunpack.c.l.b16 %v287
        %v375 = vunpack.c.l.b16 %v288
        %v376 = vunpack.c.l.b16 %v289
        %v377 = vunpack.c.l.b16 %v290
        %v378 = vunpack.c.l.b16 %v291
        %v379 = vunpack.c.l.b16 %v292
        %v380 = vunpack.c.l.b16 %v293
        %v381 = vunpack.c.l.b16 %v294
        %v382 = vunpack.c.l.b16 %v295
        %v383 = vunpack.c.l.b16 %v296
        %v384 = vunpack.c.l.b16 %v297
        %v385 = vunpack.c.l.b16 %v298
        %v386 = vunpack.c.l.b16 %v299
        %v387 = vunpack.c.l.b16 %v300
        %v388 = vunpack.c.l.b16 %v301
        %v389 = vunpack.c.l.b16 %v302
        %v390 = vunpack.c.l.b16 %v303
        %v391 = vunpack.c.l.b16 %v304
        %v392 = vunpack.c.l.b16 %v305
        %v393 = vunpack.c.l.b16 %v306
        %v394 = vunpack.c.l.b16 %v307
        %v395 = vunpack.c.l.b16 %v308
        %v396 = vpack.c.b16 %v365, %v364
        %v397 = vpack.c.b16 %v367, %v366
        %v398 = vpack.c.b16 %v369, %v368
        %v399 = vpack.c.b16 %v371, %v370
        %v400 = vpack.c.b16 %v373, %v372
        %v401 = vpack.c.b16 %v375, %v374
        %v402 = vpack.c.b16 %v377, %v376
        %v403 = vpack.c.b16 %v379, %v378
        %v404 = vpack.c.b16 %v381, %v380
        %v405 = vpack.c.b16 %v383, %v382
        %v406 = vpack.c.b16 %v385, %v384
        %v407 = vpack.c.b16 %v387, %v386
        %v408 = vpack.c.b16 %v389, %v388
        %v409 = vpack.c.b16 %v391, %v390
        %v410 = vpack.c.b16 %v393, %v392
        %v411 = vpack.c.b16 %v395, %v394
        %v444 = vunpack.c.l.b16 %v309
        %v445 = vunpack.c.l.b16 %v310
        %v446 = vunpack.c.l.b16 %v311
        %v447 = vunpack.c.l.b16 %v312
        %v448 = vunpack.c.l.b16 %v313
        %v449 = vunpack.c.l.b16 %v314
        %v450 = vunpack.c.l.b16 %v315
        %v451 = vunpack.c.l.b16 %v316
        %v452 = vunpack.c.l.b16 %v317
        %v453 = vunpack.c.l.b16 %v318
        %v454 = vunpack.c.l.b16 %v319
        %v455 = vunpack.c.l.b16 %v320
        %v456 = vunpack.c.l.b16 %v321
        %v457 = vunpack.c.l.b16 %v322
        %v458 = vunpack.c.l.b16 %v323
        %v459 = vunpack.c.l.b16 %v324
        %v460 = vpack.c.b16 %v445, %v444
        %v461 = vpack.c.b16 %v447, %v446
        %v462 = vpack.c.b16 %v449, %v448
        %v463 = vpack.c.b16 %v451, %v450
        %v464 = vpack.c.b16 %v453, %v452
        %v465 = vpack.c.b16 %v455, %v454
        %v466 = vpack.c.b16 %v457, %v456
        %v467 = vpack.c.b16 %v459, %v458
        %476 = vmatprep.subr.bf16.mxu0 0
        %477 = vmatpush1.bf16.msra.mxu0 %v460
        %478 = vmatprep.subr.bf16.mxu0 0
        %479 = vmatpush1.bf16.msra.mxu0 %v461
        %480 = vmatprep.subr.bf16.mxu0 0
        %481 = vmatpush1.bf16.msra.mxu0 %v462
        %482 = vmatprep.subr.bf16.mxu0 0
        %483 = vmatpush1.bf16.msra.mxu0 %v463
        %484 = vmatprep.subr.bf16.mxu0 0
        %485 = vmatpush1.bf16.msra.mxu0 %v464
        %486 = vmatprep.subr.bf16.mxu0 0
        %487 = vmatpush1.bf16.msra.mxu0 %v465
        %488 = vmatprep.subr.bf16.mxu0 0
        %489 = vmatpush1.bf16.msra.mxu0 %v466
        %490 = vmatprep.subr.bf16.mxu0 0
        %491 = vmatpush1.bf16.msra.mxu0 %v467
        %492 = vmatprep.subr.bf16.mxu0 0
        %493 = vmatpush1.bf16.msra.mxu0 0
        %494 = vmatprep.subr.bf16.mxu0 0
        %495 = vmatpush1.bf16.msra.mxu0 0
        %496 = vmatprep.subr.bf16.mxu0 0
        %497 = vmatpush1.bf16.msra.mxu0 0
        %498 = vmatprep.subr.bf16.mxu0 0
        %499 = vmatpush1.bf16.msra.mxu0 0
        %500 = vmatprep.subr.bf16.mxu0 0
        %501 = vmatpush1.bf16.msra.mxu0 0
        %502 = vmatprep.subr.bf16.mxu0 0
        %503 = vmatpush1.bf16.msra.mxu0 0
        %504 = vmatprep.subr.bf16.mxu0 0
        %505 = vmatpush1.bf16.msra.mxu0 0
        %506 = vmatprep.subr.bf16.mxu0 0
        %507 = vmatpush1.bf16.msra.mxu0 0
        %508 = vmatprep.mubr.bf16.mxu0 0
        %509 = vmatmul.mubr.bf16.gmra.mrb[0].mxu0 %v396
        %v510 = vpop.f32.mrb[0].mxu0
        %v511 = vadd.f32 %v330, %v510
        %v512 = vpop.f32.mrb[0].mxu0
        %v513 = vpop.f32.mrb[0].mxu0
        %v514 = vadd.f32 %v330, %v513
        %v515 = vpop.f32.mrb[0].mxu0
        %516 = vmatprep.mubr.bf16.mxu0 0
        %517 = vmatmul.mubr.bf16.gmra.mrb[0].mxu0 %v397
        %v518 = vpop.f32.mrb[0].mxu0
        %v519 = vadd.f32 %v330, %v518
        %v520 = vpop.f32.mrb[0].mxu0
        %v521 = vpop.f32.mrb[0].mxu0
        %v522 = vadd.f32 %v330, %v521
        %v523 = vpop.f32.mrb[0].mxu0
        %524 = vmatprep.mubr.bf16.mxu0 0
        %525 = vmatmul.mubr.bf16.gmra.mrb[0].mxu0 %v398
        %v526 = vpop.f32.mrb[0].mxu0
        %v527 = vadd.f32 %v330, %v526
        %v528 = vpop.f32.mrb[0].mxu0
        %v529 = vpop.f32.mrb[0].mxu0
        %v530 = vadd.f32 %v330, %v529
        %v531 = vpop.f32.mrb[0].mxu0
        %532 = vmatprep.mubr.bf16.mxu0 0
        %533 = vmatmul.mubr.bf16.gmra.mrb[0].mxu0 %v399
        %v534 = vpop.f32.mrb[0].mxu0
        %v535 = vadd.f32 %v330, %v534
        %v536 = vpop.f32.mrb[0].mxu0
        %v537 = vpop.f32.mrb[0].mxu0
        %v538 = vadd.f32 %v330, %v537
        %v539 = vpop.f32.mrb[0].mxu0
        %540 = vmatprep.mubr.bf16.mxu0 0
        %541 = vmatmul.mubr.bf16.gmra.mrb[0].mxu0 %v400
        %v542 = vpop.f32.mrb[0].mxu0
        %v543 = vadd.f32 %v330, %v542
        %v544 = vpop.f32.mrb[0].mxu0
        %v545 = vpop.f32.mrb[0].mxu0
        %v546 = vadd.f32 %v330, %v545
        %v547 = vpop.f32.mrb[0].mxu0
        %548 = vmatprep.mubr.bf16.mxu0 0
        %549 = vmatmul.mubr.bf16.gmra.mrb[0].mxu0 %v401
        %v550 = vpop.f32.mrb[0].mxu0
        %v551 = vadd.f32 %v330, %v550
        %v552 = vpop.f32.mrb[0].mxu0
        %v553 = vpop.f32.mrb[0].mxu0
        %v554 = vadd.f32 %v330, %v553
        %v555 = vpop.f32.mrb[0].mxu0
        %556 = vmatprep.mubr.bf16.mxu0 0
        %557 = vmatmul.mubr.bf16.gmra.mrb[0].mxu0 %v402
        %v558 = vpop.f32.mrb[0].mxu0
        %v559 = vadd.f32 %v330, %v558
        %v560 = vpop.f32.mrb[0].mxu0
        %v561 = vpop.f32.mrb[0].mxu0
        %v562 = vadd.f32 %v330, %v561
        %v563 = vpop.f32.mrb[0].mxu0
        %564 = vmatprep.mubr.bf16.mxu0 0
        %565 = vmatmul.mubr.bf16.gmra.mrb[0].mxu0 %v403
        %v566 = vpop.f32.mrb[0].mxu0
        %v567 = vadd.f32 %v330, %v566
        %v568 = vpop.f32.mrb[0].mxu0
        %v569 = vpop.f32.mrb[0].mxu0
        %v570 = vadd.f32 %v330, %v569
        %v571 = vpop.f32.mrb[0].mxu0
        %572 = vmatprep.mubr.bf16.mxu0 0
        %573 = vmatmul.mubr.bf16.gmra.mrb[0].mxu0 %v404
        %v574 = vpop.f32.mrb[0].mxu0
        %v575 = vadd.f32 %v330, %v574
        %v576 = vpop.f32.mrb[0].mxu0
        %v577 = vpop.f32.mrb[0].mxu0
        %v578 = vadd.f32 %v330, %v577
        %v579 = vpop.f32.mrb[0].mxu0
        %580 = vmatprep.mubr.bf16.mxu0 0
        %581 = vmatmul.mubr.bf16.gmra.mrb[0].mxu0 %v405
        %v582 = vpop.f32.mrb[0].mxu0
        %v583 = vadd.f32 %v330, %v582
        %v584 = vpop.f32.mrb[0].mxu0
        %v585 = vpop.f32.mrb[0].mxu0
        %v586 = vadd.f32 %v330, %v585
        %v587 = vpop.f32.mrb[0].mxu0
        %588 = vmatprep.mubr.bf16.mxu0 0
        %589 = vmatmul.mubr.bf16.gmra.mrb[0].mxu0 %v406
        %v590 = vpop.f32.mrb[0].mxu0
        %v591 = vadd.f32 %v330, %v590
        %v592 = vpop.f32.mrb[0].mxu0
        %v593 = vpop.f32.mrb[0].mxu0
        %v594 = vadd.f32 %v330, %v593
        %v595 = vpop.f32.mrb[0].mxu0
        %596 = vmatprep.mubr.bf16.mxu0 0
        %597 = vmatmul.mubr.bf16.gmra.mrb[0].mxu0 %v407
        %v598 = vpop.f32.mrb[0].mxu0
        %v599 = vadd.f32 %v330, %v598
        %v600 = vpop.f32.mrb[0].mxu0
        %v601 = vpop.f32.mrb[0].mxu0
        %v602 = vadd.f32 %v330, %v601
        %v603 = vpop.f32.mrb[0].mxu0
        %604 = vmatprep.mubr.bf16.mxu0 0
        %605 = vmatmul.mubr.bf16.gmra.mrb[0].mxu0 %v408
        %v606 = vpop.f32.mrb[0].mxu0
        %v607 = vadd.f32 %v330, %v606
        %v608 = vpop.f32.mrb[0].mxu0
        %v609 = vpop.f32.mrb[0].mxu0
        %v610 = vadd.f32 %v330, %v609
        %v611 = vpop.f32.mrb[0].mxu0
        %612 = vmatprep.mubr.bf16.mxu0 0
        %613 = vmatmul.mubr.bf16.gmra.mrb[0].mxu0 %v409
        %v614 = vpop.f32.mrb[0].mxu0
        %v615 = vadd.f32 %v330, %v614
        %v616 = vpop.f32.mrb[0].mxu0
        %v617 = vpop.f32.mrb[0].mxu0
        %v618 = vadd.f32 %v330, %v617
        %v619 = vpop.f32.mrb[0].mxu0
        %620 = vmatprep.mubr.bf16.mxu0 0
        %621 = vmatmul.mubr.bf16.gmra.mrb[0].mxu0 %v410
        %v622 = vpop.f32.mrb[0].mxu0
        %v623 = vadd.f32 %v330, %v622
        %v624 = vpop.f32.mrb[0].mxu0
        %v625 = vpop.f32.mrb[0].mxu0
        %v626 = vadd.f32 %v330, %v625
        %v627 = vpop.f32.mrb[0].mxu0
        %628 = vmatprep.mubr.bf16.mxu0 0
        %629 = vmatmul.mubr.bf16.gmra.mrb[0].mxu0 %v411
        %v630 = vpop.f32.mrb[0].mxu0
        %v631 = vadd.f32 %v330, %v630
        %v632 = vpop.f32.mrb[0].mxu0
        %v633 = vpop.f32.mrb[0].mxu0
        %v634 = vadd.f32 %v330, %v633
        %v635 = vpop.f32.mrb[0].mxu0
        %636 = vdwg.mxu0
        %v637 = vmax.f32 %v511, 0.0
        %v638 = vmax.f32 %v514, 0.0
        %v639 = vmax.f32 %v519, 0.0
        %v640 = vmax.f32 %v522, 0.0
        %v641 = vmax.f32 %v527, 0.0
        %v642 = vmax.f32 %v530, 0.0
        %v643 = vmax.f32 %v535, 0.0
        %v644 = vmax.f32 %v538, 0.0
        %v645 = vmax.f32 %v543, 0.0
        %v646 = vmax.f32 %v546, 0.0
        %v647 = vmax.f32 %v551, 0.0
        %v648 = vmax.f32 %v554, 0.0
        %v649 = vmax.f32 %v559, 0.0
        %v650 = vmax.f32 %v562, 0.0
        %v651 = vmax.f32 %v567, 0.0
        %v652 = vmax.f32 %v570, 0.0
        %v653 = vmax.f32 %v575, 0.0
        %v654 = vmax.f32 %v578, 0.0
        %v655 = vmax.f32 %v583, 0.0
        %v656 = vmax.f32 %v586, 0.0
        %v657 = vmax.f32 %v591, 0.0
        %v658 = vmax.f32 %v594, 0.0
        %v659 = vmax.f32 %v599, 0.0
        %v660 = vmax.f32 %v602, 0.0
        %v661 = vmax.f32 %v607, 0.0
        %v662 = vmax.f32 %v610, 0.0
        %v663 = vmax.f32 %v615, 0.0
        %v664 = vmax.f32 %v618, 0.0
        %v665 = vmax.f32 %v623, 0.0
        %v666 = vmax.f32 %v626, 0.0
        %v667 = vmax.f32 %v631, 0.0
        %v668 = vmax.f32 %v634, 0.0
        %v669 = vmax.f32 %v637, %v645
        %v670 = vmax.f32 %v638, %v646
        %v671 = vmax.f32 %v639, %v647
        %v672 = vmax.f32 %v640, %v648
        %v673 = vmax.f32 %v641, %v649
        %v674 = vmax.f32 %v642, %v650
        %v675 = vmax.f32 %v643, %v651
        %v676 = vmax.f32 %v644, %v652
        %v677 = vmax.f32 %v653, %v661
        %v678 = vmax.f32 %v654, %v662
        %v679 = vmax.f32 %v655, %v663
        %v680 = vmax.f32 %v656, %v664
        %v681 = vmax.f32 %v657, %v665
        %v682 = vmax.f32 %v658, %v666
        %v683 = vmax.f32 %v659, %v667
        %v684 = vmax.f32 %v660, %v668
        %v685 = vmax.f32 %v669, %v677
        %v686 = vmax.f32 %v670, %v678
        %v687 = vmax.f32 %v671, %v679
        %v688 = vmax.f32 %v672, %v680
        %v689 = vmax.f32 %v673, %v681
        %v690 = vmax.f32 %v674, %v682
        %v691 = vmax.f32 %v675, %v683
        %v692 = vmax.f32 %v676, %v684
        %693 = vst [vmem:[#allocation2] sm:$0x3] 0.0
        %694 = vst [vmem:[#allocation2 + $0x8] sm:$0x3] 0.0
        %695 = vst [vmem:[#allocation2 + $0x10] sm:$0xc] 0.0
        %696 = vst [vmem:[#allocation2 + $0x18] sm:$0xc] 0.0
        %v698 = vrot.slane %v685, 6
        %vm700 = vcmask 261122
        %701 = vst.msk [vmem:[#allocation2] sm:$0xfc] %vm700, %v698
        %vm702 = vcmask 254976
        %703 = vst.msk [vmem:[#allocation2 + $0x10] sm:$0x3] %vm702, %v698
        %v705 = vrot.slane %v686, 6
        %706 = vrot.lane.b32.xlu0 %v705, 32
        %v707 = vpop.permute.xlu0 %706
        %vm709 = vcmask 523522
        %710 = vst.msk [vmem:[#allocation2] sm:$0xfc] %vm709, %v707
        %vm711 = vcmask 517376
        %712 = vst.msk [vmem:[#allocation2 + $0x10] sm:$0x3] %vm711, %v707
        %v714 = vrot.slane %v687, 6
        %715 = vrot.lane.b32.xlu0 %v714, 64
        %v716 = vpop.permute.xlu0 %715
        %vm718 = vcmask 785922
        %719 = vst.msk [vmem:[#allocation2] sm:$0xfc] %vm718, %v716
        %vm720 = vcmask 779776
        %721 = vst.msk [vmem:[#allocation2 + $0x10] sm:$0x3] %vm720, %v716
        %v723 = vrot.slane %v688, 6
        %724 = vrot.lane.b32.xlu0 %v723, 96
        %v725 = vpop.permute.xlu0 %724
        %vm727 = vcmask 1048322
        %728 = vst.msk [vmem:[#allocation2] sm:$0xfc] %vm727, %v725
        %vm729 = vcmask 1042176
        %730 = vst.msk [vmem:[#allocation2 + $0x10] sm:$0x3] %vm729, %v725
        %v732 = vrot.slane %v689, 6
        %734 = vst.msk [vmem:[#allocation2 + $0x8] sm:$0xfc] %vm700, %v732
        %735 = vst.msk [vmem:[#allocation2 + $0x18] sm:$0x3] %vm702, %v732
        %v737 = vrot.slane %v690, 6
        %738 = vrot.lane.b32.xlu0 %v737, 32
        %v739 = vpop.permute.xlu0 %738
        %741 = vst.msk [vmem:[#allocation2 + $0x8] sm:$0xfc] %vm709, %v739
        %742 = vst.msk [vmem:[#allocation2 + $0x18] sm:$0x3] %vm711, %v739
        %v744 = vrot.slane %v691, 6
        %745 = vrot.lane.b32.xlu0 %v744, 64
        %v746 = vpop.permute.xlu0 %745
        %748 = vst.msk [vmem:[#allocation2 + $0x8] sm:$0xfc] %vm718, %v746
        %749 = vst.msk [vmem:[#allocation2 + $0x18] sm:$0x3] %vm720, %v746
        %v751 = vrot.slane %v692, 6
        %752 = vrot.lane.b32.xlu0 %v751, 96
        %v753 = vpop.permute.xlu0 %752
        %755 = vst.msk [vmem:[#allocation2 + $0x8] sm:$0xfc] %vm727, %v753
        %756 = vst.msk [vmem:[#allocation2 + $0x18] sm:$0x3] %vm729, %v753
        %v757 = vld [vmem:[#allocation2] sm:$0xff]
        %v758 = vld [vmem:[#allocation2 + $0x8] sm:$0xff]
        %v759 = vld [vmem:[#allocation2] sm:$0xfe]
        %v760 = vld [vmem:[#allocation2 + $0x8] sm:$0xfe]
        %v761 = vld [vmem:[#allocation2 + $0x10] sm:$0x1]
        %v762 = vld [vmem:[#allocation2 + $0x18] sm:$0x1]
        %v763 = vld [vmem:[#allocation2] sm:$0xfc]
        %v764 = vld [vmem:[#allocation2 + $0x8] sm:$0xfc]
        %v765 = vld [vmem:[#allocation2 + $0x10] sm:$0x3]
        %v766 = vld [vmem:[#allocation2 + $0x18] sm:$0x3]
        %v767 = vld [vmem:[#allocation2] sm:$0xf8]
        %v768 = vld [vmem:[#allocation2 + $0x8] sm:$0xf8]
        %v769 = vld [vmem:[#allocation2 + $0x10] sm:$0x7]
        %v770 = vld [vmem:[#allocation2 + $0x18] sm:$0x7]
        %v771 = vld [vmem:[#allocation2] sm:$0xf0]
        %v772 = vld [vmem:[#allocation2 + $0x8] sm:$0xf0]
        %v773 = vld [vmem:[#allocation2 + $0x10] sm:$0xf]
        %v774 = vld [vmem:[#allocation2 + $0x18] sm:$0xf]
        %vm779 = vcmask 1046528
        %v780 = vrot.slane %v759, 1
        %v781 = vrot.slane %v761, 1
        %v782 = vsel %vm779, %v780, %v781
        %v783 = vrot.slane %v760, 1
        %v784 = vrot.slane %v762, 1
        %v785 = vsel %vm779, %v783, %v784
        %vm792 = vcmask 1045504
        %v793 = vrot.slane %v763, 2
        %v794 = vrot.slane %v765, 2
        %v795 = vsel %vm792, %v793, %v794
        %v796 = vrot.slane %v764, 2
        %v797 = vrot.slane %v766, 2
        %v798 = vsel %vm792, %v796, %v797
        %vm805 = vcmask 1044480
        %v806 = vrot.slane %v767, 3
        %v807 = vrot.slane %v769, 3
        %v808 = vsel %vm805, %v806, %v807
        %v809 = vrot.slane %v768, 3
        %v810 = vrot.slane %v770, 3
        %v811 = vsel %vm805, %v809, %v810
        %vm818 = vcmask 1043456
        %v819 = vrot.slane %v771, 4
        %v820 = vrot.slane %v773, 4
        %v821 = vsel %vm818, %v819, %v820
        %v822 = vrot.slane %v772, 4
        %v823 = vrot.slane %v774, 4
        %v824 = vsel %vm818, %v822, %v823
        %v827 = vpack.c.bf16 %v757, %v757
        %v828 = vpack.c.bf16 %v758, %v758
        %v829 = vpack.c.bf16 %v782, %v782
        %v830 = vpack.c.bf16 %v785, %v785
        %v831 = vpack.c.bf16 %v795, %v795
        %v832 = vpack.c.bf16 %v798, %v798
        %v833 = vpack.c.bf16 %v808, %v808
        %v834 = vpack.c.bf16 %v811, %v811
        %v835 = vpack.c.bf16 %v821, %v821
        %v836 = vpack.c.bf16 %v824, %v824
        %v837 = vld [vmem:[%s3] sm:$0xff]
        %v838 = vld [vmem:[%s3 + $0x8] sm:$0xff]
        %v839 = vld [vmem:[%s3 + $0x10] sm:$0xff]
        %v840 = vld [vmem:[%s3 + $0x18] sm:$0xff]
        %v841 = vld [vmem:[%s3 + $0x20] sm:$0xff]
        %v842 = vld [vmem:[%s3 + $0x28] sm:$0xff]
        %v843 = vld [vmem:[%s3 + $0x30] sm:$0xff]
        %v844 = vld [vmem:[%s3 + $0x38] sm:$0xff]
        %v845 = vld [vmem:[%s3 + $0x40] sm:$0xff]
        %v846 = vld [vmem:[%s3 + $0x48] sm:$0xff]
        %v847 = vld [vmem:[%s3 + $0x50] sm:$0xff]
        %v848 = vld [vmem:[%s3 + $0x58] sm:$0xff]
        %v849 = vld [vmem:[%s3 + $0x60] sm:$0xff]
        %v850 = vld [vmem:[%s3 + $0x68] sm:$0xff]
        %v851 = vld [vmem:[%s3 + $0x70] sm:$0xff]
        %v852 = vld [vmem:[%s3 + $0x78] sm:$0xff]
        %v853 = vld [vmem:[%s3 + $0x80] sm:$0xff]
        %v854 = vld [vmem:[%s3 + $0x88] sm:$0xff]
        %v855 = vld [vmem:[%s3 + $0x90] sm:$0xff]
        %v856 = vld [vmem:[%s3 + $0x98] sm:$0xff]
        %v857 = vld [vmem:[%s3 + $0xa0] sm:$0xff]
        %v858 = vld [vmem:[%s3 + $0xa8] sm:$0xff]
        %v859 = vld [vmem:[%s3 + $0xb0] sm:$0xff]
        %v860 = vld [vmem:[%s3 + $0xb8] sm:$0xff]
        %v861 = vld [vmem:[%s3 + $0xc0] sm:$0xff]
        %v862 = vld [vmem:[%s3 + $0xc8] sm:$0xff]
        %v863 = vld [vmem:[%s3 + $0xd0] sm:$0xff]
        %v864 = vld [vmem:[%s3 + $0xd8] sm:$0xff]
        %v865 = vld [vmem:[%s3 + $0xe0] sm:$0xff]
        %v866 = vld [vmem:[%s3 + $0xe8] sm:$0xff]
        %v867 = vld [vmem:[%s3 + $0xf0] sm:$0xff]
        %v868 = vld [vmem:[%s3 + $0xf8] sm:$0xff]
        %v869 = vld [vmem:[%s3 + $0x100] sm:$0xff]
        %v870 = vld [vmem:[%s3 + $0x108] sm:$0xff]
        %v871 = vld [vmem:[%s3 + $0x110] sm:$0xff]
        %v872 = vld [vmem:[%s3 + $0x118] sm:$0xff]
        %v873 = vld [vmem:[%s3 + $0x120] sm:$0xff]
        %v874 = vld [vmem:[%s3 + $0x128] sm:$0xff]
        %v875 = vld [vmem:[%s3 + $0x130] sm:$0xff]
        %v876 = vld [vmem:[%s3 + $0x138] sm:$0xff]
        %v877 = vld [vmem:[%s3 + $0x140] sm:$0xff]
        %v878 = vld [vmem:[%s3 + $0x148] sm:$0xff]
        %v879 = vld [vmem:[%s3 + $0x150] sm:$0xff]
        %v880 = vld [vmem:[%s3 + $0x158] sm:$0xff]
        %v881 = vld [vmem:[%s3 + $0x160] sm:$0xff]
        %v882 = vld [vmem:[%s3 + $0x168] sm:$0xff]
        %v883 = vld [vmem:[%s3 + $0x170] sm:$0xff]
        %v884 = vld [vmem:[%s3 + $0x178] sm:$0xff]
        %v885 = vld [vmem:[%s3 + $0x180] sm:$0xff]
        %v886 = vld [vmem:[%s3 + $0x188] sm:$0xff]
        %v887 = vld [vmem:[%s3 + $0x190] sm:$0xff]
        %v888 = vld [vmem:[%s3 + $0x198] sm:$0xff]
        %v889 = vld [vmem:[%s3 + $0x1a0] sm:$0xff]
        %v890 = vld [vmem:[%s3 + $0x1a8] sm:$0xff]
        %v891 = vld [vmem:[%s3 + $0x1b0] sm:$0xff]
        %v892 = vld [vmem:[%s3 + $0x1b8] sm:$0xff]
        %v893 = vld [vmem:[%s3 + $0x1c0] sm:$0xff]
        %v894 = vld [vmem:[%s3 + $0x1c8] sm:$0xff]
        %v895 = vld [vmem:[%s3 + $0x1d0] sm:$0xff]
        %v896 = vld [vmem:[%s3 + $0x1d8] sm:$0xff]
        %v897 = vld [vmem:[%s3 + $0x1e0] sm:$0xff]
        %v898 = vld [vmem:[%s3 + $0x1e8] sm:$0xff]
        %v899 = vld [vmem:[%s3 + $0x1f0] sm:$0xff]
        %v900 = vld [vmem:[%s3 + $0x1f8] sm:$0xff]
        %v901 = vld [vmem:[%s3 + $0x200] sm:$0xff]
        %v902 = vld [vmem:[%s3 + $0x208] sm:$0xff]
        %v903 = vld [vmem:[%s3 + $0x210] sm:$0xff]
        %v904 = vld [vmem:[%s3 + $0x218] sm:$0xff]
        %v905 = vld [vmem:[%s3 + $0x220] sm:$0xff]
        %v906 = vld [vmem:[%s3 + $0x228] sm:$0xff]
        %v907 = vld [vmem:[%s3 + $0x230] sm:$0xff]
        %v908 = vld [vmem:[%s3 + $0x238] sm:$0xff]
        %v909 = vld [vmem:[%s3 + $0x240] sm:$0xff]
        %v910 = vld [vmem:[%s3 + $0x248] sm:$0xff]
        %v911 = vld [vmem:[%s3 + $0x250] sm:$0xff]
        %v912 = vld [vmem:[%s3 + $0x258] sm:$0xff]
        %v913 = vld [vmem:[%s3 + $0x260] sm:$0xff]
        %v914 = vld [vmem:[%s3 + $0x268] sm:$0xff]
        %v915 = vld [vmem:[%s3 + $0x270] sm:$0xff]
        %v916 = vld [vmem:[%s3 + $0x278] sm:$0xff]
        %v917 = vld [vmem:[%s3 + $0x280] sm:$0xff]
        %v918 = vld [vmem:[%s3 + $0x288] sm:$0xff]
        %v919 = vld [vmem:[%s3 + $0x290] sm:$0xff]
        %v920 = vld [vmem:[%s3 + $0x298] sm:$0xff]
        %v921 = vld [vmem:[%s3 + $0x2a0] sm:$0xff]
        %v922 = vld [vmem:[%s3 + $0x2a8] sm:$0xff]
        %v923 = vld [vmem:[%s3 + $0x2b0] sm:$0xff]
        %v924 = vld [vmem:[%s3 + $0x2b8] sm:$0xff]
        %v925 = vld [vmem:[%s3 + $0x2c0] sm:$0xff]
        %v926 = vld [vmem:[%s3 + $0x2c8] sm:$0xff]
        %v927 = vld [vmem:[%s3 + $0x2d0] sm:$0xff]
        %v928 = vld [vmem:[%s3 + $0x2d8] sm:$0xff]
        %v929 = vld [vmem:[%s3 + $0x2e0] sm:$0xff]
        %v930 = vld [vmem:[%s3 + $0x2e8] sm:$0xff]
        %v931 = vld [vmem:[%s3 + $0x2f0] sm:$0xff]
        %v932 = vld [vmem:[%s3 + $0x2f8] sm:$0xff]
        %v933 = vld [vmem:[%s3 + $0x300] sm:$0xff]
        %v934 = vld [vmem:[%s3 + $0x308] sm:$0xff]
        %v935 = vld [vmem:[%s3 + $0x310] sm:$0xff]
        %v936 = vld [vmem:[%s3 + $0x318] sm:$0xff]
        %v937 = vld [vmem:[%s3 + $0x320] sm:$0xff]
        %v938 = vld [vmem:[%s3 + $0x328] sm:$0xff]
        %v939 = vld [vmem:[%s3 + $0x330] sm:$0xff]
        %v940 = vld [vmem:[%s3 + $0x338] sm:$0xff]
        %v941 = vld [vmem:[%s3 + $0x340] sm:$0xff]
        %v942 = vld [vmem:[%s3 + $0x348] sm:$0xff]
        %v943 = vld [vmem:[%s3 + $0x350] sm:$0xff]
        %v944 = vld [vmem:[%s3 + $0x358] sm:$0xff]
        %v945 = vld [vmem:[%s3 + $0x360] sm:$0xff]
        %v946 = vld [vmem:[%s3 + $0x368] sm:$0xff]
        %v947 = vld [vmem:[%s3 + $0x370] sm:$0xff]
        %v948 = vld [vmem:[%s3 + $0x378] sm:$0xff]
        %v949 = vld [vmem:[%s3 + $0x380] sm:$0xff]
        %v950 = vld [vmem:[%s3 + $0x388] sm:$0xff]
        %v951 = vld [vmem:[%s3 + $0x390] sm:$0xff]
        %v952 = vld [vmem:[%s3 + $0x398] sm:$0xff]
        %v953 = vld [vmem:[%s3 + $0x3a0] sm:$0xff]
        %v954 = vld [vmem:[%s3 + $0x3a8] sm:$0xff]
        %v955 = vld [vmem:[%s3 + $0x3b0] sm:$0xff]
        %v956 = vld [vmem:[%s3 + $0x3b8] sm:$0xff]
        %v957 = vld [vmem:[%s3 + $0x3c0] sm:$0xff]
        %v958 = vld [vmem:[%s3 + $0x3c8] sm:$0xff]
        %v959 = vld [vmem:[%s3 + $0x3d0] sm:$0xff]
        %v960 = vld [vmem:[%s3 + $0x3d8] sm:$0xff]
        %v961 = vld [vmem:[%s3 + $0x3e0] sm:$0xff]
        %v962 = vld [vmem:[%s3 + $0x3e8] sm:$0xff]
        %v963 = vld [vmem:[%s3 + $0x3f0] sm:$0xff]
        %v964 = vld [vmem:[%s3 + $0x3f8] sm:$0xff]
        %v965 = vld [vmem:[%s3 + $0x400] sm:$0xff]
        %v966 = vld [vmem:[%s3 + $0x408] sm:$0xff]
        %v967 = vld [vmem:[%s3 + $0x410] sm:$0xff]
        %v968 = vld [vmem:[%s3 + $0x418] sm:$0xff]
        %v969 = vld [vmem:[%s3 + $0x420] sm:$0xff]
        %v970 = vld [vmem:[%s3 + $0x428] sm:$0xff]
        %v971 = vld [vmem:[%s3 + $0x430] sm:$0xff]
        %v972 = vld [vmem:[%s3 + $0x438] sm:$0xff]
        %v973 = vld [vmem:[%s3 + $0x440] sm:$0xff]
        %v974 = vld [vmem:[%s3 + $0x448] sm:$0xff]
        %v975 = vld [vmem:[%s3 + $0x450] sm:$0xff]
        %v976 = vld [vmem:[%s3 + $0x458] sm:$0xff]
        %v977 = vld [vmem:[%s3 + $0x460] sm:$0xff]
        %v978 = vld [vmem:[%s3 + $0x468] sm:$0xff]
        %v979 = vld [vmem:[%s3 + $0x470] sm:$0xff]
        %v980 = vld [vmem:[%s3 + $0x478] sm:$0xff]
        %v981 = vld [vmem:[%s3 + $0x480] sm:$0xff]
        %v982 = vld [vmem:[%s3 + $0x488] sm:$0xff]
        %v983 = vld [vmem:[%s3 + $0x490] sm:$0xff]
        %v984 = vld [vmem:[%s3 + $0x498] sm:$0xff]
        %v985 = vld [vmem:[%s3 + $0x4a0] sm:$0xff]
        %v986 = vld [vmem:[%s3 + $0x4a8] sm:$0xff]
        %v987 = vld [vmem:[%s3 + $0x4b0] sm:$0xff]
        %v988 = vld [vmem:[%s3 + $0x4b8] sm:$0xff]
        %v989 = vld [vmem:[%s3 + $0x4c0] sm:$0xff]
        %v990 = vld [vmem:[%s3 + $0x4c8] sm:$0xff]
        %v991 = vld [vmem:[%s3 + $0x4d0] sm:$0xff]
        %v992 = vld [vmem:[%s3 + $0x4d8] sm:$0xff]
        %v993 = vld [vmem:[%s3 + $0x4e0] sm:$0xff]
        %v994 = vld [vmem:[%s3 + $0x4e8] sm:$0xff]
        %v995 = vld [vmem:[%s3 + $0x4f0] sm:$0xff]
        %v996 = vld [vmem:[%s3 + $0x4f8] sm:$0xff]
        %v997 = vld [vmem:[%s3 + $0x500] sm:$0xff]
        %v998 = vld [vmem:[%s3 + $0x508] sm:$0xff]
        %v999 = vld [vmem:[%s3 + $0x510] sm:$0xff]
        %v1000 = vld [vmem:[%s3 + $0x518] sm:$0xff]
        %v1001 = vld [vmem:[%s3 + $0x520] sm:$0xff]
        %v1002 = vld [vmem:[%s3 + $0x528] sm:$0xff]
        %v1003 = vld [vmem:[%s3 + $0x530] sm:$0xff]
        %v1004 = vld [vmem:[%s3 + $0x538] sm:$0xff]
        %v1005 = vld [vmem:[%s3 + $0x540] sm:$0xff]
        %v1006 = vld [vmem:[%s3 + $0x548] sm:$0xff]
        %v1007 = vld [vmem:[%s3 + $0x550] sm:$0xff]
        %v1008 = vld [vmem:[%s3 + $0x558] sm:$0xff]
        %v1009 = vld [vmem:[%s3 + $0x560] sm:$0xff]
        %v1010 = vld [vmem:[%s3 + $0x568] sm:$0xff]
        %v1011 = vld [vmem:[%s3 + $0x570] sm:$0xff]
        %v1012 = vld [vmem:[%s3 + $0x578] sm:$0xff]
        %v1013 = vld [vmem:[%s3 + $0x580] sm:$0xff]
        %v1014 = vld [vmem:[%s3 + $0x588] sm:$0xff]
        %v1015 = vld [vmem:[%s3 + $0x590] sm:$0xff]
        %v1016 = vld [vmem:[%s3 + $0x598] sm:$0xff]
        %v1017 = vld [vmem:[%s3 + $0x5a0] sm:$0xff]
        %v1018 = vld [vmem:[%s3 + $0x5a8] sm:$0xff]
        %v1019 = vld [vmem:[%s3 + $0x5b0] sm:$0xff]
        %v1020 = vld [vmem:[%s3 + $0x5b8] sm:$0xff]
        %v1021 = vld [vmem:[%s3 + $0x5c0] sm:$0xff]
        %v1022 = vld [vmem:[%s3 + $0x5c8] sm:$0xff]
        %v1023 = vld [vmem:[%s3 + $0x5d0] sm:$0xff]
        %v1024 = vld [vmem:[%s3 + $0x5d8] sm:$0xff]
        %v1025 = vld [vmem:[%s3 + $0x5e0] sm:$0xff]
        %v1026 = vld [vmem:[%s3 + $0x5e8] sm:$0xff]
        %v1027 = vld [vmem:[%s3 + $0x5f0] sm:$0xff]
        %v1028 = vld [vmem:[%s3 + $0x5f8] sm:$0xff]
        %v1029 = vld [vmem:[%s3 + $0x600] sm:$0xff]
        %v1030 = vld [vmem:[%s3 + $0x608] sm:$0xff]
        %v1031 = vld [vmem:[%s3 + $0x610] sm:$0xff]
        %v1032 = vld [vmem:[%s3 + $0x618] sm:$0xff]
        %v1033 = vld [vmem:[%s3 + $0x620] sm:$0xff]
        %v1034 = vld [vmem:[%s3 + $0x628] sm:$0xff]
        %v1035 = vld [vmem:[%s3 + $0x630] sm:$0xff]
        %v1036 = vld [vmem:[%s3 + $0x638] sm:$0xff]
        %v1037 = vld [vmem:[%s3 + $0x640] sm:$0xff]
        %v1038 = vld [vmem:[%s3 + $0x648] sm:$0xff]
        %v1039 = vld [vmem:[%s3 + $0x650] sm:$0xff]
        %v1040 = vld [vmem:[%s3 + $0x658] sm:$0xff]
        %v1041 = vld [vmem:[%s3 + $0x660] sm:$0xff]
        %v1042 = vld [vmem:[%s3 + $0x668] sm:$0xff]
        %v1043 = vld [vmem:[%s3 + $0x670] sm:$0xff]
        %v1044 = vld [vmem:[%s3 + $0x678] sm:$0xff]
        %v1045 = vld [vmem:[%s3 + $0x680] sm:$0xff]
        %v1046 = vld [vmem:[%s3 + $0x688] sm:$0xff]
        %v1047 = vld [vmem:[%s3 + $0x690] sm:$0xff]
        %v1048 = vld [vmem:[%s3 + $0x698] sm:$0xff]
        %v1049 = vld [vmem:[%s3 + $0x6a0] sm:$0xff]
        %v1050 = vld [vmem:[%s3 + $0x6a8] sm:$0xff]
        %v1051 = vld [vmem:[%s3 + $0x6b0] sm:$0xff]
        %v1052 = vld [vmem:[%s3 + $0x6b8] sm:$0xff]
        %v1053 = vld [vmem:[%s3 + $0x6c0] sm:$0xff]
        %v1054 = vld [vmem:[%s3 + $0x6c8] sm:$0xff]
        %v1055 = vld [vmem:[%s3 + $0x6d0] sm:$0xff]
        %v1056 = vld [vmem:[%s3 + $0x6d8] sm:$0xff]
        %v1057 = vld [vmem:[%s3 + $0x6e0] sm:$0xff]
        %v1058 = vld [vmem:[%s3 + $0x6e8] sm:$0xff]
        %v1059 = vld [vmem:[%s3 + $0x6f0] sm:$0xff]
        %v1060 = vld [vmem:[%s3 + $0x6f8] sm:$0xff]
        %v1061 = vld [vmem:[%s3 + $0x700] sm:$0xff]
        %v1062 = vld [vmem:[%s3 + $0x708] sm:$0xff]
        %v1063 = vld [vmem:[%s3 + $0x710] sm:$0xff]
        %v1064 = vld [vmem:[%s3 + $0x718] sm:$0xff]
        %v1065 = vld [vmem:[%s3 + $0x720] sm:$0xff]
        %v1066 = vld [vmem:[%s3 + $0x728] sm:$0xff]
        %v1067 = vld [vmem:[%s3 + $0x730] sm:$0xff]
        %v1068 = vld [vmem:[%s3 + $0x738] sm:$0xff]
        %v1069 = vld [vmem:[%s3 + $0x740] sm:$0xff]
        %v1070 = vld [vmem:[%s3 + $0x748] sm:$0xff]
        %v1071 = vld [vmem:[%s3 + $0x750] sm:$0xff]
        %v1072 = vld [vmem:[%s3 + $0x758] sm:$0xff]
        %v1073 = vld [vmem:[%s3 + $0x760] sm:$0xff]
        %v1074 = vld [vmem:[%s3 + $0x768] sm:$0xff]
        %v1075 = vld [vmem:[%s3 + $0x770] sm:$0xff]
        %v1076 = vld [vmem:[%s3 + $0x778] sm:$0xff]
        %v1077 = vld [vmem:[%s3 + $0x780] sm:$0xff]
        %v1078 = vld [vmem:[%s3 + $0x788] sm:$0xff]
        %v1079 = vld [vmem:[%s3 + $0x790] sm:$0xff]
        %v1080 = vld [vmem:[%s3 + $0x798] sm:$0xff]
        %v1081 = vld [vmem:[%s3 + $0x7a0] sm:$0xff]
        %v1082 = vld [vmem:[%s3 + $0x7a8] sm:$0xff]
        %v1083 = vld [vmem:[%s3 + $0x7b0] sm:$0xff]
        %v1084 = vld [vmem:[%s3 + $0x7b8] sm:$0xff]
        %v1085 = vld [vmem:[%s3 + $0x7c0] sm:$0xff]
        %v1086 = vld [vmem:[%s3 + $0x7c8] sm:$0xff]
        %v1087 = vld [vmem:[%s3 + $0x7d0] sm:$0xff]
        %v1088 = vld [vmem:[%s3 + $0x7d8] sm:$0xff]
        %v1089 = vld [vmem:[%s3 + $0x7e0] sm:$0xff]
        %v1090 = vld [vmem:[%s3 + $0x7e8] sm:$0xff]
        %v1091 = vld [vmem:[%s3 + $0x7f0] sm:$0xff]
        %v1092 = vld [vmem:[%s3 + $0x7f8] sm:$0xff]
        %v1093 = vld [vmem:[%s3 + $0x800] sm:$0xff]
        %v1094 = vld [vmem:[%s3 + $0x808] sm:$0xff]
        %v1095 = vld [vmem:[%s3 + $0x810] sm:$0xff]
        %v1096 = vld [vmem:[%s3 + $0x818] sm:$0xff]
        %v1097 = vld [vmem:[%s3 + $0x820] sm:$0xff]
        %v1098 = vld [vmem:[%s3 + $0x828] sm:$0xff]
        %v1099 = vld [vmem:[%s3 + $0x830] sm:$0xff]
        %v1100 = vld [vmem:[%s3 + $0x838] sm:$0xff]
        %v1101 = vld [vmem:[%s3 + $0x840] sm:$0xff]
        %v1102 = vld [vmem:[%s3 + $0x848] sm:$0xff]
        %v1103 = vld [vmem:[%s3 + $0x850] sm:$0xff]
        %v1104 = vld [vmem:[%s3 + $0x858] sm:$0xff]
        %v1105 = vld [vmem:[%s3 + $0x860] sm:$0xff]
        %v1106 = vld [vmem:[%s3 + $0x868] sm:$0xff]
        %v1107 = vld [vmem:[%s3 + $0x870] sm:$0xff]
        %v1108 = vld [vmem:[%s3 + $0x878] sm:$0xff]
        %v1109 = vld [vmem:[%s3 + $0x880] sm:$0xff]
        %v1110 = vld [vmem:[%s3 + $0x888] sm:$0xff]
        %v1111 = vld [vmem:[%s3 + $0x890] sm:$0xff]
        %v1112 = vld [vmem:[%s3 + $0x898] sm:$0xff]
        %v1113 = vld [vmem:[%s3 + $0x8a0] sm:$0xff]
        %v1114 = vld [vmem:[%s3 + $0x8a8] sm:$0xff]
        %v1115 = vld [vmem:[%s3 + $0x8b0] sm:$0xff]
        %v1116 = vld [vmem:[%s3 + $0x8b8] sm:$0xff]
        %v1117 = vld [vmem:[%s3 + $0x8c0] sm:$0xff]
        %v1118 = vld [vmem:[%s3 + $0x8c8] sm:$0xff]
        %v1119 = vld [vmem:[%s3 + $0x8d0] sm:$0xff]
        %v1120 = vld [vmem:[%s3 + $0x8d8] sm:$0xff]
        %v1121 = vld [vmem:[%s3 + $0x8e0] sm:$0xff]
        %v1122 = vld [vmem:[%s3 + $0x8e8] sm:$0xff]
        %v1123 = vld [vmem:[%s3 + $0x8f0] sm:$0xff]
        %v1124 = vld [vmem:[%s3 + $0x8f8] sm:$0xff]
        %v1125 = vld [vmem:[%s3 + $0x900] sm:$0xff]
        %v1126 = vld [vmem:[%s3 + $0x908] sm:$0xff]
        %v1127 = vld [vmem:[%s3 + $0x910] sm:$0xff]
        %v1128 = vld [vmem:[%s3 + $0x918] sm:$0xff]
        %v1129 = vld [vmem:[%s3 + $0x920] sm:$0xff]
        %v1130 = vld [vmem:[%s3 + $0x928] sm:$0xff]
        %v1131 = vld [vmem:[%s3 + $0x930] sm:$0xff]
        %v1132 = vld [vmem:[%s3 + $0x938] sm:$0xff]
        %v1133 = vld [vmem:[%s3 + $0x940] sm:$0xff]
        %v1134 = vld [vmem:[%s3 + $0x948] sm:$0xff]
        %v1135 = vld [vmem:[%s3 + $0x950] sm:$0xff]
        %v1136 = vld [vmem:[%s3 + $0x958] sm:$0xff]
        %v1137 = vld [vmem:[%s3 + $0x960] sm:$0xff]
        %v1138 = vld [vmem:[%s3 + $0x968] sm:$0xff]
        %v1139 = vld [vmem:[%s3 + $0x970] sm:$0xff]
        %v1140 = vld [vmem:[%s3 + $0x978] sm:$0xff]
        %v1141 = vld [vmem:[%s3 + $0x980] sm:$0xff]
        %v1142 = vld [vmem:[%s3 + $0x988] sm:$0xff]
        %v1143 = vld [vmem:[%s3 + $0x990] sm:$0xff]
        %v1144 = vld [vmem:[%s3 + $0x998] sm:$0xff]
        %v1145 = vld [vmem:[%s3 + $0x9a0] sm:$0xff]
        %v1146 = vld [vmem:[%s3 + $0x9a8] sm:$0xff]
        %v1147 = vld [vmem:[%s3 + $0x9b0] sm:$0xff]
        %v1148 = vld [vmem:[%s3 + $0x9b8] sm:$0xff]
        %v1149 = vld [vmem:[%s3 + $0x9c0] sm:$0xff]
        %v1150 = vld [vmem:[%s3 + $0x9c8] sm:$0xff]
        %v1151 = vld [vmem:[%s3 + $0x9d0] sm:$0xff]
        %v1152 = vld [vmem:[%s3 + $0x9d8] sm:$0xff]
        %v1153 = vld [vmem:[%s3 + $0x9e0] sm:$0xff]
        %v1154 = vld [vmem:[%s3 + $0x9e8] sm:$0xff]
        %v1155 = vld [vmem:[%s3 + $0x9f0] sm:$0xff]
        %v1156 = vld [vmem:[%s3 + $0x9f8] sm:$0xff]
        %v1157 = vld [vmem:[%s4] sm:$0xf]
        %v1159 = vlaneseq
        %v1160 = vshrl.u32 %v1159, 7
        %v1161 = vsub.s32 0, %v1160
        %v1162 = vrot.slane %v1157, %v1161
        %v1163 = vlaneseq
        %v1164 = vshrl.u32 %v1163, 7
        %v1165 = vsub.s32 1, %v1164
        %v1166 = vrot.slane %v1157, %v1165
        %v1167 = vlaneseq
        %v1168 = vshrl.u32 %v1167, 7
        %v1169 = vsub.s32 2, %v1168
        %v1170 = vrot.slane %v1157, %v1169
        %v1171 = vlaneseq
        %v1172 = vshrl.u32 %v1171, 7
        %v1173 = vsub.s32 3, %v1172
        %v1174 = vrot.slane %v1157, %v1173
        %v1499 = vunpack.c.l.b16 %v837
        %v1500 = vunpack.c.h.b16 %v837
        %v1501 = vunpack.c.l.b16 %v838
        %v1502 = vunpack.c.h.b16 %v838
        %v1503 = vunpack.c.l.b16 %v839
        %v1504 = vunpack.c.h.b16 %v839
        %v1505 = vunpack.c.l.b16 %v840
        %v1506 = vunpack.c.h.b16 %v840
        %v1507 = vunpack.c.l.b16 %v841
        %v1508 = vunpack.c.h.b16 %v841
        %v1509 = vunpack.c.l.b16 %v842
        %v1510 = vunpack.c.h.b16 %v842
        %v1511 = vunpack.c.l.b16 %v843
        %v1512 = vunpack.c.h.b16 %v843
        %v1513 = vunpack.c.l.b16 %v844
        %v1514 = vunpack.c.h.b16 %v844
        %v1515 = vunpack.c.l.b16 %v845
        %v1516 = vunpack.c.h.b16 %v845
        %v1517 = vunpack.c.l.b16 %v846
        %v1518 = vunpack.c.h.b16 %v846
        %v1519 = vunpack.c.l.b16 %v847
        %v1520 = vunpack.c.h.b16 %v847
        %v1521 = vunpack.c.l.b16 %v848
        %v1522 = vunpack.c.h.b16 %v848
        %v1523 = vunpack.c.l.b16 %v849
        %v1524 = vunpack.c.h.b16 %v849
        %v1525 = vunpack.c.l.b16 %v850
        %v1526 = vunpack.c.h.b16 %v850
        %v1527 = vunpack.c.l.b16 %v851
        %v1528 = vunpack.c.h.b16 %v851
        %v1529 = vunpack.c.l.b16 %v852
        %v1530 = vunpack.c.h.b16 %v852
        %v1531 = vunpack.c.l.b16 %v853
        %v1532 = vunpack.c.h.b16 %v853
        %v1533 = vunpack.c.l.b16 %v854
        %v1534 = vunpack.c.h.b16 %v854
        %v1535 = vunpack.c.l.b16 %v855
        %v1536 = vunpack.c.h.b16 %v855
        %v1537 = vunpack.c.l.b16 %v856
        %v1538 = vunpack.c.h.b16 %v856
        %v1539 = vunpack.c.l.b16 %v857
        %v1540 = vunpack.c.h.b16 %v857
        %v1541 = vunpack.c.l.b16 %v858
        %v1542 = vunpack.c.h.b16 %v858
        %v1543 = vunpack.c.l.b16 %v859
        %v1544 = vunpack.c.h.b16 %v859
        %v1545 = vunpack.c.l.b16 %v860
        %v1546 = vunpack.c.h.b16 %v860
        %v1547 = vunpack.c.l.b16 %v861
        %v1548 = vunpack.c.h.b16 %v861
        %v1549 = vunpack.c.l.b16 %v862
        %v1550 = vunpack.c.h.b16 %v862
        %v1551 = vunpack.c.l.b16 %v863
        %v1552 = vunpack.c.h.b16 %v863
        %v1553 = vunpack.c.l.b16 %v864
        %v1554 = vunpack.c.h.b16 %v864
        %v1555 = vunpack.c.l.b16 %v865
        %v1556 = vunpack.c.h.b16 %v865
        %v1557 = vunpack.c.l.b16 %v866
        %v1558 = vunpack.c.h.b16 %v866
        %v1559 = vunpack.c.l.b16 %v867
        %v1560 = vunpack.c.h.b16 %v867
        %v1561 = vunpack.c.l.b16 %v868
        %v1562 = vunpack.c.h.b16 %v868
        %v1563 = vunpack.c.l.b16 %v869
        %v1564 = vunpack.c.h.b16 %v869
        %v1565 = vunpack.c.l.b16 %v870
        %v1566 = vunpack.c.h.b16 %v870
        %v1567 = vunpack.c.l.b16 %v871
        %v1568 = vunpack.c.h.b16 %v871
        %v1569 = vunpack.c.l.b16 %v872
        %v1570 = vunpack.c.h.b16 %v872
        %v1571 = vunpack.c.l.b16 %v873
        %v1572 = vunpack.c.h.b16 %v873
        %v1573 = vunpack.c.l.b16 %v874
        %v1574 = vunpack.c.h.b16 %v874
        %v1575 = vunpack.c.l.b16 %v875
        %v1576 = vunpack.c.h.b16 %v875
        %v1577 = vunpack.c.l.b16 %v876
        %v1578 = vunpack.c.h.b16 %v876
        %v1579 = vunpack.c.l.b16 %v877
        %v1580 = vunpack.c.h.b16 %v877
        %v1581 = vunpack.c.l.b16 %v878
        %v1582 = vunpack.c.h.b16 %v878
        %v1583 = vunpack.c.l.b16 %v879
        %v1584 = vunpack.c.h.b16 %v879
        %v1585 = vunpack.c.l.b16 %v880
        %v1586 = vunpack.c.h.b16 %v880
        %v1587 = vunpack.c.l.b16 %v881
        %v1588 = vunpack.c.h.b16 %v881
        %v1589 = vunpack.c.l.b16 %v882
        %v1590 = vunpack.c.h.b16 %v882
        %v1591 = vunpack.c.l.b16 %v883
        %v1592 = vunpack.c.h.b16 %v883
        %v1593 = vunpack.c.l.b16 %v884
        %v1594 = vunpack.c.h.b16 %v884
        %v1595 = vunpack.c.l.b16 %v885
        %v1596 = vunpack.c.h.b16 %v885
        %v1597 = vunpack.c.l.b16 %v886
        %v1598 = vunpack.c.h.b16 %v886
        %v1599 = vunpack.c.l.b16 %v887
        %v1600 = vunpack.c.h.b16 %v887
        %v1601 = vunpack.c.l.b16 %v888
        %v1602 = vunpack.c.h.b16 %v888
        %v1603 = vunpack.c.l.b16 %v889
        %v1604 = vunpack.c.h.b16 %v889
        %v1605 = vunpack.c.l.b16 %v890
        %v1606 = vunpack.c.h.b16 %v890
        %v1607 = vunpack.c.l.b16 %v891
        %v1608 = vunpack.c.h.b16 %v891
        %v1609 = vunpack.c.l.b16 %v892
        %v1610 = vunpack.c.h.b16 %v892
        %v1611 = vunpack.c.l.b16 %v893
        %v1612 = vunpack.c.h.b16 %v893
        %v1613 = vunpack.c.l.b16 %v894
        %v1614 = vunpack.c.h.b16 %v894
        %v1615 = vunpack.c.l.b16 %v895
        %v1616 = vunpack.c.h.b16 %v895
        %v1617 = vunpack.c.l.b16 %v896
        %v1618 = vunpack.c.h.b16 %v896
        %v1619 = vunpack.c.l.b16 %v897
        %v1620 = vunpack.c.h.b16 %v897
        %v1621 = vunpack.c.l.b16 %v898
        %v1622 = vunpack.c.h.b16 %v898
        %v1623 = vunpack.c.l.b16 %v899
        %v1624 = vunpack.c.h.b16 %v899
        %v1625 = vunpack.c.l.b16 %v900
        %v1626 = vunpack.c.h.b16 %v900
        %v1627 = vunpack.c.l.b16 %v901
        %v1628 = vunpack.c.h.b16 %v901
        %v1629 = vunpack.c.l.b16 %v902
        %v1630 = vunpack.c.h.b16 %v902
        %v1631 = vunpack.c.l.b16 %v903
        %v1632 = vunpack.c.h.b16 %v903
        %v1633 = vunpack.c.l.b16 %v904
        %v1634 = vunpack.c.h.b16 %v904
        %v1635 = vunpack.c.l.b16 %v905
        %v1636 = vunpack.c.h.b16 %v905
        %v1637 = vunpack.c.l.b16 %v906
        %v1638 = vunpack.c.h.b16 %v906
        %v1639 = vunpack.c.l.b16 %v907
        %v1640 = vunpack.c.h.b16 %v907
        %v1641 = vunpack.c.l.b16 %v908
        %v1642 = vunpack.c.h.b16 %v908
        %v1643 = vunpack.c.l.b16 %v909
        %v1644 = vunpack.c.h.b16 %v909
        %v1645 = vunpack.c.l.b16 %v910
        %v1646 = vunpack.c.h.b16 %v910
        %v1647 = vunpack.c.l.b16 %v911
        %v1648 = vunpack.c.h.b16 %v911
        %v1649 = vunpack.c.l.b16 %v912
        %v1650 = vunpack.c.h.b16 %v912
        %v1651 = vunpack.c.l.b16 %v913
        %v1652 = vunpack.c.h.b16 %v913
        %v1653 = vunpack.c.l.b16 %v914
        %v1654 = vunpack.c.h.b16 %v914
        %v1655 = vunpack.c.l.b16 %v915
        %v1656 = vunpack.c.h.b16 %v915
        %v1657 = vunpack.c.l.b16 %v916
        %v1658 = vunpack.c.h.b16 %v916
        %v1659 = vunpack.c.l.b16 %v917
        %v1660 = vunpack.c.h.b16 %v917
        %v1661 = vunpack.c.l.b16 %v918
        %v1662 = vunpack.c.h.b16 %v918
        %v1663 = vunpack.c.l.b16 %v919
        %v1664 = vunpack.c.h.b16 %v919
        %v1665 = vunpack.c.l.b16 %v920
        %v1666 = vunpack.c.h.b16 %v920
        %v1667 = vunpack.c.l.b16 %v921
        %v1668 = vunpack.c.h.b16 %v921
        %v1669 = vunpack.c.l.b16 %v922
        %v1670 = vunpack.c.h.b16 %v922
        %v1671 = vunpack.c.l.b16 %v923
        %v1672 = vunpack.c.h.b16 %v923
        %v1673 = vunpack.c.l.b16 %v924
        %v1674 = vunpack.c.h.b16 %v924
        %v1675 = vunpack.c.l.b16 %v925
        %v1676 = vunpack.c.h.b16 %v925
        %v1677 = vunpack.c.l.b16 %v926
        %v1678 = vunpack.c.h.b16 %v926
        %v1679 = vunpack.c.l.b16 %v927
        %v1680 = vunpack.c.h.b16 %v927
        %v1681 = vunpack.c.l.b16 %v928
        %v1682 = vunpack.c.h.b16 %v928
        %v1683 = vunpack.c.l.b16 %v929
        %v1684 = vunpack.c.h.b16 %v929
        %v1685 = vunpack.c.l.b16 %v930
        %v1686 = vunpack.c.h.b16 %v930
        %v1687 = vunpack.c.l.b16 %v931
        %v1688 = vunpack.c.h.b16 %v931
        %v1689 = vunpack.c.l.b16 %v932
        %v1690 = vunpack.c.h.b16 %v932
        %v1691 = vunpack.c.l.b16 %v933
        %v1692 = vunpack.c.h.b16 %v933
        %v1693 = vunpack.c.l.b16 %v934
        %v1694 = vunpack.c.h.b16 %v934
        %v1695 = vunpack.c.l.b16 %v935
        %v1696 = vunpack.c.h.b16 %v935
        %v1697 = vunpack.c.l.b16 %v936
        %v1698 = vunpack.c.h.b16 %v936
        %v1699 = vunpack.c.l.b16 %v937
        %v1700 = vunpack.c.h.b16 %v937
        %v1701 = vunpack.c.l.b16 %v938
        %v1702 = vunpack.c.h.b16 %v938
        %v1703 = vunpack.c.l.b16 %v939
        %v1704 = vunpack.c.h.b16 %v939
        %v1705 = vunpack.c.l.b16 %v940
        %v1706 = vunpack.c.h.b16 %v940
        %v1707 = vunpack.c.l.b16 %v941
        %v1708 = vunpack.c.h.b16 %v941
        %v1709 = vunpack.c.l.b16 %v942
        %v1710 = vunpack.c.h.b16 %v942
        %v1711 = vunpack.c.l.b16 %v943
        %v1712 = vunpack.c.h.b16 %v943
        %v1713 = vunpack.c.l.b16 %v944
        %v1714 = vunpack.c.h.b16 %v944
        %v1715 = vunpack.c.l.b16 %v945
        %v1716 = vunpack.c.h.b16 %v945
        %v1717 = vunpack.c.l.b16 %v946
        %v1718 = vunpack.c.h.b16 %v946
        %v1719 = vunpack.c.l.b16 %v947
        %v1720 = vunpack.c.h.b16 %v947
        %v1721 = vunpack.c.l.b16 %v948
        %v1722 = vunpack.c.h.b16 %v948
        %v1723 = vunpack.c.l.b16 %v949
        %v1724 = vunpack.c.h.b16 %v949
        %v1725 = vunpack.c.l.b16 %v950
        %v1726 = vunpack.c.h.b16 %v950
        %v1727 = vunpack.c.l.b16 %v951
        %v1728 = vunpack.c.h.b16 %v951
        %v1729 = vunpack.c.l.b16 %v952
        %v1730 = vunpack.c.h.b16 %v952
        %v1731 = vunpack.c.l.b16 %v953
        %v1732 = vunpack.c.h.b16 %v953
        %v1733 = vunpack.c.l.b16 %v954
        %v1734 = vunpack.c.h.b16 %v954
        %v1735 = vunpack.c.l.b16 %v955
        %v1736 = vunpack.c.h.b16 %v955
        %v1737 = vunpack.c.l.b16 %v956
        %v1738 = vunpack.c.h.b16 %v956
        %v1739 = vunpack.c.l.b16 %v957
        %v1740 = vunpack.c.h.b16 %v957
        %v1741 = vunpack.c.l.b16 %v958
        %v1742 = vunpack.c.h.b16 %v958
        %v1743 = vunpack.c.l.b16 %v959
        %v1744 = vunpack.c.h.b16 %v959
        %v1745 = vunpack.c.l.b16 %v960
        %v1746 = vunpack.c.h.b16 %v960
        %v1747 = vunpack.c.l.b16 %v961
        %v1748 = vunpack.c.h.b16 %v961
        %v1749 = vunpack.c.l.b16 %v962
        %v1750 = vunpack.c.h.b16 %v962
        %v1751 = vunpack.c.l.b16 %v963
        %v1752 = vunpack.c.h.b16 %v963
        %v1753 = vunpack.c.l.b16 %v964
        %v1754 = vunpack.c.h.b16 %v964
        %v1755 = vunpack.c.l.b16 %v965
        %v1756 = vunpack.c.h.b16 %v965
        %v1757 = vunpack.c.l.b16 %v966
        %v1758 = vunpack.c.h.b16 %v966
        %v1759 = vunpack.c.l.b16 %v967
        %v1760 = vunpack.c.h.b16 %v967
        %v1761 = vunpack.c.l.b16 %v968
        %v1762 = vunpack.c.h.b16 %v968
        %v1763 = vunpack.c.l.b16 %v969
        %v1764 = vunpack.c.h.b16 %v969
        %v1765 = vunpack.c.l.b16 %v970
        %v1766 = vunpack.c.h.b16 %v970
        %v1767 = vunpack.c.l.b16 %v971
        %v1768 = vunpack.c.h.b16 %v971
        %v1769 = vunpack.c.l.b16 %v972
        %v1770 = vunpack.c.h.b16 %v972
        %v1771 = vunpack.c.l.b16 %v973
        %v1772 = vunpack.c.h.b16 %v973
        %v1773 = vunpack.c.l.b16 %v974
        %v1774 = vunpack.c.h.b16 %v974
        %v1775 = vunpack.c.l.b16 %v975
        %v1776 = vunpack.c.h.b16 %v975
        %v1777 = vunpack.c.l.b16 %v976
        %v1778 = vunpack.c.h.b16 %v976
        %v1779 = vunpack.c.l.b16 %v977
        %v1780 = vunpack.c.h.b16 %v977
        %v1781 = vunpack.c.l.b16 %v978
        %v1782 = vunpack.c.h.b16 %v978
        %v1783 = vunpack.c.l.b16 %v979
        %v1784 = vunpack.c.h.b16 %v979
        %v1785 = vunpack.c.l.b16 %v980
        %v1786 = vunpack.c.h.b16 %v980
        %v1787 = vunpack.c.l.b16 %v981
        %v1788 = vunpack.c.h.b16 %v981
        %v1789 = vunpack.c.l.b16 %v982
        %v1790 = vunpack.c.h.b16 %v982
        %v1791 = vunpack.c.l.b16 %v983
        %v1792 = vunpack.c.h.b16 %v983
        %v1793 = vunpack.c.l.b16 %v984
        %v1794 = vunpack.c.h.b16 %v984
        %v1795 = vunpack.c.l.b16 %v985
        %v1796 = vunpack.c.h.b16 %v985
        %v1797 = vunpack.c.l.b16 %v986
        %v1798 = vunpack.c.h.b16 %v986
        %v1799 = vunpack.c.l.b16 %v987
        %v1800 = vunpack.c.h.b16 %v987
        %v1801 = vunpack.c.l.b16 %v988
        %v1802 = vunpack.c.h.b16 %v988
        %v1803 = vunpack.c.l.b16 %v989
        %v1804 = vunpack.c.h.b16 %v989
        %v1805 = vunpack.c.l.b16 %v990
        %v1806 = vunpack.c.h.b16 %v990
        %v1807 = vunpack.c.l.b16 %v991
        %v1808 = vunpack.c.h.b16 %v991
        %v1809 = vunpack.c.l.b16 %v992
        %v1810 = vunpack.c.h.b16 %v992
        %v1811 = vunpack.c.l.b16 %v993
        %v1812 = vunpack.c.h.b16 %v993
        %v1813 = vunpack.c.l.b16 %v994
        %v1814 = vunpack.c.h.b16 %v994
        %v1815 = vunpack.c.l.b16 %v995
        %v1816 = vunpack.c.h.b16 %v995
        %v1817 = vunpack.c.l.b16 %v996
        %v1818 = vunpack.c.h.b16 %v996
        %v1819 = vunpack.c.l.b16 %v997
        %v1820 = vunpack.c.h.b16 %v997
        %v1821 = vunpack.c.l.b16 %v998
        %v1822 = vunpack.c.h.b16 %v998
        %v1823 = vunpack.c.l.b16 %v999
        %v1824 = vunpack.c.h.b16 %v999
        %v1825 = vunpack.c.l.b16 %v1000
        %v1826 = vunpack.c.h.b16 %v1000
        %v1827 = vunpack.c.l.b16 %v1001
        %v1828 = vunpack.c.h.b16 %v1001
        %v1829 = vunpack.c.l.b16 %v1002
        %v1830 = vunpack.c.h.b16 %v1002
        %v1831 = vunpack.c.l.b16 %v1003
        %v1832 = vunpack.c.h.b16 %v1003
        %v1833 = vunpack.c.l.b16 %v1004
        %v1834 = vunpack.c.h.b16 %v1004
        %v1835 = vunpack.c.l.b16 %v1005
        %v1836 = vunpack.c.h.b16 %v1005
        %v1837 = vunpack.c.l.b16 %v1006
        %v1838 = vunpack.c.h.b16 %v1006
        %v1839 = vunpack.c.l.b16 %v1007
        %v1840 = vunpack.c.h.b16 %v1007
        %v1841 = vunpack.c.l.b16 %v1008
        %v1842 = vunpack.c.h.b16 %v1008
        %v1843 = vunpack.c.l.b16 %v1009
        %v1844 = vunpack.c.h.b16 %v1009
        %v1845 = vunpack.c.l.b16 %v1010
        %v1846 = vunpack.c.h.b16 %v1010
        %v1847 = vunpack.c.l.b16 %v1011
        %v1848 = vunpack.c.h.b16 %v1011
        %v1849 = vunpack.c.l.b16 %v1012
        %v1850 = vunpack.c.h.b16 %v1012
        %v1851 = vunpack.c.l.b16 %v1013
        %v1852 = vunpack.c.h.b16 %v1013
        %v1853 = vunpack.c.l.b16 %v1014
        %v1854 = vunpack.c.h.b16 %v1014
        %v1855 = vunpack.c.l.b16 %v1015
        %v1856 = vunpack.c.h.b16 %v1015
        %v1857 = vunpack.c.l.b16 %v1016
        %v1858 = vunpack.c.h.b16 %v1016
        %v1859 = vunpack.c.l.b16 %v1017
        %v1860 = vunpack.c.h.b16 %v1017
        %v1861 = vunpack.c.l.b16 %v1018
        %v1862 = vunpack.c.h.b16 %v1018
        %v1863 = vunpack.c.l.b16 %v1019
        %v1864 = vunpack.c.h.b16 %v1019
        %v1865 = vunpack.c.l.b16 %v1020
        %v1866 = vunpack.c.h.b16 %v1020
        %v1867 = vunpack.c.l.b16 %v1021
        %v1868 = vunpack.c.h.b16 %v1021
        %v1869 = vunpack.c.l.b16 %v1022
        %v1870 = vunpack.c.h.b16 %v1022
        %v1871 = vunpack.c.l.b16 %v1023
        %v1872 = vunpack.c.h.b16 %v1023
        %v1873 = vunpack.c.l.b16 %v1024
        %v1874 = vunpack.c.h.b16 %v1024
        %v1875 = vunpack.c.l.b16 %v1025
        %v1876 = vunpack.c.h.b16 %v1025
        %v1877 = vunpack.c.l.b16 %v1026
        %v1878 = vunpack.c.h.b16 %v1026
        %v1879 = vunpack.c.l.b16 %v1027
        %v1880 = vunpack.c.h.b16 %v1027
        %v1881 = vunpack.c.l.b16 %v1028
        %v1882 = vunpack.c.h.b16 %v1028
        %v1883 = vunpack.c.l.b16 %v1029
        %v1884 = vunpack.c.h.b16 %v1029
        %v1885 = vunpack.c.l.b16 %v1030
        %v1886 = vunpack.c.h.b16 %v1030
        %v1887 = vunpack.c.l.b16 %v1031
        %v1888 = vunpack.c.h.b16 %v1031
        %v1889 = vunpack.c.l.b16 %v1032
        %v1890 = vunpack.c.h.b16 %v1032
        %v1891 = vunpack.c.l.b16 %v1033
        %v1892 = vunpack.c.h.b16 %v1033
        %v1893 = vunpack.c.l.b16 %v1034
        %v1894 = vunpack.c.h.b16 %v1034
        %v1895 = vunpack.c.l.b16 %v1035
        %v1896 = vunpack.c.h.b16 %v1035
        %v1897 = vunpack.c.l.b16 %v1036
        %v1898 = vunpack.c.h.b16 %v1036
        %v1899 = vunpack.c.l.b16 %v1037
        %v1900 = vunpack.c.h.b16 %v1037
        %v1901 = vunpack.c.l.b16 %v1038
        %v1902 = vunpack.c.h.b16 %v1038
        %v1903 = vunpack.c.l.b16 %v1039
        %v1904 = vunpack.c.h.b16 %v1039
        %v1905 = vunpack.c.l.b16 %v1040
        %v1906 = vunpack.c.h.b16 %v1040
        %v1907 = vunpack.c.l.b16 %v1041
        %v1908 = vunpack.c.h.b16 %v1041
        %v1909 = vunpack.c.l.b16 %v1042
        %v1910 = vunpack.c.h.b16 %v1042
        %v1911 = vunpack.c.l.b16 %v1043
        %v1912 = vunpack.c.h.b16 %v1043
        %v1913 = vunpack.c.l.b16 %v1044
        %v1914 = vunpack.c.h.b16 %v1044
        %v1915 = vunpack.c.l.b16 %v1045
        %v1916 = vunpack.c.h.b16 %v1045
        %v1917 = vunpack.c.l.b16 %v1046
        %v1918 = vunpack.c.h.b16 %v1046
        %v1919 = vunpack.c.l.b16 %v1047
        %v1920 = vunpack.c.h.b16 %v1047
        %v1921 = vunpack.c.l.b16 %v1048
        %v1922 = vunpack.c.h.b16 %v1048
        %v1923 = vunpack.c.l.b16 %v1049
        %v1924 = vunpack.c.h.b16 %v1049
        %v1925 = vunpack.c.l.b16 %v1050
        %v1926 = vunpack.c.h.b16 %v1050
        %v1927 = vunpack.c.l.b16 %v1051
        %v1928 = vunpack.c.h.b16 %v1051
        %v1929 = vunpack.c.l.b16 %v1052
        %v1930 = vunpack.c.h.b16 %v1052
        %v1931 = vunpack.c.l.b16 %v1053
        %v1932 = vunpack.c.h.b16 %v1053
        %v1933 = vunpack.c.l.b16 %v1054
        %v1934 = vunpack.c.h.b16 %v1054
        %v1935 = vunpack.c.l.b16 %v1055
        %v1936 = vunpack.c.h.b16 %v1055
        %v1937 = vunpack.c.l.b16 %v1056
        %v1938 = vunpack.c.h.b16 %v1056
        %v1939 = vunpack.c.l.b16 %v1057
        %v1940 = vunpack.c.h.b16 %v1057
        %v1941 = vunpack.c.l.b16 %v1058
        %v1942 = vunpack.c.h.b16 %v1058
        %v1943 = vunpack.c.l.b16 %v1059
        %v1944 = vunpack.c.h.b16 %v1059
        %v1945 = vunpack.c.l.b16 %v1060
        %v1946 = vunpack.c.h.b16 %v1060
        %v1947 = vunpack.c.l.b16 %v1061
        %v1948 = vunpack.c.h.b16 %v1061
        %v1949 = vunpack.c.l.b16 %v1062
        %v1950 = vunpack.c.h.b16 %v1062
        %v1951 = vunpack.c.l.b16 %v1063
        %v1952 = vunpack.c.h.b16 %v1063
        %v1953 = vunpack.c.l.b16 %v1064
        %v1954 = vunpack.c.h.b16 %v1064
        %v1955 = vunpack.c.l.b16 %v1065
        %v1956 = vunpack.c.h.b16 %v1065
        %v1957 = vunpack.c.l.b16 %v1066
        %v1958 = vunpack.c.h.b16 %v1066
        %v1959 = vunpack.c.l.b16 %v1067
        %v1960 = vunpack.c.h.b16 %v1067
        %v1961 = vunpack.c.l.b16 %v1068
        %v1962 = vunpack.c.h.b16 %v1068
        %v1963 = vunpack.c.l.b16 %v1069
        %v1964 = vunpack.c.h.b16 %v1069
        %v1965 = vunpack.c.l.b16 %v1070
        %v1966 = vunpack.c.h.b16 %v1070
        %v1967 = vunpack.c.l.b16 %v1071
        %v1968 = vunpack.c.h.b16 %v1071
        %v1969 = vunpack.c.l.b16 %v1072
        %v1970 = vunpack.c.h.b16 %v1072
        %v1971 = vunpack.c.l.b16 %v1073
        %v1972 = vunpack.c.h.b16 %v1073
        %v1973 = vunpack.c.l.b16 %v1074
        %v1974 = vunpack.c.h.b16 %v1074
        %v1975 = vunpack.c.l.b16 %v1075
        %v1976 = vunpack.c.h.b16 %v1075
        %v1977 = vunpack.c.l.b16 %v1076
        %v1978 = vunpack.c.h.b16 %v1076
        %v1979 = vunpack.c.l.b16 %v1077
        %v1980 = vunpack.c.h.b16 %v1077
        %v1981 = vunpack.c.l.b16 %v1078
        %v1982 = vunpack.c.h.b16 %v1078
        %v1983 = vunpack.c.l.b16 %v1079
        %v1984 = vunpack.c.h.b16 %v1079
        %v1985 = vunpack.c.l.b16 %v1080
        %v1986 = vunpack.c.h.b16 %v1080
        %v1987 = vunpack.c.l.b16 %v1081
        %v1988 = vunpack.c.h.b16 %v1081
        %v1989 = vunpack.c.l.b16 %v1082
        %v1990 = vunpack.c.h.b16 %v1082
        %v1991 = vunpack.c.l.b16 %v1083
        %v1992 = vunpack.c.h.b16 %v1083
        %v1993 = vunpack.c.l.b16 %v1084
        %v1994 = vunpack.c.h.b16 %v1084
        %v1995 = vunpack.c.l.b16 %v1085
        %v1996 = vunpack.c.h.b16 %v1085
        %v1997 = vunpack.c.l.b16 %v1086
        %v1998 = vunpack.c.h.b16 %v1086
        %v1999 = vunpack.c.l.b16 %v1087
        %v2000 = vunpack.c.h.b16 %v1087
        %v2001 = vunpack.c.l.b16 %v1088
        %v2002 = vunpack.c.h.b16 %v1088
        %v2003 = vunpack.c.l.b16 %v1089
        %v2004 = vunpack.c.h.b16 %v1089
        %v2005 = vunpack.c.l.b16 %v1090
        %v2006 = vunpack.c.h.b16 %v1090
        %v2007 = vunpack.c.l.b16 %v1091
        %v2008 = vunpack.c.h.b16 %v1091
        %v2009 = vunpack.c.l.b16 %v1092
        %v2010 = vunpack.c.h.b16 %v1092
        %v2011 = vunpack.c.l.b16 %v1093
        %v2012 = vunpack.c.h.b16 %v1093
        %v2013 = vunpack.c.l.b16 %v1094
        %v2014 = vunpack.c.h.b16 %v1094
        %v2015 = vunpack.c.l.b16 %v1095
        %v2016 = vunpack.c.h.b16 %v1095
        %v2017 = vunpack.c.l.b16 %v1096
        %v2018 = vunpack.c.h.b16 %v1096
        %v2019 = vunpack.c.l.b16 %v1097
        %v2020 = vunpack.c.h.b16 %v1097
        %v2021 = vunpack.c.l.b16 %v1098
        %v2022 = vunpack.c.h.b16 %v1098
        %v2023 = vunpack.c.l.b16 %v1099
        %v2024 = vunpack.c.h.b16 %v1099
        %v2025 = vunpack.c.l.b16 %v1100
        %v2026 = vunpack.c.h.b16 %v1100
        %v2027 = vunpack.c.l.b16 %v1101
        %v2028 = vunpack.c.h.b16 %v1101
        %v2029 = vunpack.c.l.b16 %v1102
        %v2030 = vunpack.c.h.b16 %v1102
        %v2031 = vunpack.c.l.b16 %v1103
        %v2032 = vunpack.c.h.b16 %v1103
        %v2033 = vunpack.c.l.b16 %v1104
        %v2034 = vunpack.c.h.b16 %v1104
        %v2035 = vunpack.c.l.b16 %v1105
        %v2036 = vunpack.c.h.b16 %v1105
        %v2037 = vunpack.c.l.b16 %v1106
        %v2038 = vunpack.c.h.b16 %v1106
        %v2039 = vunpack.c.l.b16 %v1107
        %v2040 = vunpack.c.h.b16 %v1107
        %v2041 = vunpack.c.l.b16 %v1108
        %v2042 = vunpack.c.h.b16 %v1108
        %v2043 = vunpack.c.l.b16 %v1109
        %v2044 = vunpack.c.h.b16 %v1109
        %v2045 = vunpack.c.l.b16 %v1110
        %v2046 = vunpack.c.h.b16 %v1110
        %v2047 = vunpack.c.l.b16 %v1111
        %v2048 = vunpack.c.h.b16 %v1111
        %v2049 = vunpack.c.l.b16 %v1112
        %v2050 = vunpack.c.h.b16 %v1112
        %v2051 = vunpack.c.l.b16 %v1113
        %v2052 = vunpack.c.h.b16 %v1113
        %v2053 = vunpack.c.l.b16 %v1114
        %v2054 = vunpack.c.h.b16 %v1114
        %v2055 = vunpack.c.l.b16 %v1115
        %v2056 = vunpack.c.h.b16 %v1115
        %v2057 = vunpack.c.l.b16 %v1116
        %v2058 = vunpack.c.h.b16 %v1116
        %v2059 = vunpack.c.l.b16 %v1117
        %v2060 = vunpack.c.h.b16 %v1117
        %v2061 = vunpack.c.l.b16 %v1118
        %v2062 = vunpack.c.h.b16 %v1118
        %v2063 = vunpack.c.l.b16 %v1119
        %v2064 = vunpack.c.h.b16 %v1119
        %v2065 = vunpack.c.l.b16 %v1120
        %v2066 = vunpack.c.h.b16 %v1120
        %v2067 = vunpack.c.l.b16 %v1121
        %v2068 = vunpack.c.h.b16 %v1121
        %v2069 = vunpack.c.l.b16 %v1122
        %v2070 = vunpack.c.h.b16 %v1122
        %v2071 = vunpack.c.l.b16 %v1123
        %v2072 = vunpack.c.h.b16 %v1123
        %v2073 = vunpack.c.l.b16 %v1124
        %v2074 = vunpack.c.h.b16 %v1124
        %v2075 = vunpack.c.l.b16 %v1125
        %v2076 = vunpack.c.h.b16 %v1125
        %v2077 = vunpack.c.l.b16 %v1126
        %v2078 = vunpack.c.h.b16 %v1126
        %v2079 = vunpack.c.l.b16 %v1127
        %v2080 = vunpack.c.h.b16 %v1127
        %v2081 = vunpack.c.l.b16 %v1128
        %v2082 = vunpack.c.h.b16 %v1128
        %v2083 = vunpack.c.l.b16 %v1129
        %v2084 = vunpack.c.h.b16 %v1129
        %v2085 = vunpack.c.l.b16 %v1130
        %v2086 = vunpack.c.h.b16 %v1130
        %v2087 = vunpack.c.l.b16 %v1131
        %v2088 = vunpack.c.h.b16 %v1131
        %v2089 = vunpack.c.l.b16 %v1132
        %v2090 = vunpack.c.h.b16 %v1132
        %v2091 = vunpack.c.l.b16 %v1133
        %v2092 = vunpack.c.h.b16 %v1133
        %v2093 = vunpack.c.l.b16 %v1134
        %v2094 = vunpack.c.h.b16 %v1134
        %v2095 = vunpack.c.l.b16 %v1135
        %v2096 = vunpack.c.h.b16 %v1135
        %v2097 = vunpack.c.l.b16 %v1136
        %v2098 = vunpack.c.h.b16 %v1136
        %v2099 = vunpack.c.l.b16 %v1137
        %v2100 = vunpack.c.h.b16 %v1137
        %v2101 = vunpack.c.l.b16 %v1138
        %v2102 = vunpack.c.h.b16 %v1138
        %v2103 = vunpack.c.l.b16 %v1139
        %v2104 = vunpack.c.h.b16 %v1139
        %v2105 = vunpack.c.l.b16 %v1140
        %v2106 = vunpack.c.h.b16 %v1140
        %v2107 = vunpack.c.l.b16 %v1141
        %v2108 = vunpack.c.h.b16 %v1141
        %v2109 = vunpack.c.l.b16 %v1142
        %v2110 = vunpack.c.h.b16 %v1142
        %v2111 = vunpack.c.l.b16 %v1143
        %v2112 = vunpack.c.h.b16 %v1143
        %v2113 = vunpack.c.l.b16 %v1144
        %v2114 = vunpack.c.h.b16 %v1144
        %v2115 = vunpack.c.l.b16 %v1145
        %v2116 = vunpack.c.h.b16 %v1145
        %v2117 = vunpack.c.l.b16 %v1146
        %v2118 = vunpack.c.h.b16 %v1146
        %v2119 = vunpack.c.l.b16 %v1147
        %v2120 = vunpack.c.h.b16 %v1147
        %v2121 = vunpack.c.l.b16 %v1148
        %v2122 = vunpack.c.h.b16 %v1148
        %v2123 = vunpack.c.l.b16 %v1149
        %v2124 = vunpack.c.h.b16 %v1149
        %v2125 = vunpack.c.l.b16 %v1150
        %v2126 = vunpack.c.h.b16 %v1150
        %v2127 = vunpack.c.l.b16 %v1151
        %v2128 = vunpack.c.h.b16 %v1151
        %v2129 = vunpack.c.l.b16 %v1152
        %v2130 = vunpack.c.h.b16 %v1152
        %v2131 = vunpack.c.l.b16 %v1153
        %v2132 = vunpack.c.h.b16 %v1153
        %v2133 = vunpack.c.l.b16 %v1154
        %v2134 = vunpack.c.h.b16 %v1154
        %v2135 = vunpack.c.l.b16 %v1155
        %v2136 = vunpack.c.h.b16 %v1155
        %v2137 = vunpack.c.l.b16 %v1156
        %v2138 = vunpack.c.h.b16 %v1156
        %v2139 = vpack.c.b16 %v1503, %v1499
        %v2140 = vpack.c.b16 %v1504, %v1500
        %v2141 = vpack.c.b16 %v1505, %v1501
        %v2142 = vpack.c.b16 %v1506, %v1502
        %v2143 = vpack.c.b16 %v1511, %v1507
        %v2144 = vpack.c.b16 %v1512, %v1508
        %v2145 = vpack.c.b16 %v1513, %v1509
        %v2146 = vpack.c.b16 %v1514, %v1510
        %v2147 = vpack.c.b16 %v1519, %v1515
        %v2148 = vpack.c.b16 %v1520, %v1516
        %v2149 = vpack.c.b16 %v1521, %v1517
        %v2150 = vpack.c.b16 %v1522, %v1518
        %v2151 = vpack.c.b16 %v1527, %v1523
        %v2152 = vpack.c.b16 %v1528, %v1524
        %v2153 = vpack.c.b16 %v1529, %v1525
        %v2154 = vpack.c.b16 %v1530, %v1526
        %v2155 = vpack.c.b16 %v1535, %v1531
        %v2156 = vpack.c.b16 %v1536, %v1532
        %v2157 = vpack.c.b16 %v1537, %v1533
        %v2158 = vpack.c.b16 %v1538, %v1534
        %v2159 = vpack.c.b16 %v1543, %v1539
        %v2160 = vpack.c.b16 %v1544, %v1540
        %v2161 = vpack.c.b16 %v1545, %v1541
        %v2162 = vpack.c.b16 %v1546, %v1542
        %v2163 = vpack.c.b16 %v1551, %v1547
        %v2164 = vpack.c.b16 %v1552, %v1548
        %v2165 = vpack.c.b16 %v1553, %v1549
        %v2166 = vpack.c.b16 %v1554, %v1550
        %v2167 = vpack.c.b16 %v1559, %v1555
        %v2168 = vpack.c.b16 %v1560, %v1556
        %v2169 = vpack.c.b16 %v1561, %v1557
        %v2170 = vpack.c.b16 %v1562, %v1558
        %v2171 = vpack.c.b16 %v1567, %v1563
        %v2172 = vpack.c.b16 %v1568, %v1564
        %v2173 = vpack.c.b16 %v1569, %v1565
        %v2174 = vpack.c.b16 %v1570, %v1566
        %v2175 = vpack.c.b16 %v1575, %v1571
        %v2176 = vpack.c.b16 %v1576, %v1572
        %v2177 = vpack.c.b16 %v1577, %v1573
        %v2178 = vpack.c.b16 %v1578, %v1574
        %v2179 = vpack.c.b16 %v1583, %v1579
        %v2180 = vpack.c.b16 %v1584, %v1580
        %v2181 = vpack.c.b16 %v1585, %v1581
        %v2182 = vpack.c.b16 %v1586, %v1582
        %v2183 = vpack.c.b16 %v1591, %v1587
        %v2184 = vpack.c.b16 %v1592, %v1588
        %v2185 = vpack.c.b16 %v1593, %v1589
        %v2186 = vpack.c.b16 %v1594, %v1590
        %v2187 = vpack.c.b16 %v1599, %v1595
        %v2188 = vpack.c.b16 %v1600, %v1596
        %v2189 = vpack.c.b16 %v1601, %v1597
        %v2190 = vpack.c.b16 %v1602, %v1598
        %v2191 = vpack.c.b16 %v1607, %v1603
        %v2192 = vpack.c.b16 %v1608, %v1604
        %v2193 = vpack.c.b16 %v1609, %v1605
        %v2194 = vpack.c.b16 %v1610, %v1606
        %v2195 = vpack.c.b16 %v1615, %v1611
        %v2196 = vpack.c.b16 %v1616, %v1612
        %v2197 = vpack.c.b16 %v1617, %v1613
        %v2198 = vpack.c.b16 %v1618, %v1614
        %v2199 = vpack.c.b16 %v1623, %v1619
        %v2200 = vpack.c.b16 %v1624, %v1620
        %v2201 = vpack.c.b16 %v1625, %v1621
        %v2202 = vpack.c.b16 %v1626, %v1622
        %v2203 = vpack.c.b16 %v1631, %v1627
        %v2204 = vpack.c.b16 %v1632, %v1628
        %v2205 = vpack.c.b16 %v1633, %v1629
        %v2206 = vpack.c.b16 %v1634, %v1630
        %v2207 = vpack.c.b16 %v1639, %v1635
        %v2208 = vpack.c.b16 %v1640, %v1636
        %v2209 = vpack.c.b16 %v1641, %v1637
        %v2210 = vpack.c.b16 %v1642, %v1638
        %v2211 = vpack.c.b16 %v1647, %v1643
        %v2212 = vpack.c.b16 %v1648, %v1644
        %v2213 = vpack.c.b16 %v1649, %v1645
        %v2214 = vpack.c.b16 %v1650, %v1646
        %v2215 = vpack.c.b16 %v1655, %v1651
        %v2216 = vpack.c.b16 %v1656, %v1652
        %v2217 = vpack.c.b16 %v1657, %v1653
        %v2218 = vpack.c.b16 %v1658, %v1654
        %v2219 = vpack.c.b16 %v1663, %v1659
        %v2220 = vpack.c.b16 %v1664, %v1660
        %v2221 = vpack.c.b16 %v1665, %v1661
        %v2222 = vpack.c.b16 %v1666, %v1662
        %v2223 = vpack.c.b16 %v1671, %v1667
        %v2224 = vpack.c.b16 %v1672, %v1668
        %v2225 = vpack.c.b16 %v1673, %v1669
        %v2226 = vpack.c.b16 %v1674, %v1670
        %v2227 = vpack.c.b16 %v1679, %v1675
        %v2228 = vpack.c.b16 %v1680, %v1676
        %v2229 = vpack.c.b16 %v1681, %v1677
        %v2230 = vpack.c.b16 %v1682, %v1678
        %v2231 = vpack.c.b16 %v1687, %v1683
        %v2232 = vpack.c.b16 %v1688, %v1684
        %v2233 = vpack.c.b16 %v1689, %v1685
        %v2234 = vpack.c.b16 %v1690, %v1686
        %v2235 = vpack.c.b16 %v1695, %v1691
        %v2236 = vpack.c.b16 %v1696, %v1692
        %v2237 = vpack.c.b16 %v1697, %v1693
        %v2238 = vpack.c.b16 %v1698, %v1694
        %v2239 = vpack.c.b16 %v1703, %v1699
        %v2240 = vpack.c.b16 %v1704, %v1700
        %v2241 = vpack.c.b16 %v1705, %v1701
        %v2242 = vpack.c.b16 %v1706, %v1702
        %v2243 = vpack.c.b16 %v1711, %v1707
        %v2244 = vpack.c.b16 %v1712, %v1708
        %v2245 = vpack.c.b16 %v1713, %v1709
        %v2246 = vpack.c.b16 %v1714, %v1710
        %v2247 = vpack.c.b16 %v1719, %v1715
        %v2248 = vpack.c.b16 %v1720, %v1716
        %v2249 = vpack.c.b16 %v1721, %v1717
        %v2250 = vpack.c.b16 %v1722, %v1718
        %v2251 = vpack.c.b16 %v1727, %v1723
        %v2252 = vpack.c.b16 %v1728, %v1724
        %v2253 = vpack.c.b16 %v1729, %v1725
        %v2254 = vpack.c.b16 %v1730, %v1726
        %v2255 = vpack.c.b16 %v1735, %v1731
        %v2256 = vpack.c.b16 %v1736, %v1732
        %v2257 = vpack.c.b16 %v1737, %v1733
        %v2258 = vpack.c.b16 %v1738, %v1734
        %v2259 = vpack.c.b16 %v1743, %v1739
        %v2260 = vpack.c.b16 %v1744, %v1740
        %v2261 = vpack.c.b16 %v1745, %v1741
        %v2262 = vpack.c.b16 %v1746, %v1742
        %v2263 = vpack.c.b16 %v1751, %v1747
        %v2264 = vpack.c.b16 %v1752, %v1748
        %v2265 = vpack.c.b16 %v1753, %v1749
        %v2266 = vpack.c.b16 %v1754, %v1750
        %v2267 = vpack.c.b16 %v1759, %v1755
        %v2268 = vpack.c.b16 %v1760, %v1756
        %v2269 = vpack.c.b16 %v1761, %v1757
        %v2270 = vpack.c.b16 %v1762, %v1758
        %v2271 = vpack.c.b16 %v1767, %v1763
        %v2272 = vpack.c.b16 %v1768, %v1764
        %v2273 = vpack.c.b16 %v1769, %v1765
        %v2274 = vpack.c.b16 %v1770, %v1766
        %v2275 = vpack.c.b16 %v1775, %v1771
        %v2276 = vpack.c.b16 %v1776, %v1772
        %v2277 = vpack.c.b16 %v1777, %v1773
        %v2278 = vpack.c.b16 %v1778, %v1774
        %v2279 = vpack.c.b16 %v1783, %v1779
        %v2280 = vpack.c.b16 %v1784, %v1780
        %v2281 = vpack.c.b16 %v1785, %v1781
        %v2282 = vpack.c.b16 %v1786, %v1782
        %v2283 = vpack.c.b16 %v1791, %v1787
        %v2284 = vpack.c.b16 %v1792, %v1788
        %v2285 = vpack.c.b16 %v1793, %v1789
        %v2286 = vpack.c.b16 %v1794, %v1790
        %v2287 = vpack.c.b16 %v1799, %v1795
        %v2288 = vpack.c.b16 %v1800, %v1796
        %v2289 = vpack.c.b16 %v1801, %v1797
        %v2290 = vpack.c.b16 %v1802, %v1798
        %v2291 = vpack.c.b16 %v1807, %v1803
        %v2292 = vpack.c.b16 %v1808, %v1804
        %v2293 = vpack.c.b16 %v1809, %v1805
        %v2294 = vpack.c.b16 %v1810, %v1806
        %v2295 = vpack.c.b16 %v1815, %v1811
        %v2296 = vpack.c.b16 %v1816, %v1812
        %v2297 = vpack.c.b16 %v1817, %v1813
        %v2298 = vpack.c.b16 %v1818, %v1814
        %v2299 = vpack.c.b16 %v1823, %v1819
        %v2300 = vpack.c.b16 %v1824, %v1820
        %v2301 = vpack.c.b16 %v1825, %v1821
        %v2302 = vpack.c.b16 %v1826, %v1822
        %v2303 = vpack.c.b16 %v1831, %v1827
        %v2304 = vpack.c.b16 %v1832, %v1828
        %v2305 = vpack.c.b16 %v1833, %v1829
        %v2306 = vpack.c.b16 %v1834, %v1830
        %v2307 = vpack.c.b16 %v1839, %v1835
        %v2308 = vpack.c.b16 %v1840, %v1836
        %v2309 = vpack.c.b16 %v1841, %v1837
        %v2310 = vpack.c.b16 %v1842, %v1838
        %v2311 = vpack.c.b16 %v1847, %v1843
        %v2312 = vpack.c.b16 %v1848, %v1844
        %v2313 = vpack.c.b16 %v1849, %v1845
        %v2314 = vpack.c.b16 %v1850, %v1846
        %v2315 = vpack.c.b16 %v1855, %v1851
        %v2316 = vpack.c.b16 %v1856, %v1852
        %v2317 = vpack.c.b16 %v1857, %v1853
        %v2318 = vpack.c.b16 %v1858, %v1854
        %v2319 = vpack.c.b16 %v1863, %v1859
        %v2320 = vpack.c.b16 %v1864, %v1860
        %v2321 = vpack.c.b16 %v1865, %v1861
        %v2322 = vpack.c.b16 %v1866, %v1862
        %v2323 = vpack.c.b16 %v1871, %v1867
        %v2324 = vpack.c.b16 %v1872, %v1868
        %v2325 = vpack.c.b16 %v1873, %v1869
        %v2326 = vpack.c.b16 %v1874, %v1870
        %v2327 = vpack.c.b16 %v1879, %v1875
        %v2328 = vpack.c.b16 %v1880, %v1876
        %v2329 = vpack.c.b16 %v1881, %v1877
        %v2330 = vpack.c.b16 %v1882, %v1878
        %v2331 = vpack.c.b16 %v1887, %v1883
        %v2332 = vpack.c.b16 %v1888, %v1884
        %v2333 = vpack.c.b16 %v1889, %v1885
        %v2334 = vpack.c.b16 %v1890, %v1886
        %v2335 = vpack.c.b16 %v1895, %v1891
        %v2336 = vpack.c.b16 %v1896, %v1892
        %v2337 = vpack.c.b16 %v1897, %v1893
        %v2338 = vpack.c.b16 %v1898, %v1894
        %v2339 = vpack.c.b16 %v1903, %v1899
        %v2340 = vpack.c.b16 %v1904, %v1900
        %v2341 = vpack.c.b16 %v1905, %v1901
        %v2342 = vpack.c.b16 %v1906, %v1902
        %v2343 = vpack.c.b16 %v1911, %v1907
        %v2344 = vpack.c.b16 %v1912, %v1908
        %v2345 = vpack.c.b16 %v1913, %v1909
        %v2346 = vpack.c.b16 %v1914, %v1910
        %v2347 = vpack.c.b16 %v1919, %v1915
        %v2348 = vpack.c.b16 %v1920, %v1916
        %v2349 = vpack.c.b16 %v1921, %v1917
        %v2350 = vpack.c.b16 %v1922, %v1918
        %v2351 = vpack.c.b16 %v1927, %v1923
        %v2352 = vpack.c.b16 %v1928, %v1924
        %v2353 = vpack.c.b16 %v1929, %v1925
        %v2354 = vpack.c.b16 %v1930, %v1926
        %v2355 = vpack.c.b16 %v1935, %v1931
        %v2356 = vpack.c.b16 %v1936, %v1932
        %v2357 = vpack.c.b16 %v1937, %v1933
        %v2358 = vpack.c.b16 %v1938, %v1934
        %v2359 = vpack.c.b16 %v1943, %v1939
        %v2360 = vpack.c.b16 %v1944, %v1940
        %v2361 = vpack.c.b16 %v1945, %v1941
        %v2362 = vpack.c.b16 %v1946, %v1942
        %v2363 = vpack.c.b16 %v1951, %v1947
        %v2364 = vpack.c.b16 %v1952, %v1948
        %v2365 = vpack.c.b16 %v1953, %v1949
        %v2366 = vpack.c.b16 %v1954, %v1950
        %v2367 = vpack.c.b16 %v1959, %v1955
        %v2368 = vpack.c.b16 %v1960, %v1956
        %v2369 = vpack.c.b16 %v1961, %v1957
        %v2370 = vpack.c.b16 %v1962, %v1958
        %v2371 = vpack.c.b16 %v1967, %v1963
        %v2372 = vpack.c.b16 %v1968, %v1964
        %v2373 = vpack.c.b16 %v1969, %v1965
        %v2374 = vpack.c.b16 %v1970, %v1966
        %v2375 = vpack.c.b16 %v1975, %v1971
        %v2376 = vpack.c.b16 %v1976, %v1972
        %v2377 = vpack.c.b16 %v1977, %v1973
        %v2378 = vpack.c.b16 %v1978, %v1974
        %v2379 = vpack.c.b16 %v1983, %v1979
        %v2380 = vpack.c.b16 %v1984, %v1980
        %v2381 = vpack.c.b16 %v1985, %v1981
        %v2382 = vpack.c.b16 %v1986, %v1982
        %v2383 = vpack.c.b16 %v1991, %v1987
        %v2384 = vpack.c.b16 %v1992, %v1988
        %v2385 = vpack.c.b16 %v1993, %v1989
        %v2386 = vpack.c.b16 %v1994, %v1990
        %v2387 = vpack.c.b16 %v1999, %v1995
        %v2388 = vpack.c.b16 %v2000, %v1996
        %v2389 = vpack.c.b16 %v2001, %v1997
        %v2390 = vpack.c.b16 %v2002, %v1998
        %v2391 = vpack.c.b16 %v2007, %v2003
        %v2392 = vpack.c.b16 %v2008, %v2004
        %v2393 = vpack.c.b16 %v2009, %v2005
        %v2394 = vpack.c.b16 %v2010, %v2006
        %v2395 = vpack.c.b16 %v2015, %v2011
        %v2396 = vpack.c.b16 %v2016, %v2012
        %v2397 = vpack.c.b16 %v2017, %v2013
        %v2398 = vpack.c.b16 %v2018, %v2014
        %v2399 = vpack.c.b16 %v2023, %v2019
        %v2400 = vpack.c.b16 %v2024, %v2020
        %v2401 = vpack.c.b16 %v2025, %v2021
        %v2402 = vpack.c.b16 %v2026, %v2022
        %v2403 = vpack.c.b16 %v2031, %v2027
        %v2404 = vpack.c.b16 %v2032, %v2028
        %v2405 = vpack.c.b16 %v2033, %v2029
        %v2406 = vpack.c.b16 %v2034, %v2030
        %v2407 = vpack.c.b16 %v2039, %v2035
        %v2408 = vpack.c.b16 %v2040, %v2036
        %v2409 = vpack.c.b16 %v2041, %v2037
        %v2410 = vpack.c.b16 %v2042, %v2038
        %v2411 = vpack.c.b16 %v2047, %v2043
        %v2412 = vpack.c.b16 %v2048, %v2044
        %v2413 = vpack.c.b16 %v2049, %v2045
        %v2414 = vpack.c.b16 %v2050, %v2046
        %v2415 = vpack.c.b16 %v2055, %v2051
        %v2416 = vpack.c.b16 %v2056, %v2052
        %v2417 = vpack.c.b16 %v2057, %v2053
        %v2418 = vpack.c.b16 %v2058, %v2054
        %v2419 = vpack.c.b16 %v2063, %v2059
        %v2420 = vpack.c.b16 %v2064, %v2060
        %v2421 = vpack.c.b16 %v2065, %v2061
        %v2422 = vpack.c.b16 %v2066, %v2062
        %v2423 = vpack.c.b16 %v2071, %v2067
        %v2424 = vpack.c.b16 %v2072, %v2068
        %v2425 = vpack.c.b16 %v2073, %v2069
        %v2426 = vpack.c.b16 %v2074, %v2070
        %v2427 = vpack.c.b16 %v2079, %v2075
        %v2428 = vpack.c.b16 %v2080, %v2076
        %v2429 = vpack.c.b16 %v2081, %v2077
        %v2430 = vpack.c.b16 %v2082, %v2078
        %v2431 = vpack.c.b16 %v2087, %v2083
        %v2432 = vpack.c.b16 %v2088, %v2084
        %v2433 = vpack.c.b16 %v2089, %v2085
        %v2434 = vpack.c.b16 %v2090, %v2086
        %v2435 = vpack.c.b16 %v2095, %v2091
        %v2436 = vpack.c.b16 %v2096, %v2092
        %v2437 = vpack.c.b16 %v2097, %v2093
        %v2438 = vpack.c.b16 %v2098, %v2094
        %v2439 = vpack.c.b16 %v2103, %v2099
        %v2440 = vpack.c.b16 %v2104, %v2100
        %v2441 = vpack.c.b16 %v2105, %v2101
        %v2442 = vpack.c.b16 %v2106, %v2102
        %v2443 = vpack.c.b16 %v2111, %v2107
        %v2444 = vpack.c.b16 %v2112, %v2108
        %v2445 = vpack.c.b16 %v2113, %v2109
        %v2446 = vpack.c.b16 %v2114, %v2110
        %v2447 = vpack.c.b16 %v2119, %v2115
        %v2448 = vpack.c.b16 %v2120, %v2116
        %v2449 = vpack.c.b16 %v2121, %v2117
        %v2450 = vpack.c.b16 %v2122, %v2118
        %v2451 = vpack.c.b16 %v2127, %v2123
        %v2452 = vpack.c.b16 %v2128, %v2124
        %v2453 = vpack.c.b16 %v2129, %v2125
        %v2454 = vpack.c.b16 %v2130, %v2126
        %v2455 = vpack.c.b16 %v2135, %v2131
        %v2456 = vpack.c.b16 %v2136, %v2132
        %v2457 = vpack.c.b16 %v2137, %v2133
        %v2458 = vpack.c.b16 %v2138, %v2134
        %2779 = vmatprep.subr.bf16.mxu0 %v2140
        %2780 = vmatpush1.bf16.msra.mxu0 %v2139
        %2781 = vmatprep.subr.bf16.mxu0 %v2144
        %2782 = vmatpush1.bf16.msra.mxu0 %v2143
        %2783 = vmatprep.subr.bf16.mxu0 %v2148
        %2784 = vmatpush1.bf16.msra.mxu0 %v2147
        %2785 = vmatprep.subr.bf16.mxu0 %v2152
        %2786 = vmatpush1.bf16.msra.mxu0 %v2151
        %2787 = vmatprep.subr.bf16.mxu0 %v2156
        %2788 = vmatpush1.bf16.msra.mxu0 %v2155
        %2789 = vmatprep.subr.bf16.mxu0 %v2160
        %2790 = vmatpush1.bf16.msra.mxu0 %v2159
        %2791 = vmatprep.subr.bf16.mxu0 %v2164
        %2792 = vmatpush1.bf16.msra.mxu0 %v2163
        %2793 = vmatprep.subr.bf16.mxu0 %v2168
        %2794 = vmatpush1.bf16.msra.mxu0 %v2167
        %2795 = vmatprep.subr.bf16.mxu0 %v2172
        %2796 = vmatpush1.bf16.msra.mxu0 %v2171
        %2797 = vmatprep.subr.bf16.mxu0 %v2176
        %2798 = vmatpush1.bf16.msra.mxu0 %v2175
        %2799 = vmatprep.subr.bf16.mxu0 %v2180
        %2800 = vmatpush1.bf16.msra.mxu0 %v2179
        %2801 = vmatprep.subr.bf16.mxu0 %v2184
        %2802 = vmatpush1.bf16.msra.mxu0 %v2183
        %2803 = vmatprep.subr.bf16.mxu0 %v2188
        %2804 = vmatpush1.bf16.msra.mxu0 %v2187
        %2805 = vmatprep.subr.bf16.mxu0 %v2192
        %2806 = vmatpush1.bf16.msra.mxu0 %v2191
        %2807 = vmatprep.subr.bf16.mxu0 %v2196
        %2808 = vmatpush1.bf16.msra.mxu0 %v2195
        %2809 = vmatprep.subr.bf16.mxu0 %v2200
        %2810 = vmatpush1.bf16.msra.mxu0 %v2199
        %2811 = vmatprep.mubr.bf16.mxu0 %v828
        %2812 = vmatmul.mubr.bf16.gmra.mrb[0].mxu0 %v827
        %v2813 = vpop.f32.mrb[0].mxu0
        %v2814 = vadd.f32 %v1162, %v2813
        %v2815 = vpop.f32.mrb[0].mxu0
        %v2816 = vadd.f32 %v1166, %v2815
        %v2817 = vpop.f32.mrb[0].mxu0
        %v2818 = vpop.f32.mrb[0].mxu0
        %2819 = vdwg.mxu0
        %2820 = vmatprep.subr.bf16.mxu0 %v2204
        %2821 = vmatpush1.bf16.msra.mxu0 %v2203
        %2822 = vmatprep.subr.bf16.mxu0 %v2208
        %2823 = vmatpush1.bf16.msra.mxu0 %v2207
        %2824 = vmatprep.subr.bf16.mxu0 %v2212
        %2825 = vmatpush1.bf16.msra.mxu0 %v2211
        %2826 = vmatprep.subr.bf16.mxu0 %v2216
        %2827 = vmatpush1.bf16.msra.mxu0 %v2215
        %2828 = vmatprep.subr.bf16.mxu0 %v2220
        %2829 = vmatpush1.bf16.msra.mxu0 %v2219
        %2830 = vmatprep.subr.bf16.mxu0 %v2224
        %2831 = vmatpush1.bf16.msra.mxu0 %v2223
        %2832 = vmatprep.subr.bf16.mxu0 %v2228
        %2833 = vmatpush1.bf16.msra.mxu0 %v2227
        %2834 = vmatprep.subr.bf16.mxu0 %v2232
        %2835 = vmatpush1.bf16.msra.mxu0 %v2231
        %2836 = vmatprep.subr.bf16.mxu0 %v2236
        %2837 = vmatpush1.bf16.msra.mxu0 %v2235
        %2838 = vmatprep.subr.bf16.mxu0 %v2240
        %2839 = vmatpush1.bf16.msra.mxu0 %v2239
        %2840 = vmatprep.subr.bf16.mxu0 %v2244
        %2841 = vmatpush1.bf16.msra.mxu0 %v2243
        %2842 = vmatprep.subr.bf16.mxu0 %v2248
        %2843 = vmatpush1.bf16.msra.mxu0 %v2247
        %2844 = vmatprep.subr.bf16.mxu0 %v2252
        %2845 = vmatpush1.bf16.msra.mxu0 %v2251
        %2846 = vmatprep.subr.bf16.mxu0 %v2256
        %2847 = vmatpush1.bf16.msra.mxu0 %v2255
        %2848 = vmatprep.subr.bf16.mxu0 %v2260
        %2849 = vmatpush1.bf16.msra.mxu0 %v2259
        %2850 = vmatprep.subr.bf16.mxu0 %v2264
        %2851 = vmatpush1.bf16.msra.mxu0 %v2263
        %2852 = vmatprep.mubr.bf16.mxu0 %v830
        %2853 = vmatmul.mubr.bf16.gmra.mrb[0].mxu0 %v829
        %v2854 = vpop.f32.mrb[0].mxu0
        %v2855 = vadd.f32 %v2814, %v2854
        %v2856 = vpop.f32.mrb[0].mxu0
        %v2857 = vadd.f32 %v2816, %v2856
        %v2858 = vpop.f32.mrb[0].mxu0
        %v2859 = vpop.f32.mrb[0].mxu0
        %2860 = vdwg.mxu0
        %2861 = vmatprep.subr.bf16.mxu0 %v2268
        %2862 = vmatpush1.bf16.msra.mxu0 %v2267
        %2863 = vmatprep.subr.bf16.mxu0 %v2272
        %2864 = vmatpush1.bf16.msra.mxu0 %v2271
        %2865 = vmatprep.subr.bf16.mxu0 %v2276
        %2866 = vmatpush1.bf16.msra.mxu0 %v2275
        %2867 = vmatprep.subr.bf16.mxu0 %v2280
        %2868 = vmatpush1.bf16.msra.mxu0 %v2279
        %2869 = vmatprep.subr.bf16.mxu0 %v2284
        %2870 = vmatpush1.bf16.msra.mxu0 %v2283
        %2871 = vmatprep.subr.bf16.mxu0 %v2288
        %2872 = vmatpush1.bf16.msra.mxu0 %v2287
        %2873 = vmatprep.subr.bf16.mxu0 %v2292
        %2874 = vmatpush1.bf16.msra.mxu0 %v2291
        %2875 = vmatprep.subr.bf16.mxu0 %v2296
        %2876 = vmatpush1.bf16.msra.mxu0 %v2295
        %2877 = vmatprep.subr.bf16.mxu0 %v2300
        %2878 = vmatpush1.bf16.msra.mxu0 %v2299
        %2879 = vmatprep.subr.bf16.mxu0 %v2304
        %2880 = vmatpush1.bf16.msra.mxu0 %v2303
        %2881 = vmatprep.subr.bf16.mxu0 %v2308
        %2882 = vmatpush1.bf16.msra.mxu0 %v2307
        %2883 = vmatprep.subr.bf16.mxu0 %v2312
        %2884 = vmatpush1.bf16.msra.mxu0 %v2311
        %2885 = vmatprep.subr.bf16.mxu0 %v2316
        %2886 = vmatpush1.bf16.msra.mxu0 %v2315
        %2887 = vmatprep.subr.bf16.mxu0 %v2320
        %2888 = vmatpush1.bf16.msra.mxu0 %v2319
        %2889 = vmatprep.subr.bf16.mxu0 %v2324
        %2890 = vmatpush1.bf16.msra.mxu0 %v2323
        %2891 = vmatprep.subr.bf16.mxu0 %v2328
        %2892 = vmatpush1.bf16.msra.mxu0 %v2327
        %2893 = vmatprep.mubr.bf16.mxu0 %v832
        %2894 = vmatmul.mubr.bf16.gmra.mrb[0].mxu0 %v831
        %v2895 = vpop.f32.mrb[0].mxu0
        %v2896 = vadd.f32 %v2855, %v2895
        %v2897 = vpop.f32.mrb[0].mxu0
        %v2898 = vadd.f32 %v2857, %v2897
        %v2899 = vpop.f32.mrb[0].mxu0
        %v2900 = vpop.f32.mrb[0].mxu0
        %2901 = vdwg.mxu0
        %2902 = vmatprep.subr.bf16.mxu0 %v2332
        %2903 = vmatpush1.bf16.msra.mxu0 %v2331
        %2904 = vmatprep.subr.bf16.mxu0 %v2336
        %2905 = vmatpush1.bf16.msra.mxu0 %v2335
        %2906 = vmatprep.subr.bf16.mxu0 %v2340
        %2907 = vmatpush1.bf16.msra.mxu0 %v2339
        %2908 = vmatprep.subr.bf16.mxu0 %v2344
        %2909 = vmatpush1.bf16.msra.mxu0 %v2343
        %2910 = vmatprep.subr.bf16.mxu0 %v2348
        %2911 = vmatpush1.bf16.msra.mxu0 %v2347
        %2912 = vmatprep.subr.bf16.mxu0 %v2352
        %2913 = vmatpush1.bf16.msra.mxu0 %v2351
        %2914 = vmatprep.subr.bf16.mxu0 %v2356
        %2915 = vmatpush1.bf16.msra.mxu0 %v2355
        %2916 = vmatprep.subr.bf16.mxu0 %v2360
        %2917 = vmatpush1.bf16.msra.mxu0 %v2359
        %2918 = vmatprep.subr.bf16.mxu0 %v2364
        %2919 = vmatpush1.bf16.msra.mxu0 %v2363
        %2920 = vmatprep.subr.bf16.mxu0 %v2368
        %2921 = vmatpush1.bf16.msra.mxu0 %v2367
        %2922 = vmatprep.subr.bf16.mxu0 %v2372
        %2923 = vmatpush1.bf16.msra.mxu0 %v2371
        %2924 = vmatprep.subr.bf16.mxu0 %v2376
        %2925 = vmatpush1.bf16.msra.mxu0 %v2375
        %2926 = vmatprep.subr.bf16.mxu0 %v2380
        %2927 = vmatpush1.bf16.msra.mxu0 %v2379
        %2928 = vmatprep.subr.bf16.mxu0 %v2384
        %2929 = vmatpush1.bf16.msra.mxu0 %v2383
        %2930 = vmatprep.subr.bf16.mxu0 %v2388
        %2931 = vmatpush1.bf16.msra.mxu0 %v2387
        %2932 = vmatprep.subr.bf16.mxu0 %v2392
        %2933 = vmatpush1.bf16.msra.mxu0 %v2391
        %2934 = vmatprep.mubr.bf16.mxu0 %v834
        %2935 = vmatmul.mubr.bf16.gmra.mrb[0].mxu0 %v833
        %v2936 = vpop.f32.mrb[0].mxu0
        %v2937 = vadd.f32 %v2896, %v2936
        %v2938 = vpop.f32.mrb[0].mxu0
        %v2939 = vadd.f32 %v2898, %v2938
        %v2940 = vpop.f32.mrb[0].mxu0
        %v2941 = vpop.f32.mrb[0].mxu0
        %2942 = vdwg.mxu0
        %2943 = vmatprep.subr.bf16.mxu0 %v2396
        %2944 = vmatpush1.bf16.msra.mxu0 %v2395
        %2945 = vmatprep.subr.bf16.mxu0 %v2400
        %2946 = vmatpush1.bf16.msra.mxu0 %v2399
        %2947 = vmatprep.subr.bf16.mxu0 %v2404
        %2948 = vmatpush1.bf16.msra.mxu0 %v2403
        %2949 = vmatprep.subr.bf16.mxu0 %v2408
        %2950 = vmatpush1.bf16.msra.mxu0 %v2407
        %2951 = vmatprep.subr.bf16.mxu0 %v2412
        %2952 = vmatpush1.bf16.msra.mxu0 %v2411
        %2953 = vmatprep.subr.bf16.mxu0 %v2416
        %2954 = vmatpush1.bf16.msra.mxu0 %v2415
        %2955 = vmatprep.subr.bf16.mxu0 %v2420
        %2956 = vmatpush1.bf16.msra.mxu0 %v2419
        %2957 = vmatprep.subr.bf16.mxu0 %v2424
        %2958 = vmatpush1.bf16.msra.mxu0 %v2423
        %2959 = vmatprep.subr.bf16.mxu0 %v2428
        %2960 = vmatpush1.bf16.msra.mxu0 %v2427
        %2961 = vmatprep.subr.bf16.mxu0 %v2432
        %2962 = vmatpush1.bf16.msra.mxu0 %v2431
        %2963 = vmatprep.subr.bf16.mxu0 %v2436
        %2964 = vmatpush1.bf16.msra.mxu0 %v2435
        %2965 = vmatprep.subr.bf16.mxu0 %v2440
        %2966 = vmatpush1.bf16.msra.mxu0 %v2439
        %2967 = vmatprep.subr.bf16.mxu0 %v2444
        %2968 = vmatpush1.bf16.msra.mxu0 %v2443
        %2969 = vmatprep.subr.bf16.mxu0 %v2448
        %2970 = vmatpush1.bf16.msra.mxu0 %v2447
        %2971 = vmatprep.subr.bf16.mxu0 %v2452
        %2972 = vmatpush1.bf16.msra.mxu0 %v2451
        %2973 = vmatprep.subr.bf16.mxu0 %v2456
        %2974 = vmatpush1.bf16.msra.mxu0 %v2455
        %2975 = vmatprep.mubr.bf16.mxu0 %v836
        %2976 = vmatmul.mubr.bf16.gmra.mrb[0].mxu0 %v835
        %v2977 = vpop.f32.mrb[0].mxu0
        %v2978 = vadd.f32 %v2937, %v2977
        %v2979 = vpop.f32.mrb[0].mxu0
        %v2980 = vadd.f32 %v2939, %v2979
        %v2981 = vpop.f32.mrb[0].mxu0
        %v2982 = vpop.f32.mrb[0].mxu0
        %2983 = vdwg.mxu0
        %2984 = vmatprep.subr.bf16.mxu0 %v2142
        %2985 = vmatpush1.bf16.msra.mxu0 %v2141
        %2986 = vmatprep.subr.bf16.mxu0 %v2146
        %2987 = vmatpush1.bf16.msra.mxu0 %v2145
        %2988 = vmatprep.subr.bf16.mxu0 %v2150
        %2989 = vmatpush1.bf16.msra.mxu0 %v2149
        %2990 = vmatprep.subr.bf16.mxu0 %v2154
        %2991 = vmatpush1.bf16.msra.mxu0 %v2153
        %2992 = vmatprep.subr.bf16.mxu0 %v2158
        %2993 = vmatpush1.bf16.msra.mxu0 %v2157
        %2994 = vmatprep.subr.bf16.mxu0 %v2162
        %2995 = vmatpush1.bf16.msra.mxu0 %v2161
        %2996 = vmatprep.subr.bf16.mxu0 %v2166
        %2997 = vmatpush1.bf16.msra.mxu0 %v2165
        %2998 = vmatprep.subr.bf16.mxu0 %v2170
        %2999 = vmatpush1.bf16.msra.mxu0 %v2169
        %3000 = vmatprep.subr.bf16.mxu0 %v2174
        %3001 = vmatpush1.bf16.msra.mxu0 %v2173
        %3002 = vmatprep.subr.bf16.mxu0 %v2178
        %3003 = vmatpush1.bf16.msra.mxu0 %v2177
        %3004 = vmatprep.subr.bf16.mxu0 %v2182
        %3005 = vmatpush1.bf16.msra.mxu0 %v2181
        %3006 = vmatprep.subr.bf16.mxu0 %v2186
        %3007 = vmatpush1.bf16.msra.mxu0 %v2185
        %3008 = vmatprep.subr.bf16.mxu0 %v2190
        %3009 = vmatpush1.bf16.msra.mxu0 %v2189
        %3010 = vmatprep.subr.bf16.mxu0 %v2194
        %3011 = vmatpush1.bf16.msra.mxu0 %v2193
        %3012 = vmatprep.subr.bf16.mxu0 %v2198
        %3013 = vmatpush1.bf16.msra.mxu0 %v2197
        %3014 = vmatprep.subr.bf16.mxu0 %v2202
        %3015 = vmatpush1.bf16.msra.mxu0 %v2201
        %3016 = vmatprep.mubr.bf16.mxu0 %v828
        %3017 = vmatmul.mubr.bf16.gmra.mrb[0].mxu0 %v827
        %v3018 = vpop.f32.mrb[0].mxu0
        %v3019 = vadd.f32 %v1170, %v3018
        %v3020 = vpop.f32.mrb[0].mxu0
        %v3021 = vadd.f32 %v1174, %v3020
        %v3022 = vpop.f32.mrb[0].mxu0
        %v3023 = vpop.f32.mrb[0].mxu0
        %3024 = vdwg.mxu0
        %3025 = vmatprep.subr.bf16.mxu0 %v2206
        %3026 = vmatpush1.bf16.msra.mxu0 %v2205
        %3027 = vmatprep.subr.bf16.mxu0 %v2210
        %3028 = vmatpush1.bf16.msra.mxu0 %v2209
        %3029 = vmatprep.subr.bf16.mxu0 %v2214
        %3030 = vmatpush1.bf16.msra.mxu0 %v2213
        %3031 = vmatprep.subr.bf16.mxu0 %v2218
        %3032 = vmatpush1.bf16.msra.mxu0 %v2217
        %3033 = vmatprep.subr.bf16.mxu0 %v2222
        %3034 = vmatpush1.bf16.msra.mxu0 %v2221
        %3035 = vmatprep.subr.bf16.mxu0 %v2226
        %3036 = vmatpush1.bf16.msra.mxu0 %v2225
        %3037 = vmatprep.subr.bf16.mxu0 %v2230
        %3038 = vmatpush1.bf16.msra.mxu0 %v2229
        %3039 = vmatprep.subr.bf16.mxu0 %v2234
        %3040 = vmatpush1.bf16.msra.mxu0 %v2233
        %3041 = vmatprep.subr.bf16.mxu0 %v2238
        %3042 = vmatpush1.bf16.msra.mxu0 %v2237
        %3043 = vmatprep.subr.bf16.mxu0 %v2242
        %3044 = vmatpush1.bf16.msra.mxu0 %v2241
        %3045 = vmatprep.subr.bf16.mxu0 %v2246
        %3046 = vmatpush1.bf16.msra.mxu0 %v2245
        %3047 = vmatprep.subr.bf16.mxu0 %v2250
        %3048 = vmatpush1.bf16.msra.mxu0 %v2249
        %3049 = vmatprep.subr.bf16.mxu0 %v2254
        %3050 = vmatpush1.bf16.msra.mxu0 %v2253
        %3051 = vmatprep.subr.bf16.mxu0 %v2258
        %3052 = vmatpush1.bf16.msra.mxu0 %v2257
        %3053 = vmatprep.subr.bf16.mxu0 %v2262
        %3054 = vmatpush1.bf16.msra.mxu0 %v2261
        %3055 = vmatprep.subr.bf16.mxu0 %v2266
        %3056 = vmatpush1.bf16.msra.mxu0 %v2265
        %3057 = vmatprep.mubr.bf16.mxu0 %v830
        %3058 = vmatmul.mubr.bf16.gmra.mrb[0].mxu0 %v829
        %v3059 = vpop.f32.mrb[0].mxu0
        %v3060 = vadd.f32 %v3019, %v3059
        %v3061 = vpop.f32.mrb[0].mxu0
        %v3062 = vadd.f32 %v3021, %v3061
        %v3063 = vpop.f32.mrb[0].mxu0
        %v3064 = vpop.f32.mrb[0].mxu0
        %3065 = vdwg.mxu0
        %3066 = vmatprep.subr.bf16.mxu0 %v2270
        %3067 = vmatpush1.bf16.msra.mxu0 %v2269
        %3068 = vmatprep.subr.bf16.mxu0 %v2274
        %3069 = vmatpush1.bf16.msra.mxu0 %v2273
        %3070 = vmatprep.subr.bf16.mxu0 %v2278
        %3071 = vmatpush1.bf16.msra.mxu0 %v2277
        %3072 = vmatprep.subr.bf16.mxu0 %v2282
        %3073 = vmatpush1.bf16.msra.mxu0 %v2281
        %3074 = vmatprep.subr.bf16.mxu0 %v2286
        %3075 = vmatpush1.bf16.msra.mxu0 %v2285
        %3076 = vmatprep.subr.bf16.mxu0 %v2290
        %3077 = vmatpush1.bf16.msra.mxu0 %v2289
        %3078 = vmatprep.subr.bf16.mxu0 %v2294
        %3079 = vmatpush1.bf16.msra.mxu0 %v2293
        %3080 = vmatprep.subr.bf16.mxu0 %v2298
        %3081 = vmatpush1.bf16.msra.mxu0 %v2297
        %3082 = vmatprep.subr.bf16.mxu0 %v2302
        %3083 = vmatpush1.bf16.msra.mxu0 %v2301
        %3084 = vmatprep.subr.bf16.mxu0 %v2306
        %3085 = vmatpush1.bf16.msra.mxu0 %v2305
        %3086 = vmatprep.subr.bf16.mxu0 %v2310
        %3087 = vmatpush1.bf16.msra.mxu0 %v2309
        %3088 = vmatprep.subr.bf16.mxu0 %v2314
        %3089 = vmatpush1.bf16.msra.mxu0 %v2313
        %3090 = vmatprep.subr.bf16.mxu0 %v2318
        %3091 = vmatpush1.bf16.msra.mxu0 %v2317
        %3092 = vmatprep.subr.bf16.mxu0 %v2322
        %3093 = vmatpush1.bf16.msra.mxu0 %v2321
        %3094 = vmatprep.subr.bf16.mxu0 %v2326
        %3095 = vmatpush1.bf16.msra.mxu0 %v2325
        %3096 = vmatprep.subr.bf16.mxu0 %v2330
        %3097 = vmatpush1.bf16.msra.mxu0 %v2329
        %3098 = vmatprep.mubr.bf16.mxu0 %v832
        %3099 = vmatmul.mubr.bf16.gmra.mrb[0].mxu0 %v831
        %v3100 = vpop.f32.mrb[0].mxu0
        %v3101 = vadd.f32 %v3060, %v3100
        %v3102 = vpop.f32.mrb[0].mxu0
        %v3103 = vadd.f32 %v3062, %v3102
        %v3104 = vpop.f32.mrb[0].mxu0
        %v3105 = vpop.f32.mrb[0].mxu0
        %3106 = vdwg.mxu0
        %3107 = vmatprep.subr.bf16.mxu0 %v2334
        %3108 = vmatpush1.bf16.msra.mxu0 %v2333
        %3109 = vmatprep.subr.bf16.mxu0 %v2338
        %3110 = vmatpush1.bf16.msra.mxu0 %v2337
        %3111 = vmatprep.subr.bf16.mxu0 %v2342
        %3112 = vmatpush1.bf16.msra.mxu0 %v2341
        %3113 = vmatprep.subr.bf16.mxu0 %v2346
        %3114 = vmatpush1.bf16.msra.mxu0 %v2345
        %3115 = vmatprep.subr.bf16.mxu0 %v2350
        %3116 = vmatpush1.bf16.msra.mxu0 %v2349
        %3117 = vmatprep.subr.bf16.mxu0 %v2354
        %3118 = vmatpush1.bf16.msra.mxu0 %v2353
        %3119 = vmatprep.subr.bf16.mxu0 %v2358
        %3120 = vmatpush1.bf16.msra.mxu0 %v2357
        %3121 = vmatprep.subr.bf16.mxu0 %v2362
        %3122 = vmatpush1.bf16.msra.mxu0 %v2361
        %3123 = vmatprep.subr.bf16.mxu0 %v2366
        %3124 = vmatpush1.bf16.msra.mxu0 %v2365
        %3125 = vmatprep.subr.bf16.mxu0 %v2370
        %3126 = vmatpush1.bf16.msra.mxu0 %v2369
        %3127 = vmatprep.subr.bf16.mxu0 %v2374
        %3128 = vmatpush1.bf16.msra.mxu0 %v2373
        %3129 = vmatprep.subr.bf16.mxu0 %v2378
        %3130 = vmatpush1.bf16.msra.mxu0 %v2377
        %3131 = vmatprep.subr.bf16.mxu0 %v2382
        %3132 = vmatpush1.bf16.msra.mxu0 %v2381
        %3133 = vmatprep.subr.bf16.mxu0 %v2386
        %3134 = vmatpush1.bf16.msra.mxu0 %v2385
        %3135 = vmatprep.subr.bf16.mxu0 %v2390
        %3136 = vmatpush1.bf16.msra.mxu0 %v2389
        %3137 = vmatprep.subr.bf16.mxu0 %v2394
        %3138 = vmatpush1.bf16.msra.mxu0 %v2393
        %3139 = vmatprep.mubr.bf16.mxu0 %v834
        %3140 = vmatmul.mubr.bf16.gmra.mrb[0].mxu0 %v833
        %v3141 = vpop.f32.mrb[0].mxu0
        %v3142 = vadd.f32 %v3101, %v3141
        %v3143 = vpop.f32.mrb[0].mxu0
        %v3144 = vadd.f32 %v3103, %v3143
        %v3145 = vpop.f32.mrb[0].mxu0
        %v3146 = vpop.f32.mrb[0].mxu0
        %3147 = vdwg.mxu0
        %3148 = vmatprep.subr.bf16.mxu0 %v2398
        %3149 = vmatpush1.bf16.msra.mxu0 %v2397
        %3150 = vmatprep.subr.bf16.mxu0 %v2402
        %3151 = vmatpush1.bf16.msra.mxu0 %v2401
        %3152 = vmatprep.subr.bf16.mxu0 %v2406
        %3153 = vmatpush1.bf16.msra.mxu0 %v2405
        %3154 = vmatprep.subr.bf16.mxu0 %v2410
        %3155 = vmatpush1.bf16.msra.mxu0 %v2409
        %3156 = vmatprep.subr.bf16.mxu0 %v2414
        %3157 = vmatpush1.bf16.msra.mxu0 %v2413
        %3158 = vmatprep.subr.bf16.mxu0 %v2418
        %3159 = vmatpush1.bf16.msra.mxu0 %v2417
        %3160 = vmatprep.subr.bf16.mxu0 %v2422
        %3161 = vmatpush1.bf16.msra.mxu0 %v2421
        %3162 = vmatprep.subr.bf16.mxu0 %v2426
        %3163 = vmatpush1.bf16.msra.mxu0 %v2425
        %3164 = vmatprep.subr.bf16.mxu0 %v2430
        %3165 = vmatpush1.bf16.msra.mxu0 %v2429
        %3166 = vmatprep.subr.bf16.mxu0 %v2434
        %3167 = vmatpush1.bf16.msra.mxu0 %v2433
        %3168 = vmatprep.subr.bf16.mxu0 %v2438
        %3169 = vmatpush1.bf16.msra.mxu0 %v2437
        %3170 = vmatprep.subr.bf16.mxu0 %v2442
        %3171 = vmatpush1.bf16.msra.mxu0 %v2441
        %3172 = vmatprep.subr.bf16.mxu0 %v2446
        %3173 = vmatpush1.bf16.msra.mxu0 %v2445
        %3174 = vmatprep.subr.bf16.mxu0 %v2450
        %3175 = vmatpush1.bf16.msra.mxu0 %v2449
        %3176 = vmatprep.subr.bf16.mxu0 %v2454
        %3177 = vmatpush1.bf16.msra.mxu0 %v2453
        %3178 = vmatprep.subr.bf16.mxu0 %v2458
        %3179 = vmatpush1.bf16.msra.mxu0 %v2457
        %3180 = vmatprep.mubr.bf16.mxu0 %v836
        %3181 = vmatmul.mubr.bf16.gmra.mrb[0].mxu0 %v835
        %v3182 = vpop.f32.mrb[0].mxu0
        %v3183 = vadd.f32 %v3142, %v3182
        %v3184 = vpop.f32.mrb[0].mxu0
        %v3185 = vadd.f32 %v3144, %v3184
        %v3186 = vpop.f32.mrb[0].mxu0
        %v3187 = vpop.f32.mrb[0].mxu0
        %3188 = vdwg.mxu0
        %v3189 = vmax.f32 %v2978, 0.0
        %v3190 = vmax.f32 %v2980, 0.0
        %v3191 = vmax.f32 %v3183, 0.0
        %v3192 = vmax.f32 %v3185, 0.0
        %v3193 = vpack.c.bf16 %v3189, %v3189
        %v3194 = vpack.c.bf16 %v3190, %v3190
        %v3195 = vpack.c.bf16 %v3191, %v3191
        %v3196 = vpack.c.bf16 %v3192, %v3192
        %v3197 = vld [vmem:[%s5] sm:$0xf]
        %v3198 = vld [vmem:[%s5 + $0x4] sm:$0xf]
        %v3199 = vld [vmem:[%s5 + $0x8] sm:$0xf]
        %v3200 = vld [vmem:[%s5 + $0xc] sm:$0xf]
        %v3201 = vld [vmem:[%s5 + $0x10] sm:$0xf]
        %v3202 = vld [vmem:[%s5 + $0x14] sm:$0xf]
        %v3203 = vld [vmem:[%s5 + $0x18] sm:$0xf]
        %v3204 = vld [vmem:[%s5 + $0x1c] sm:$0xf]
        %v3205 = vld [vmem:[%s5 + $0x20] sm:$0xf]
        %v3206 = vld [vmem:[%s5 + $0x24] sm:$0xf]
        %v3207 = vld [vmem:[%s5 + $0x28] sm:$0xf]
        %v3208 = vld [vmem:[%s5 + $0x2c] sm:$0xf]
        %v3209 = vld [vmem:[%s5 + $0x30] sm:$0xf]
        %v3210 = vld [vmem:[%s5 + $0x34] sm:$0xf]
        %v3211 = vld [vmem:[%s5 + $0x38] sm:$0xf]
        %v3212 = vld [vmem:[%s5 + $0x3c] sm:$0xf]
        %v3213 = vld [vmem:[%s5 + $0x40] sm:$0xf]
        %v3214 = vld [vmem:[%s5 + $0x44] sm:$0xf]
        %v3215 = vld [vmem:[%s5 + $0x48] sm:$0xf]
        %v3216 = vld [vmem:[%s5 + $0x4c] sm:$0xf]
        %v3217 = vld [vmem:[%s5 + $0x50] sm:$0xf]
        %v3218 = vld [vmem:[%s5 + $0x54] sm:$0xf]
        %v3219 = vld [vmem:[%s5 + $0x58] sm:$0xf]
        %v3220 = vld [vmem:[%s5 + $0x5c] sm:$0xf]
        %v3221 = vld [vmem:[%s5 + $0x60] sm:$0xf]
        %v3222 = vld [vmem:[%s5 + $0x64] sm:$0xf]
        %v3223 = vld [vmem:[%s5 + $0x68] sm:$0xf]
        %v3224 = vld [vmem:[%s5 + $0x6c] sm:$0xf]
        %v3225 = vld [vmem:[%s5 + $0x70] sm:$0xf]
        %v3226 = vld [vmem:[%s5 + $0x74] sm:$0xf]
        %v3227 = vld [vmem:[%s5 + $0x78] sm:$0xf]
        %v3228 = vld [vmem:[%s5 + $0x7c] sm:$0xf]
        %v3229 = vld [vmem:[%s5 + $0x80] sm:$0xf]
        %v3230 = vld [vmem:[%s5 + $0x84] sm:$0xf]
        %v3231 = vld [vmem:[%s5 + $0x88] sm:$0xf]
        %v3232 = vld [vmem:[%s5 + $0x8c] sm:$0xf]
        %v3233 = vld [vmem:[%s5 + $0x90] sm:$0xf]
        %v3234 = vld [vmem:[%s5 + $0x94] sm:$0xf]
        %v3235 = vld [vmem:[%s5 + $0x98] sm:$0xf]
        %v3236 = vld [vmem:[%s5 + $0x9c] sm:$0xf]
        %v3237 = vld [vmem:[%s5 + $0xa0] sm:$0xf]
        %v3238 = vld [vmem:[%s5 + $0xa4] sm:$0xf]
        %v3239 = vld [vmem:[%s5 + $0xa8] sm:$0xf]
        %v3240 = vld [vmem:[%s5 + $0xac] sm:$0xf]
        %v3241 = vld [vmem:[%s5 + $0xb0] sm:$0xf]
        %v3242 = vld [vmem:[%s5 + $0xb4] sm:$0xf]
        %v3243 = vld [vmem:[%s5 + $0xb8] sm:$0xf]
        %v3244 = vld [vmem:[%s5 + $0xbc] sm:$0xf]
        %v3245 = vld [vmem:[%s5 + $0xc0] sm:$0xf]
        %v3246 = vld [vmem:[%s5 + $0xc4] sm:$0xf]
        %v3247 = vld [vmem:[%s5 + $0xc8] sm:$0xf]
        %v3248 = vld [vmem:[%s5 + $0xcc] sm:$0xf]
        %v3249 = vld [vmem:[%s5 + $0xd0] sm:$0xf]
        %v3250 = vld [vmem:[%s5 + $0xd4] sm:$0xf]
        %v3251 = vld [vmem:[%s5 + $0xd8] sm:$0xf]
        %v3252 = vld [vmem:[%s5 + $0xdc] sm:$0xf]
        %v3253 = vld [vmem:[%s5 + $0xe0] sm:$0xf]
        %v3254 = vld [vmem:[%s5 + $0xe4] sm:$0xf]
        %v3255 = vld [vmem:[%s5 + $0xe8] sm:$0xf]
        %v3256 = vld [vmem:[%s5 + $0xec] sm:$0xf]
        %v3257 = vld [vmem:[%s5 + $0xf0] sm:$0xf]
        %v3258 = vld [vmem:[%s5 + $0xf4] sm:$0xf]
        %v3259 = vld [vmem:[%s5 + $0xf8] sm:$0xf]
        %v3260 = vld [vmem:[%s5 + $0xfc] sm:$0xf]
        %v3325 = vunpack.c.l.b16 %v3197
        %v3326 = vunpack.c.l.b16 %v3198
        %v3327 = vunpack.c.l.b16 %v3199
        %v3328 = vunpack.c.l.b16 %v3200
        %v3329 = vunpack.c.l.b16 %v3201
        %v3330 = vunpack.c.l.b16 %v3202
        %v3331 = vunpack.c.l.b16 %v3203
        %v3332 = vunpack.c.l.b16 %v3204
        %v3333 = vunpack.c.l.b16 %v3205
        %v3334 = vunpack.c.l.b16 %v3206
        %v3335 = vunpack.c.l.b16 %v3207
        %v3336 = vunpack.c.l.b16 %v3208
        %v3337 = vunpack.c.l.b16 %v3209
        %v3338 = vunpack.c.l.b16 %v3210
        %v3339 = vunpack.c.l.b16 %v3211
        %v3340 = vunpack.c.l.b16 %v3212
        %v3341 = vunpack.c.l.b16 %v3213
        %v3342 = vunpack.c.l.b16 %v3214
        %v3343 = vunpack.c.l.b16 %v3215
        %v3344 = vunpack.c.l.b16 %v3216
        %v3345 = vunpack.c.l.b16 %v3217
        %v3346 = vunpack.c.l.b16 %v3218
        %v3347 = vunpack.c.l.b16 %v3219
        %v3348 = vunpack.c.l.b16 %v3220
        %v3349 = vunpack.c.l.b16 %v3221
        %v3350 = vunpack.c.l.b16 %v3222
        %v3351 = vunpack.c.l.b16 %v3223
        %v3352 = vunpack.c.l.b16 %v3224
        %v3353 = vunpack.c.l.b16 %v3225
        %v3354 = vunpack.c.l.b16 %v3226
        %v3355 = vunpack.c.l.b16 %v3227
        %v3356 = vunpack.c.l.b16 %v3228
        %v3357 = vunpack.c.l.b16 %v3229
        %v3358 = vunpack.c.l.b16 %v3230
        %v3359 = vunpack.c.l.b16 %v3231
        %v3360 = vunpack.c.l.b16 %v3232
        %v3361 = vunpack.c.l.b16 %v3233
        %v3362 = vunpack.c.l.b16 %v3234
        %v3363 = vunpack.c.l.b16 %v3235
        %v3364 = vunpack.c.l.b16 %v3236
        %v3365 = vunpack.c.l.b16 %v3237
        %v3366 = vunpack.c.l.b16 %v3238
        %v3367 = vunpack.c.l.b16 %v3239
        %v3368 = vunpack.c.l.b16 %v3240
        %v3369 = vunpack.c.l.b16 %v3241
        %v3370 = vunpack.c.l.b16 %v3242
        %v3371 = vunpack.c.l.b16 %v3243
        %v3372 = vunpack.c.l.b16 %v3244
        %v3373 = vunpack.c.l.b16 %v3245
        %v3374 = vunpack.c.l.b16 %v3246
        %v3375 = vunpack.c.l.b16 %v3247
        %v3376 = vunpack.c.l.b16 %v3248
        %v3377 = vunpack.c.l.b16 %v3249
        %v3378 = vunpack.c.l.b16 %v3250
        %v3379 = vunpack.c.l.b16 %v3251
        %v3380 = vunpack.c.l.b16 %v3252
        %v3381 = vunpack.c.l.b16 %v3253
        %v3382 = vunpack.c.l.b16 %v3254
        %v3383 = vunpack.c.l.b16 %v3255
        %v3384 = vunpack.c.l.b16 %v3256
        %v3385 = vunpack.c.l.b16 %v3257
        %v3386 = vunpack.c.l.b16 %v3258
        %v3387 = vunpack.c.l.b16 %v3259
        %v3388 = vunpack.c.l.b16 %v3260
        %v3389 = vpack.c.b16 %v3326, %v3325
        %v3390 = vpack.c.b16 %v3328, %v3327
        %v3391 = vpack.c.b16 %v3330, %v3329
        %v3392 = vpack.c.b16 %v3332, %v3331
        %v3393 = vpack.c.b16 %v3334, %v3333
        %v3394 = vpack.c.b16 %v3336, %v3335
        %v3395 = vpack.c.b16 %v3338, %v3337
        %v3396 = vpack.c.b16 %v3340, %v3339
        %v3397 = vpack.c.b16 %v3342, %v3341
        %v3398 = vpack.c.b16 %v3344, %v3343
        %v3399 = vpack.c.b16 %v3346, %v3345
        %v3400 = vpack.c.b16 %v3348, %v3347
        %v3401 = vpack.c.b16 %v3350, %v3349
        %v3402 = vpack.c.b16 %v3352, %v3351
        %v3403 = vpack.c.b16 %v3354, %v3353
        %v3404 = vpack.c.b16 %v3356, %v3355
        %v3405 = vpack.c.b16 %v3358, %v3357
        %v3406 = vpack.c.b16 %v3360, %v3359
        %v3407 = vpack.c.b16 %v3362, %v3361
        %v3408 = vpack.c.b16 %v3364, %v3363
        %v3409 = vpack.c.b16 %v3366, %v3365
        %v3410 = vpack.c.b16 %v3368, %v3367
        %v3411 = vpack.c.b16 %v3370, %v3369
        %v3412 = vpack.c.b16 %v3372, %v3371
        %v3413 = vpack.c.b16 %v3374, %v3373
        %v3414 = vpack.c.b16 %v3376, %v3375
        %v3415 = vpack.c.b16 %v3378, %v3377
        %v3416 = vpack.c.b16 %v3380, %v3379
        %v3417 = vpack.c.b16 %v3382, %v3381
        %v3418 = vpack.c.b16 %v3384, %v3383
        %v3419 = vpack.c.b16 %v3386, %v3385
        %v3420 = vpack.c.b16 %v3388, %v3387
        %3453 = vmatprep.subr.bf16.mxu0 0
        %3454 = vmatpush1.bf16.msra.mxu0 %v3389
        %3455 = vmatprep.subr.bf16.mxu0 0
        %3456 = vmatpush1.bf16.msra.mxu0 %v3390
        %3457 = vmatprep.subr.bf16.mxu0 0
        %3458 = vmatpush1.bf16.msra.mxu0 %v3391
        %3459 = vmatprep.subr.bf16.mxu0 0
        %3460 = vmatpush1.bf16.msra.mxu0 %v3392
        %3461 = vmatprep.subr.bf16.mxu0 0
        %3462 = vmatpush1.bf16.msra.mxu0 %v3393
        %3463 = vmatprep.subr.bf16.mxu0 0
        %3464 = vmatpush1.bf16.msra.mxu0 %v3394
        %3465 = vmatprep.subr.bf16.mxu0 0
        %3466 = vmatpush1.bf16.msra.mxu0 %v3395
        %3467 = vmatprep.subr.bf16.mxu0 0
        %3468 = vmatpush1.bf16.msra.mxu0 %v3396
        %3469 = vmatprep.subr.bf16.mxu0 0
        %3470 = vmatpush1.bf16.msra.mxu0 %v3397
        %3471 = vmatprep.subr.bf16.mxu0 0
        %3472 = vmatpush1.bf16.msra.mxu0 %v3398
        %3473 = vmatprep.subr.bf16.mxu0 0
        %3474 = vmatpush1.bf16.msra.mxu0 %v3399
        %3475 = vmatprep.subr.bf16.mxu0 0
        %3476 = vmatpush1.bf16.msra.mxu0 %v3400
        %3477 = vmatprep.subr.bf16.mxu0 0
        %3478 = vmatpush1.bf16.msra.mxu0 %v3401
        %3479 = vmatprep.subr.bf16.mxu0 0
        %3480 = vmatpush1.bf16.msra.mxu0 %v3402
        %3481 = vmatprep.subr.bf16.mxu0 0
        %3482 = vmatpush1.bf16.msra.mxu0 %v3403
        %3483 = vmatprep.subr.bf16.mxu0 0
        %3484 = vmatpush1.bf16.msra.mxu0 %v3404
        %3485 = vmatprep.mubr.bf16.mxu0 %v3194
        %3486 = vmatmul.mubr.bf16.gmra.mrb[0].mxu0 %v3193
        %v3487 = vpop.f32.mrb[0].mxu0
        %v3488 = vadd.f32 0.0, %v3487
        %v3489 = vpop.f32.mrb[0].mxu0
        %v3490 = vpop.f32.mrb[0].mxu0
        %v3491 = vpop.f32.mrb[0].mxu0
        %3492 = vdwg.mxu0
        %3493 = vmatprep.subr.bf16.mxu0 0
        %3494 = vmatpush1.bf16.msra.mxu0 %v3405
        %3495 = vmatprep.subr.bf16.mxu0 0
        %3496 = vmatpush1.bf16.msra.mxu0 %v3406
        %3497 = vmatprep.subr.bf16.mxu0 0
        %3498 = vmatpush1.bf16.msra.mxu0 %v3407
        %3499 = vmatprep.subr.bf16.mxu0 0
        %3500 = vmatpush1.bf16.msra.mxu0 %v3408
        %3501 = vmatprep.subr.bf16.mxu0 0
        %3502 = vmatpush1.bf16.msra.mxu0 %v3409
        %3503 = vmatprep.subr.bf16.mxu0 0
        %3504 = vmatpush1.bf16.msra.mxu0 %v3410
        %3505 = vmatprep.subr.bf16.mxu0 0
        %3506 = vmatpush1.bf16.msra.mxu0 %v3411
        %3507 = vmatprep.subr.bf16.mxu0 0
        %3508 = vmatpush1.bf16.msra.mxu0 %v3412
        %3509 = vmatprep.subr.bf16.mxu0 0
        %3510 = vmatpush1.bf16.msra.mxu0 %v3413
        %3511 = vmatprep.subr.bf16.mxu0 0
        %3512 = vmatpush1.bf16.msra.mxu0 %v3414
        %3513 = vmatprep.subr.bf16.mxu0 0
        %3514 = vmatpush1.bf16.msra.mxu0 %v3415
        %3515 = vmatprep.subr.bf16.mxu0 0
        %3516 = vmatpush1.bf16.msra.mxu0 %v3416
        %3517 = vmatprep.subr.bf16.mxu0 0
        %3518 = vmatpush1.bf16.msra.mxu0 %v3417
        %3519 = vmatprep.subr.bf16.mxu0 0
        %3520 = vmatpush1.bf16.msra.mxu0 %v3418
        %3521 = vmatprep.subr.bf16.mxu0 0
        %3522 = vmatpush1.bf16.msra.mxu0 %v3419
        %3523 = vmatprep.subr.bf16.mxu0 0
        %3524 = vmatpush1.bf16.msra.mxu0 %v3420
        %3525 = vmatprep.mubr.bf16.mxu0 %v3196
        %3526 = vmatmul.mubr.bf16.gmra.mrb[0].mxu0 %v3195
        %v3527 = vpop.f32.mrb[0].mxu0
        %v3528 = vadd.f32 %v3488, %v3527
        %v3529 = vpop.f32.mrb[0].mxu0
        %v3530 = vpop.f32.mrb[0].mxu0
        %v3531 = vpop.f32.mrb[0].mxu0
        %3532 = vdwg.mxu0
        %v3533 = vrot.slane %v3528, 4
        %v3534 = vadd.f32 %v3528, %v3533
        %v3535 = vrot.slane %v3534, 2
        %v3536 = vadd.f32 %v3534, %v3535
        %v3537 = vrot.slane %v3536, 1
        %v3538 = vadd.f32 %v3536, %v3537
        %v3539 = vld [vmem:[%s6] sm:$0x1]
        %v3540 = vadd.f32 %v3538, %v3539
        %3541 = vst [vmem:[%s270] sm:$0x1] %v3540
        %s3542 = sand.u32 %s181, 1
        %s3543 = scalar_lea.sflag [#allocation4], %s3542
        %s3544 = sand.u32 %s181, 1
        %s3545 = scalar_lea.vmem [#allocation3], %s3544
        // Predicated region
        $region49: #{convnet_forward.1} parent=47 // pred_check
          %p3546 = pneg %p191
        $region50: #{convnet_forward.1} parent=47 // pred_check_branch
          %3548 = sbr.rel (%p3546) target = $region52
        $region51: #{convnet_forward.1} parent=47 // pred_region
          %s3550 = ssub.s32 16, 16
          %3551 = vsyncadd %s3543, %s3550
          %s3552 = smul.addr %s21, 16
          %s3553 = scalar_lea.hbm %s7, %s3552
          %s3555 = sshll.u32 %s3545, 4
          %s3556 = int_to_ptr.vmem [resolvable:$true] %s3555
          %3558 = dma.vmem_to_hbm [thread:$0]  %s3556, 16, %s3553, %s3543
        $region52: #{convnet_forward.1} parent=47 // pred_fallthru
          _
      $region48: #{convnet_forward.1} parent=5 // pred_fallthru
        _
      %p3559 = scmp.le.s32.totalorder 2, %s16
      // Predicated region
      $region53: #{convnet_forward.1} parent=5 // pred_check
        %p3560 = pneg %p3559
      $region54: #{convnet_forward.1} parent=5 // pred_check_branch
        %3562 = sbr.rel (%p3560) target = $region56
      $region55: #{convnet_forward.1} parent=5 // pred_region
        %s3563 = ssub.s32 %s16, 2
        // Predicated region
        $region57: #{convnet_forward.1} parent=55 // pred_check
          %p3564 = pneg %p197
        $region58: #{convnet_forward.1} parent=55 // pred_check_branch
          %3566 = sbr.rel (%p3564) target = $region60
        $region59: #{convnet_forward.1} parent=55 // pred_region
          %s3567 = sand.u32 %s182, 1
          %s3568 = scalar_lea.sflag [#allocation4], %s3567
          %s3569 = sand.u32 %s182, 1
          %s3570 = scalar_lea.vmem [#allocation3], %s3569
          %3571 = dma.done %s3568, 16
        $region60: #{convnet_forward.1} parent=55 // pred_fallthru
          _
      $region56: #{convnet_forward.1} parent=5 // pred_fallthru
        _
    $region6: #{convnet_forward.1} parent=1 // loop_footer
      %s20 = sadd.s32 1, %s16
    $region7: #{convnet_forward.1} parent=1 // loop_footer_branch
      %15 = sbr.rel target = $region3
    $region8: #{convnet_forward.1} parent=1 // loop_exit
      _
    %3572 = vsyncpa [#allocation4], 1
    %s3573 = scalar_lea.sflag [#allocation4], 1
    %3574 = vsyncpa %s3573, 1

</llo_original>
